<compile_context>
chip_gen: v7x
topology: tpu7x:2x2x1
jax: 0.10.0
libtpu: 0.0.40
codegen_flags: <defaults>
</compile_context>

<pallas_src>
import functools

import jax
import jax.numpy as jnp
import numpy as np
from jax import lax
from jax.experimental import pallas as pl
from jax.experimental.pallas import tpu as pltpu

LN_EPS = 1e-5       # torch.nn.LayerNorm default
NEG_BIAS = -1e30    # large finite negative instead of -inf (safe: latent keys never masked)


def _round_up(v, m):
    return (v + m - 1) // m * m


def _swap01(a):
    """(i, j, d) -> (j, i, d); minor (lane) dim unchanged."""
    if hasattr(pltpu, "einshape"):
        return pltpu.einshape("abc->bac", a)
    return jnp.swapaxes(a, 0, 1)  # fallback for older jax


def _layernorm(v, gamma, beta, d_valid):
    """LayerNorm over the last dim, restricted to the first `d_valid` (unpadded) lanes.

    Padded lanes of `v` are zero and padded gamma/beta are zero, so the normalized
    padded lanes come out exactly zero.
    """
    d_pad = v.shape[-1]
    if d_pad == d_valid:
        mu = jnp.mean(v, axis=-1, keepdims=True)
        var = jnp.mean((v - mu) ** 2, axis=-1, keepdims=True)
    else:
        inv_d = 1.0 / d_valid
        valid = lax.broadcasted_iota(jnp.int32, (1, d_pad), 1) < d_valid
        mu = jnp.sum(v, axis=-1, keepdims=True) * inv_d          # padded lanes are zero
        diff = jnp.where(valid, v - mu, 0.0)
        var = jnp.sum(diff * diff, axis=-1, keepdims=True) * inv_d
    return (v - mu) * lax.rsqrt(var + LN_EPS) * gamma + beta


def perceiver_attention_kernel(
    x_ref, lat_ref, mask_ref,
    gm_ref, bm_ref, gl_ref, bl_ref,
    wq_ref, wkv_ref, wout_ref,
    o_ref, *, heads, dh_pad, d_valid, nl_valid,
):
    Nm = x_ref.shape[2]    # padded media tokens
    Nl = lat_ref.shape[2]  # padded latents
    inner = heads * dh_pad

    # bf16 in HBM/VMEM -> f32 for LayerNorm math.
    x = x_ref[0, 0].astype(jnp.float32)      # (Nm, D_pad)
    lat = lat_ref[0, 0].astype(jnp.float32)  # (Nl, D_pad)

    xn = _layernorm(x, gm_ref[...], bm_ref[...], d_valid)
    latn = _layernorm(lat, gl_ref[...], bl_ref[...], d_valid)

    xnb = xn.astype(jnp.bfloat16)
    latnb = latn.astype(jnp.bfloat16)

    # Projections (softmax scale already folded into wq; wkv stays fused -> one matmul
    # per stream with a 2*inner_pad wide N dimension).
    q = jnp.dot(latnb, wq_ref[...], preferred_element_type=jnp.float32)    # (Nl, inner)
    kvx = jnp.dot(xnb, wkv_ref[...], preferred_element_type=jnp.float32)   # (Nm, 2*inner)
    kvl = jnp.dot(latnb, wkv_ref[...], preferred_element_type=jnp.float32) # (Nl, 2*inner)

    def to_heads(a, n):
        # (n, heads*dh_pad) -> (heads, n, dh_pad); lane split at 128-multiples is free.
        a3 = a.astype(jnp.bfloat16).reshape(n, heads, dh_pad)
        return _swap01(a3)

    qh = to_heads(q, Nl)                      # (H, Nl, dh_pad)
    kxh = to_heads(kvx[:, :inner], Nm)        # (H, Nm, dh_pad)   (slice at 128-multiple)
    vxh = to_heads(kvx[:, inner:], Nm)
    klh = to_heads(kvl[:, :inner], Nl)
    vlh = to_heads(kvl[:, inner:], Nl)

    # Batched (over heads) attention scores, f32 accumulation on the MXU.
    sim_x = jnp.einsum("hqd,hkd->hqk", qh, kxh,
                       preferred_element_type=jnp.float32)        # (H, Nl, Nm)
    sim_l = jnp.einsum("hqd,hkd->hqk", qh, klh,
                       preferred_element_type=jnp.float32)        # (H, Nl, Nl)

    # Additive bias: mask == 0 -> NEG_BIAS (matches reference logical_not semantics).
    bias_x = jnp.where(mask_ref[0] != 0.0, 0.0, NEG_BIAS).astype(jnp.float32)  # (1, Nm)
    sim_x = sim_x + bias_x
    if Nl > nl_valid:  # compile-time: only when latents were sublane-padded
        lat_valid = lax.broadcasted_iota(jnp.int32, (1, Nl), 1) < nl_valid
        sim_l = sim_l + jnp.where(lat_valid, 0.0, NEG_BIAS).astype(jnp.float32)

    # Joint (media + latent keys) numerically-stable softmax in f32.
    m = jnp.maximum(jnp.max(sim_x, axis=-1, keepdims=True),
                    jnp.max(sim_l, axis=-1, keepdims=True))
    p_x = jnp.exp(sim_x - m)
    p_l = jnp.exp(sim_l - m)
    denom = (jnp.sum(p_x, axis=-1, keepdims=True)
             + jnp.sum(p_l, axis=-1, keepdims=True))              # (H, Nl, 1)

    num = (jnp.einsum("hqk,hkd->hqd", p_x.astype(jnp.bfloat16), vxh,
                      preferred_element_type=jnp.float32)
           + jnp.einsum("hqk,hkd->hqd", p_l.astype(jnp.bfloat16), vlh,
                        preferred_element_type=jnp.float32))      # (H, Nl, dh_pad)

    out_h = (num * pl.reciprocal(denom, approx=False)).astype(jnp.bfloat16)

    # Single output projection with K = inner_pad (heads re-assembled into lanes).
    out_m = _swap01(out_h).reshape(Nl, inner)                     # (Nl, inner_pad)
    o = jnp.dot(out_m, wout_ref[...], preferred_element_type=jnp.float32)  # (Nl, D_pad)
    o_ref[0, 0] = o.astype(o_ref.dtype)


def perceiver_attention(x, latents, protein_attn_masks, params, *, heads, dim_head):
    B, T, Nm, D = x.shape
    Nl = latents.shape[2]
    inner = heads * dim_head
    scale = dim_head ** (-0.5)

    # Lane / sublane padding targets.
    D_pad = _round_up(D, 128)
    dh_pad = _round_up(dim_head, 128)
    inner_pad = heads * dh_pad
    Nm_pad = _round_up(Nm, 8)
    Nl_pad = _round_up(Nl, 8)

    # ---------------- host-side weight prep (bf16, head/lane padded) ----------------
    def pad_head_cols(w):  # (D, heads*dim_head) -> (D_pad, heads*dh_pad)
        w3 = w.reshape(D, heads, dim_head)
        w3 = jnp.pad(w3, ((0, D_pad - D), (0, 0), (0, dh_pad - dim_head)))
        return w3.reshape(D_pad, inner_pad)

    wq = pad_head_cols(params["wq"] * scale).astype(jnp.bfloat16)     # scale folded in
    wk = pad_head_cols(params["wkv"][:, :inner])
    wv = pad_head_cols(params["wkv"][:, inner:])
    wkv = jnp.concatenate([wk, wv], axis=1).astype(jnp.bfloat16)      # (D_pad, 2*inner_pad)

    wout3 = params["wout"].reshape(heads, dim_head, D)
    wout3 = jnp.pad(wout3, ((0, 0), (0, dh_pad - dim_head), (0, D_pad - D)))
    wout = wout3.reshape(inner_pad, D_pad).astype(jnp.bfloat16)

    def pad_ln(p):  # (1, D) -> (1, D_pad), zero pad (keeps padded lanes at exactly 0)
        return jnp.pad(p.astype(jnp.float32), ((0, 0), (0, D_pad - D)))

    gm, bm = pad_ln(params["gamma_media"]), pad_ln(params["beta_media"])
    gl, bl = pad_ln(params["gamma_latents"]), pad_ln(params["beta_latents"])

    # ---------------- host-side activation prep (bf16 DMA, zero padding) ------------
    xp = jnp.pad(x, ((0, 0), (0, 0), (0, Nm_pad - Nm), (0, D_pad - D))).astype(jnp.bfloat16)
    lp = jnp.pad(latents, ((0, 0), (0, 0), (0, Nl_pad - Nl), (0, D_pad - D))).astype(jnp.bfloat16)
    mask = jnp.pad(protein_attn_masks.astype(jnp.float32), ((0, 0), (0, Nm_pad - Nm)))
    mask = mask.reshape(B, 1, Nm_pad)   # padded media tokens get mask=0 -> excluded

    kernel = functools.partial(
        perceiver_attention_kernel,
        heads=heads, dh_pad=dh_pad, d_valid=D, nl_valid=Nl,
    )

    # Rough per-step VMEM budget (double-buffered blocks + f32 intermediates); explicit
    # limit so the scoped default (16/32 MiB) never silently caps block sizes.
    blk = (2 * (Nm_pad + Nl_pad) * D_pad * 2
           + 2 * Nl_pad * D_pad * 4
           + 2 * 4 * D_pad * inner_pad * 2
           + (Nm_pad + Nl_pad) * 2 * inner_pad * 4
           + 3 * heads * Nl_pad * (Nm_pad + Nl_pad) * 4)
    vmem_limit = int(min(96 * 2**20, max(16 * 2**20, 4 * blk)))

    out = pl.pallas_call(
        kernel,
        out_shape=jax.ShapeDtypeStruct((B, T, Nl_pad, D_pad), x.dtype),
        grid=(B, T),
        in_specs=[
            pl.BlockSpec((1, 1, Nm_pad, D_pad), lambda b, t: (b, t, 0, 0)),   # x (bf16)
            pl.BlockSpec((1, 1, Nl_pad, D_pad), lambda b, t: (b, t, 0, 0)),   # latents (bf16)
            pl.BlockSpec((1, 1, Nm_pad), lambda b, t: (b, 0, 0)),             # media mask
            pl.BlockSpec((1, D_pad), lambda b, t: (0, 0)),                    # LN media gamma
            pl.BlockSpec((1, D_pad), lambda b, t: (0, 0)),                    # LN media beta
            pl.BlockSpec((1, D_pad), lambda b, t: (0, 0)),                    # LN latents gamma
            pl.BlockSpec((1, D_pad), lambda b, t: (0, 0)),                    # LN latents beta
            pl.BlockSpec((D_pad, inner_pad), lambda b, t: (0, 0)),            # Wq (scaled, bf16)
            pl.BlockSpec((D_pad, 2 * inner_pad), lambda b, t: (0, 0)),        # Wkv fused (bf16)
            pl.BlockSpec((inner_pad, D_pad), lambda b, t: (0, 0)),            # Wout (bf16)
        ],
        out_specs=pl.BlockSpec((1, 1, Nl_pad, D_pad), lambda b, t: (b, t, 0, 0)),
        compiler_params=pltpu.CompilerParams(
            dimension_semantics=("parallel", "parallel"),
            vmem_limit_bytes=vmem_limit,
        ),
    )(xp, lp, mask, gm, bm, gl, bl, wq, wkv, wout)

    # Strip the sublane / lane padding.
    return out[:, :, :Nl, :D]


# ------------------------- pure-JAX reference (for self-check) -------------------------
def perceiver_attention_ref(x, latents, protein_attn_masks, params, *, heads, dim_head):
    def ln(v, g, b):
        mu = v.mean(-1, keepdims=True)
        var = ((v - mu) ** 2).mean(-1, keepdims=True)
        return (v - mu) / jnp.sqrt(var + LN_EPS) * g + b

    B, T, Nm, D = x.shape
    Nl = latents.shape[2]
    inner = heads * dim_head
    scale = dim_head ** (-0.5)

    xn = ln(x, params["gamma_media"], params["beta_media"])
    latn = ln(latents, params["gamma_latents"], params["beta_latents"])
    q = latn @ params["wq"]
    kv_in = jnp.concatenate([xn, latn], axis=-2)
    kv = kv_in @ params["wkv"]
    k, v = kv[..., :inner], kv[..., inner:]

    def split(a):  # b t n (h d) -> b h t n d
        return a.reshape(a.shape[:-1] + (heads, dim_head)).transpose(0, 3, 1, 2, 4)

    q, k, v = split(q) * scale, split(k), split(v)
    sim = jnp.einsum("bhtid,bhtjd->bhtij", q, k)
    full_mask = jnp.concatenate(
        [protein_attn_masks, jnp.ones((B, Nl), protein_attn_masks.dtype)], axis=-1
    )
    bias = jnp.where(full_mask == 0, -jnp.inf, 0.0)[:, None, None, None, :]
    sim = sim + bias
    sim = sim - sim.max(-1, keepdims=True)
    attn = jax.nn.softmax(sim, axis=-1)
    out = jnp.einsum("bhtij,bhtjd->bhtid", attn, v)
    out = out.transpose(0, 2, 3, 1, 4).reshape(B, T, Nl, inner)
    return out @ params["wout"]


if __name__ == "__main__":
    B, T, Nm, Nl, D = 2, 1, 16, 8, 32
    heads, dim_head = 4, 16
    inner = heads * dim_head

    key = jax.random.PRNGKey(0)
    k_x, k_l, k_gm, k_bm, k_gl, k_bl, k_q, k_kv, k_o = jax.random.split(key, 9)

    x = jax.random.normal(k_x, (B, T, Nm, D), dtype=jnp.float32)
    latents = jax.random.normal(k_l, (B, T, Nl, D), dtype=jnp.float32)
    # Deterministic padding mask: batch 0 keeps all media tokens, batch 1 masks the last 5.
    lens = jnp.array([Nm, Nm - 5], dtype=jnp.int32)
    protein_attn_masks = (jnp.arange(Nm)[None, :] < lens[:, None]).astype(jnp.float32)

    params = {
        "gamma_media": 1.0 + 0.1 * jax.random.normal(k_gm, (1, D), jnp.float32),
        "beta_media": 0.1 * jax.random.normal(k_bm, (1, D), jnp.float32),
        "gamma_latents": 1.0 + 0.1 * jax.random.normal(k_gl, (1, D), jnp.float32),
        "beta_latents": 0.1 * jax.random.normal(k_bl, (1, D), jnp.float32),
        "wq": 0.05 * jax.random.normal(k_q, (D, inner), jnp.float32),
        "wkv": 0.05 * jax.random.normal(k_kv, (D, 2 * inner), jnp.float32),
        "wout": 0.05 * jax.random.normal(k_o, (inner, D), jnp.float32),
    }

    out = perceiver_attention(x, latents, protein_attn_masks, params,
                              heads=heads, dim_head=dim_head)
    out = jax.block_until_ready(out)

    ref = perceiver_attention_ref(x, latents, protein_attn_masks, params,
                                  heads=heads, dim_head=dim_head)
    # bf16 input DMA + bf16 MXU operands -> looser tolerance vs the f32 reference.
    np.testing.assert_allclose(np.asarray(out), np.asarray(ref), rtol=2e-2, atol=2e-2)

    print("KERNEL_OK")
</pallas_src>

<mosaic_0001>
module attributes {stable_mosaic.version = 11 : i64} {
  func.func @perceiver_attention_kernel(%arg0: i32, %arg1: i32, %arg2: memref<1x1x16x128xbf16, #tpu.memory_space<vmem>>, %arg3: memref<1x1x8x128xbf16, #tpu.memory_space<vmem>>, %arg4: memref<1x1x16xf32, #tpu.memory_space<vmem>>, %arg5: memref<1x128xf32, #tpu.memory_space<vmem>>, %arg6: memref<1x128xf32, #tpu.memory_space<vmem>>, %arg7: memref<1x128xf32, #tpu.memory_space<vmem>>, %arg8: memref<1x128xf32, #tpu.memory_space<vmem>>, %arg9: memref<128x512xbf16, #tpu.memory_space<vmem>>, %arg10: memref<128x1024xbf16, #tpu.memory_space<vmem>>, %arg11: memref<512x128xbf16, #tpu.memory_space<vmem>>, %arg12: memref<1x1x8x128xf32, #tpu.memory_space<vmem>>) attributes {dimension_semantics = [#tpu.dimension_semantics<parallel>, #tpu.dimension_semantics<parallel>], iteration_bounds = array<i64: 2, 1>, scalar_prefetch = 0 : i64, scratch_operands = 0 : i64, tpu.core_type = #tpu.core_type<tc>, window_params = [{transform_indices = @transform_0, window_bounds = array<i64: 1, 1, 16, 128>}, {transform_indices = @transform_1, window_bounds = array<i64: 1, 1, 8, 128>}, {transform_indices = @transform_2, window_bounds = array<i64: 1, 1, 16>}, {pipeline_mode = #tpu.pipeline_mode<synchronous>, transform_indices = @transform_3, window_bounds = array<i64: 1, 128>}, {pipeline_mode = #tpu.pipeline_mode<synchronous>, transform_indices = @transform_4, window_bounds = array<i64: 1, 128>}, {pipeline_mode = #tpu.pipeline_mode<synchronous>, transform_indices = @transform_5, window_bounds = array<i64: 1, 128>}, {pipeline_mode = #tpu.pipeline_mode<synchronous>, transform_indices = @transform_6, window_bounds = array<i64: 1, 128>}, {pipeline_mode = #tpu.pipeline_mode<synchronous>, transform_indices = @transform_7, window_bounds = array<i64: 128, 512>}, {pipeline_mode = #tpu.pipeline_mode<synchronous>, transform_indices = @transform_8, window_bounds = array<i64: 128, 1024>}, {pipeline_mode = #tpu.pipeline_mode<synchronous>, transform_indices = @transform_9, window_bounds = array<i64: 512, 128>}, {transform_indices = @transform_10, window_bounds = array<i64: 1, 1, 8, 128>}]} {
    %c0 = arith.constant 0 : index
    %c0_0 = arith.constant 0 : index
    %c0_1 = arith.constant 0 : index
    %c0_2 = arith.constant 0 : index
    %0 = vector.load %arg2[%c0, %c0_0, %c0_1, %c0_2] : memref<1x1x16x128xbf16, #tpu.memory_space<vmem>>, vector<1x1x16x128xbf16>
    %1 = vector.shape_cast %0 : vector<1x1x16x128xbf16> to vector<16x128xbf16>
    %2 = arith.extf %1 : vector<16x128xbf16> to vector<16x128xf32>
    %c0_3 = arith.constant 0 : index
    %c0_4 = arith.constant 0 : index
    %c0_5 = arith.constant 0 : index
    %c0_6 = arith.constant 0 : index
    %3 = vector.load %arg3[%c0_3, %c0_4, %c0_5, %c0_6] : memref<1x1x8x128xbf16, #tpu.memory_space<vmem>>, vector<1x1x8x128xbf16>
    %4 = vector.shape_cast %3 : vector<1x1x8x128xbf16> to vector<8x128xbf16>
    %5 = arith.extf %4 : vector<8x128xbf16> to vector<8x128xf32>
    %c0_7 = arith.constant 0 : index
    %c0_8 = arith.constant 0 : index
    %6 = vector.load %arg5[%c0_7, %c0_8] : memref<1x128xf32, #tpu.memory_space<vmem>>, vector<1x128xf32>
    %c0_9 = arith.constant 0 : index
    %c0_10 = arith.constant 0 : index
    %7 = vector.load %arg6[%c0_9, %c0_10] : memref<1x128xf32, #tpu.memory_space<vmem>>, vector<1x128xf32>
    %8 = tpu.iota {dimensions = array<i32: 1>} : vector<1x128xi32>
    %c32_i32 = arith.constant 32 : i32
    %9 = vector.broadcast %c32_i32 : i32 to vector<1x128xi32>
    %10 = arith.cmpi slt, %8, %9 : vector<1x128xi32>
    %cst = arith.constant dense<0.000000e+00> : vector<16xf32>
    %11 = vector.multi_reduction <add>, %2, %cst [1] : vector<16x128xf32> to vector<16xf32>
    %12 = vector.shape_cast %11 : vector<16xf32> to vector<16x1xf32>
    %cst_11 = arith.constant 3.125000e-02 : f32
    %13 = vector.broadcast %cst_11 : f32 to vector<16x1xf32>
    %14 = arith.mulf %12, %13 : vector<16x1xf32>
    %15 = vector.broadcast %14 : vector<16x1xf32> to vector<16x128xf32>
    %16 = arith.subf %2, %15 : vector<16x128xf32>
    %cst_12 = arith.constant 0.000000e+00 : f32
    %17 = vector.shape_cast %10 : vector<1x128xi1> to vector<1x128xi1>
    %18 = vector.broadcast %17 : vector<1x128xi1> to vector<16x128xi1>
    %19 = vector.broadcast %cst_12 : f32 to vector<16x128xf32>
    %20 = arith.select %18, %16, %19 : vector<16x128xi1>, vector<16x128xf32>
    %21 = arith.mulf %20, %20 : vector<16x128xf32>
    %cst_13 = arith.constant dense<0.000000e+00> : vector<16xf32>
    %22 = vector.multi_reduction <add>, %21, %cst_13 [1] : vector<16x128xf32> to vector<16xf32>
    %23 = vector.shape_cast %22 : vector<16xf32> to vector<16x1xf32>
    %cst_14 = arith.constant 3.125000e-02 : f32
    %24 = vector.broadcast %cst_14 : f32 to vector<16x1xf32>
    %25 = arith.mulf %23, %24 : vector<16x1xf32>
    %26 = vector.broadcast %14 : vector<16x1xf32> to vector<16x128xf32>
    %27 = arith.subf %2, %26 : vector<16x128xf32>
    %cst_15 = arith.constant 9.99999974E-6 : f32
    %28 = vector.broadcast %cst_15 : f32 to vector<16x1xf32>
    %29 = arith.addf %25, %28 : vector<16x1xf32>
    %30 = math.rsqrt %29 : vector<16x1xf32>
    %31 = vector.broadcast %30 : vector<16x1xf32> to vector<16x128xf32>
    %32 = arith.mulf %27, %31 : vector<16x128xf32>
    %33 = vector.broadcast %6 : vector<1x128xf32> to vector<16x128xf32>
    %34 = arith.mulf %32, %33 : vector<16x128xf32>
    %35 = vector.broadcast %7 : vector<1x128xf32> to vector<16x128xf32>
    %36 = arith.addf %34, %35 : vector<16x128xf32>
    %c0_16 = arith.constant 0 : index
    %c0_17 = arith.constant 0 : index
    %37 = vector.load %arg7[%c0_16, %c0_17] : memref<1x128xf32, #tpu.memory_space<vmem>>, vector<1x128xf32>
    %c0_18 = arith.constant 0 : index
    %c0_19 = arith.constant 0 : index
    %38 = vector.load %arg8[%c0_18, %c0_19] : memref<1x128xf32, #tpu.memory_space<vmem>>, vector<1x128xf32>
    %39 = tpu.iota {dimensions = array<i32: 1>} : vector<1x128xi32>
    %c32_i32_20 = arith.constant 32 : i32
    %40 = vector.broadcast %c32_i32_20 : i32 to vector<1x128xi32>
    %41 = arith.cmpi slt, %39, %40 : vector<1x128xi32>
    %cst_21 = arith.constant dense<0.000000e+00> : vector<8xf32>
    %42 = vector.multi_reduction <add>, %5, %cst_21 [1] : vector<8x128xf32> to vector<8xf32>
    %43 = vector.shape_cast %42 : vector<8xf32> to vector<8x1xf32>
    %cst_22 = arith.constant 3.125000e-02 : f32
    %44 = vector.broadcast %cst_22 : f32 to vector<8x1xf32>
    %45 = arith.mulf %43, %44 : vector<8x1xf32>
    %46 = vector.broadcast %45 : vector<8x1xf32> to vector<8x128xf32>
    %47 = arith.subf %5, %46 : vector<8x128xf32>
    %cst_23 = arith.constant 0.000000e+00 : f32
    %48 = vector.shape_cast %41 : vector<1x128xi1> to vector<1x128xi1>
    %49 = vector.broadcast %48 : vector<1x128xi1> to vector<8x128xi1>
    %50 = vector.broadcast %cst_23 : f32 to vector<8x128xf32>
    %51 = arith.select %49, %47, %50 : vector<8x128xi1>, vector<8x128xf32>
    %52 = arith.mulf %51, %51 : vector<8x128xf32>
    %cst_24 = arith.constant dense<0.000000e+00> : vector<8xf32>
    %53 = vector.multi_reduction <add>, %52, %cst_24 [1] : vector<8x128xf32> to vector<8xf32>
    %54 = vector.shape_cast %53 : vector<8xf32> to vector<8x1xf32>
    %cst_25 = arith.constant 3.125000e-02 : f32
    %55 = vector.broadcast %cst_25 : f32 to vector<8x1xf32>
    %56 = arith.mulf %54, %55 : vector<8x1xf32>
    %57 = vector.broadcast %45 : vector<8x1xf32> to vector<8x128xf32>
    %58 = arith.subf %5, %57 : vector<8x128xf32>
    %cst_26 = arith.constant 9.99999974E-6 : f32
    %59 = vector.broadcast %cst_26 : f32 to vector<8x1xf32>
    %60 = arith.addf %56, %59 : vector<8x1xf32>
    %61 = math.rsqrt %60 : vector<8x1xf32>
    %62 = vector.broadcast %61 : vector<8x1xf32> to vector<8x128xf32>
    %63 = arith.mulf %58, %62 : vector<8x128xf32>
    %64 = vector.broadcast %37 : vector<1x128xf32> to vector<8x128xf32>
    %65 = arith.mulf %63, %64 : vector<8x128xf32>
    %66 = vector.broadcast %38 : vector<1x128xf32> to vector<8x128xf32>
    %67 = arith.addf %65, %66 : vector<8x128xf32>
    %68 = arith.truncf %36 : vector<16x128xf32> to vector<16x128xbf16>
    %69 = arith.truncf %67 : vector<8x128xf32> to vector<8x128xbf16>
    %c0_27 = arith.constant 0 : index
    %c0_28 = arith.constant 0 : index
    %70 = vector.load %arg9[%c0_27, %c0_28] : memref<128x512xbf16, #tpu.memory_space<vmem>>, vector<128x512xbf16>
    %cst_29 = arith.constant dense<0.000000e+00> : vector<8x512xf32>
    %71 = tpu.matmul %69, %70, %cst_29 {dimension_numbers = #tpu.dot_dimension_numbers<[1], [0], [0], [1], [0, 0, 1, 1], [], []>} : vector<8x128xbf16>, vector<128x512xbf16>, vector<8x512xf32> -> vector<8x512xf32>
    %c0_30 = arith.constant 0 : index
    %c0_31 = arith.constant 0 : index
    %72 = vector.load %arg10[%c0_30, %c0_31] : memref<128x1024xbf16, #tpu.memory_space<vmem>>, vector<128x1024xbf16>
    %cst_32 = arith.constant dense<0.000000e+00> : vector<16x1024xf32>
    %73 = tpu.matmul %68, %72, %cst_32 {dimension_numbers = #tpu.dot_dimension_numbers<[1], [0], [0], [1], [0, 0, 1, 1], [], []>} : vector<16x128xbf16>, vector<128x1024xbf16>, vector<16x1024xf32> -> vector<16x1024xf32>
    %c0_33 = arith.constant 0 : index
    %c0_34 = arith.constant 0 : index
    %74 = vector.load %arg10[%c0_33, %c0_34] : memref<128x1024xbf16, #tpu.memory_space<vmem>>, vector<128x1024xbf16>
    %cst_35 = arith.constant dense<0.000000e+00> : vector<8x1024xf32>
    %75 = tpu.matmul %69, %74, %cst_35 {dimension_numbers = #tpu.dot_dimension_numbers<[1], [0], [0], [1], [0, 0, 1, 1], [], []>} : vector<8x128xbf16>, vector<128x1024xbf16>, vector<8x1024xf32> -> vector<8x1024xf32>
    %76 = arith.truncf %71 : vector<8x512xf32> to vector<8x512xbf16>
    %77 = vector.shape_cast %76 : vector<8x512xbf16> to vector<8x4x128xbf16>
    %78 = tpu.transpose %77, [1, 0, 2] : vector<8x4x128xbf16> -> vector<4x8x128xbf16>
    %79 = vector.extract_strided_slice %73 {offsets = [0, 0], sizes = [16, 512], strides = [1, 1]} : vector<16x1024xf32> to vector<16x512xf32>
    %80 = arith.truncf %79 : vector<16x512xf32> to vector<16x512xbf16>
    %81 = vector.shape_cast %80 : vector<16x512xbf16> to vector<16x4x128xbf16>
    %82 = tpu.transpose %81, [1, 0, 2] : vector<16x4x128xbf16> -> vector<4x16x128xbf16>
    %83 = vector.extract_strided_slice %73 {offsets = [0, 512], sizes = [16, 512], strides = [1, 1]} : vector<16x1024xf32> to vector<16x512xf32>
    %84 = arith.truncf %83 : vector<16x512xf32> to vector<16x512xbf16>
    %85 = vector.shape_cast %84 : vector<16x512xbf16> to vector<16x4x128xbf16>
    %86 = tpu.transpose %85, [1, 0, 2] : vector<16x4x128xbf16> -> vector<4x16x128xbf16>
    %87 = vector.extract_strided_slice %75 {offsets = [0, 0], sizes = [8, 512], strides = [1, 1]} : vector<8x1024xf32> to vector<8x512xf32>
    %88 = arith.truncf %87 : vector<8x512xf32> to vector<8x512xbf16>
    %89 = vector.shape_cast %88 : vector<8x512xbf16> to vector<8x4x128xbf16>
    %90 = tpu.transpose %89, [1, 0, 2] : vector<8x4x128xbf16> -> vector<4x8x128xbf16>
    %91 = vector.extract_strided_slice %75 {offsets = [0, 512], sizes = [8, 512], strides = [1, 1]} : vector<8x1024xf32> to vector<8x512xf32>
    %92 = arith.truncf %91 : vector<8x512xf32> to vector<8x512xbf16>
    %93 = vector.shape_cast %92 : vector<8x512xbf16> to vector<8x4x128xbf16>
    %94 = tpu.transpose %93, [1, 0, 2] : vector<8x4x128xbf16> -> vector<4x8x128xbf16>
    "tpu.trace_start"() <{level = 10 : i32, message = "hqd,hkd->hqk"}> : () -> ()
    %cst_36 = arith.constant dense<0.000000e+00> : vector<4x8x16xf32>
    %95 = tpu.matmul %78, %82, %cst_36 {dimension_numbers = #tpu.dot_dimension_numbers<[2], [2], [1], [1], [0, 0, 0, 1, 1, 1], [0], [0]>} : vector<4x8x128xbf16>, vector<4x16x128xbf16>, vector<4x8x16xf32> -> vector<4x8x16xf32>
    %cst_37 = arith.constant dense<0.000000e+00> : vector<4x8x8xf32>
    %96 = tpu.matmul %78, %90, %cst_37 {dimension_numbers = #tpu.dot_dimension_numbers<[2], [2], [1], [1], [0, 0, 0, 1, 1, 1], [0], [0]>} : vector<4x8x128xbf16>, vector<4x8x128xbf16>, vector<4x8x8xf32> -> vector<4x8x8xf32>
    "tpu.trace_stop"() : () -> ()
    %c0_38 = arith.constant 0 : index
    %c0_39 = arith.constant 0 : index
    %c0_40 = arith.constant 0 : index
    %97 = vector.load %arg4[%c0_38, %c0_39, %c0_40] : memref<1x1x16xf32, #tpu.memory_space<vmem>>, vector<1x1x16xf32>
    %98 = vector.shape_cast %97 : vector<1x1x16xf32> to vector<1x16xf32>
    %cst_41 = arith.constant 0.000000e+00 : f32
    %99 = vector.broadcast %cst_41 : f32 to vector<1x16xf32>
    %100 = arith.cmpf one, %98, %99 : vector<1x16xf32>
    %cst_42 = arith.constant 0.000000e+00 : f32
    %cst_43 = arith.constant -1.000000e+30 : f32
    %101 = vector.broadcast %cst_42 : f32 to vector<1x16xf32>
    %102 = vector.broadcast %cst_43 : f32 to vector<1x16xf32>
    %103 = arith.select %100, %101, %102 : vector<1x16xi1>, vector<1x16xf32>
    %104 = vector.shape_cast %103 : vector<1x16xf32> to vector<1x1x16xf32>
    %105 = vector.broadcast %104 : vector<1x1x16xf32> to vector<4x8x16xf32>
    %106 = arith.addf %95, %105 : vector<4x8x16xf32>
    %cst_44 = arith.constant dense<0xFF800000> : vector<4x8xf32>
    %107 = vector.multi_reduction <maximumf>, %106, %cst_44 [2] : vector<4x8x16xf32> to vector<4x8xf32>
    %108 = vector.shape_cast %107 : vector<4x8xf32> to vector<4x8x1xf32>
    %cst_45 = arith.constant dense<0xFF800000> : vector<4x8xf32>
    %109 = vector.multi_reduction <maximumf>, %96, %cst_45 [2] : vector<4x8x8xf32> to vector<4x8xf32>
    %110 = vector.shape_cast %109 : vector<4x8xf32> to vector<4x8x1xf32>
    %111 = arith.maximumf %108, %110 : vector<4x8x1xf32>
    %112 = vector.broadcast %111 : vector<4x8x1xf32> to vector<4x8x16xf32>
    %113 = arith.subf %106, %112 : vector<4x8x16xf32>
    %114 = math.exp %113 : vector<4x8x16xf32>
    %115 = vector.broadcast %111 : vector<4x8x1xf32> to vector<4x8x8xf32>
    %116 = arith.subf %96, %115 : vector<4x8x8xf32>
    %117 = math.exp %116 : vector<4x8x8xf32>
    %cst_46 = arith.constant dense<0.000000e+00> : vector<4x8xf32>
    %118 = vector.multi_reduction <add>, %114, %cst_46 [2] : vector<4x8x16xf32> to vector<4x8xf32>
    %119 = vector.shape_cast %118 : vector<4x8xf32> to vector<4x8x1xf32>
    %cst_47 = arith.constant dense<0.000000e+00> : vector<4x8xf32>
    %120 = vector.multi_reduction <add>, %117, %cst_47 [2] : vector<4x8x8xf32> to vector<4x8xf32>
    %121 = vector.shape_cast %120 : vector<4x8xf32> to vector<4x8x1xf32>
    %122 = arith.addf %119, %121 : vector<4x8x1xf32>
    %123 = arith.truncf %114 : vector<4x8x16xf32> to vector<4x8x16xbf16>
    "tpu.trace_start"() <{level = 10 : i32, message = "hqk,hkd->hqd"}> : () -> ()
    %cst_48 = arith.constant dense<0.000000e+00> : vector<4x8x128xf32>
    %124 = tpu.matmul %123, %86, %cst_48 {dimension_numbers = #tpu.dot_dimension_numbers<[2], [1], [1], [2], [0, 0, 0, 1, 1, 2], [0], [0]>} : vector<4x8x16xbf16>, vector<4x16x128xbf16>, vector<4x8x128xf32> -> vector<4x8x128xf32>
    "tpu.trace_stop"() : () -> ()
    %125 = arith.truncf %117 : vector<4x8x8xf32> to vector<4x8x8xbf16>
    "tpu.trace_start"() <{level = 10 : i32, message = "hqk,hkd->hqd"}> : () -> ()
    %cst_49 = arith.constant dense<0.000000e+00> : vector<4x8x128xf32>
    %126 = tpu.matmul %125, %94, %cst_49 {dimension_numbers = #tpu.dot_dimension_numbers<[2], [1], [1], [2], [0, 0, 0, 1, 1, 2], [0], [0]>} : vector<4x8x8xbf16>, vector<4x8x128xbf16>, vector<4x8x128xf32> -> vector<4x8x128xf32>
    "tpu.trace_stop"() : () -> ()
    %127 = arith.addf %124, %126 : vector<4x8x128xf32>
    %128 = tpu.reciprocal %122 : vector<4x8x1xf32> -> vector<4x8x1xf32>
    %129 = vector.broadcast %128 : vector<4x8x1xf32> to vector<4x8x128xf32>
    %130 = arith.mulf %127, %129 : vector<4x8x128xf32>
    %131 = arith.truncf %130 : vector<4x8x128xf32> to vector<4x8x128xbf16>
    %132 = tpu.transpose %131, [1, 0, 2] : vector<4x8x128xbf16> -> vector<8x4x128xbf16>
    %133 = vector.shape_cast %132 : vector<8x4x128xbf16> to vector<8x512xbf16>
    %c0_50 = arith.constant 0 : index
    %c0_51 = arith.constant 0 : index
    %134 = vector.load %arg11[%c0_50, %c0_51] : memref<512x128xbf16, #tpu.memory_space<vmem>>, vector<512x128xbf16>
    %cst_52 = arith.constant dense<0.000000e+00> : vector<8x128xf32>
    %135 = tpu.matmul %133, %134, %cst_52 {dimension_numbers = #tpu.dot_dimension_numbers<[1], [0], [0], [1], [0, 0, 1, 1], [], []>} : vector<8x512xbf16>, vector<512x128xbf16>, vector<8x128xf32> -> vector<8x128xf32>
    %c0_53 = arith.constant 0 : index
    %c0_54 = arith.constant 0 : index
    %c0_55 = arith.constant 0 : index
    %c0_56 = arith.constant 0 : index
    %136 = vector.load %arg12[%c0_53, %c0_54, %c0_55, %c0_56] : memref<1x1x8x128xf32, #tpu.memory_space<vmem>>, vector<1x1x8x128xf32>
    %137 = vector.shape_cast %136 : vector<1x1x8x128xf32> to vector<8x128xf32>
    %138 = vector.shape_cast %135 : vector<8x128xf32> to vector<1x1x8x128xf32>
    tpu.vector_store %arg12[%c0_53, %c0_54, %c0_55, %c0_56], %138 {strides = array<i32>} : memref<1x1x8x128xf32, #tpu.memory_space<vmem>>, vector<1x1x8x128xf32>,
    return
  }
  func.func @transform_0(%arg0: i32, %arg1: i32) -> (i32, i32, i32, i32) {
    %c0_i32 = arith.constant 0 : i32
    %c0_i32_0 = arith.constant 0 : i32
    %c0_i32_1 = arith.constant 0 : i32
    return %arg0, %arg1, %c0_i32, %c0_i32_0 : i32, i32, i32, i32
  }
  func.func @transform_1(%arg0: i32, %arg1: i32) -> (i32, i32, i32, i32) {
    %c0_i32 = arith.constant 0 : i32
    %c0_i32_0 = arith.constant 0 : i32
    %c0_i32_1 = arith.constant 0 : i32
    return %arg0, %arg1, %c0_i32, %c0_i32_0 : i32, i32, i32, i32
  }
  func.func @transform_2(%arg0: i32, %arg1: i32) -> (i32, i32, i32) {
    %c0_i32 = arith.constant 0 : i32
    %c0_i32_0 = arith.constant 0 : i32
    %c0_i32_1 = arith.constant 0 : i32
    return %arg0, %c0_i32, %c0_i32_0 : i32, i32, i32
  }
  func.func @transform_3(%arg0: i32, %arg1: i32) -> (i32, i32) {
    %c0_i32 = arith.constant 0 : i32
    %c0_i32_0 = arith.constant 0 : i32
    %c0_i32_1 = arith.constant 0 : i32
    return %c0_i32, %c0_i32_0 : i32, i32
  }
  func.func @transform_4(%arg0: i32, %arg1: i32) -> (i32, i32) {
    %c0_i32 = arith.constant 0 : i32
    %c0_i32_0 = arith.constant 0 : i32
    %c0_i32_1 = arith.constant 0 : i32
    return %c0_i32, %c0_i32_0 : i32, i32
  }
  func.func @transform_5(%arg0: i32, %arg1: i32) -> (i32, i32) {
    %c0_i32 = arith.constant 0 : i32
    %c0_i32_0 = arith.constant 0 : i32
    %c0_i32_1 = arith.constant 0 : i32
    return %c0_i32, %c0_i32_0 : i32, i32
  }
  func.func @transform_6(%arg0: i32, %arg1: i32) -> (i32, i32) {
    %c0_i32 = arith.constant 0 : i32
    %c0_i32_0 = arith.constant 0 : i32
    %c0_i32_1 = arith.constant 0 : i32
    return %c0_i32, %c0_i32_0 : i32, i32
  }
  func.func @transform_7(%arg0: i32, %arg1: i32) -> (i32, i32) {
    %c0_i32 = arith.constant 0 : i32
    %c0_i32_0 = arith.constant 0 : i32
    %c0_i32_1 = arith.constant 0 : i32
    return %c0_i32, %c0_i32_0 : i32, i32
  }
  func.func @transform_8(%arg0: i32, %arg1: i32) -> (i32, i32) {
    %c0_i32 = arith.constant 0 : i32
    %c0_i32_0 = arith.constant 0 : i32
    %c0_i32_1 = arith.constant 0 : i32
    return %c0_i32, %c0_i32_0 : i32, i32
  }
  func.func @transform_9(%arg0: i32, %arg1: i32) -> (i32, i32) {
    %c0_i32 = arith.constant 0 : i32
    %c0_i32_0 = arith.constant 0 : i32
    %c0_i32_1 = arith.constant 0 : i32
    return %c0_i32, %c0_i32_0 : i32, i32
  }
  func.func @transform_10(%arg0: i32, %arg1: i32) -> (i32, i32, i32, i32) {
    %c0_i32 = arith.constant 0 : i32
    %c0_i32_0 = arith.constant 0 : i32
    %c0_i32_1 = arith.constant 0 : i32
    return %arg0, %arg1, %c0_i32, %c0_i32_0 : i32, i32, i32, i32
  }
}

</mosaic_0001>

<llo_original>
// kernel: tpu_custom_call.1
$region0: #{tpu_custom_call.1}
  #allocation0 [shape = 'u32[]', space=smem, size = 0x4, offset = 0x4, fixed_abs, tag = 'smem constant byte address 0x4 - core index']
  #allocation1 [shape = 'u32[144,128]{1,0:T(1,128)}', space=vmem, size = 0x12000, scoped, tag = 'internal scratch']
  %s0 = inlined_call_operand.hbm [shape: bf16[2,1,16,128], index: 0, kind: input, shape index: {}]
  %s1 = inlined_call_operand.hbm [shape: bf16[2,1,8,128], index: 1, kind: input, shape index: {}]
  %s2 = inlined_call_operand.vmem [shape: f32[2,1,16], index: 2, kind: input, shape index: {}]
  %s3 = inlined_call_operand.vmem [shape: f32[1,128], index: 3, kind: input, shape index: {}]
  %s4 = inlined_call_operand.vmem [shape: f32[1,128], index: 4, kind: input, shape index: {}]
  %s5 = inlined_call_operand.vmem [shape: f32[1,128], index: 5, kind: input, shape index: {}]
  %s6 = inlined_call_operand.vmem [shape: f32[1,128], index: 6, kind: input, shape index: {}]
  %s7 = inlined_call_operand.hbm [shape: bf16[128,512], index: 7, kind: input, shape index: {}]
  %s8 = inlined_call_operand.hbm [shape: bf16[128,1024], index: 8, kind: input, shape index: {}]
  %s9 = inlined_call_operand.hbm [shape: bf16[512,128], index: 9, kind: input, shape index: {}]
  %s10 = inlined_call_operand.hbm [shape: f32[2,1,8,128], index: 10, kind: output, shape index: {}]
  %s11 = sld [smem:[#allocation0]]
  $region93: #{tpu_custom_call.1} parent=0
    _
  %s13 = ssub.s32 1, %s11
  %s14 = scalar_select 0, %s13, %s11
  $region1: #{tpu_custom_call.1} parent=0
    #allocation2 [shape = 'u8[8192]{0}', space=vmem, size = 0x2000, scoped, tag = 'input window, operand 0']
    #allocation3 [shape = 's32[2]{0}', space=sflag, size = 0x8, scoped, tag = 'scoped memory for tpu_custom_call.1']
    #allocation4 [shape = 's32[2]{0}', space=sflag, size = 0x8, scoped, tag = 'scoped memory for tpu_custom_call.1']
    #allocation5 [shape = 'u8[4096]{0}', space=vmem, size = 0x1000, scoped, tag = 'input window, operand 1']
    #allocation6 [shape = 's32[2]{0}', space=sflag, size = 0x8, scoped, tag = 'scoped memory for tpu_custom_call.1']
    #allocation7 [shape = 'u8[131072]{0}', space=vmem, size = 0x20000, scoped, tag = 'input window, operand 7, single buffered']
    #allocation8 [shape = 'u8[262144]{0}', space=vmem, size = 0x40000, scoped, tag = 'input window, operand 8, single buffered']
    #allocation9 [shape = 's32[1]{0}', space=sflag, size = 0x4, scoped, tag = 'scoped memory for tpu_custom_call.1']
    #allocation10 [shape = 'u8[131072]{0}', space=vmem, size = 0x20000, scoped, tag = 'input window, operand 9, single buffered']
    #allocation11 [shape = 'u8[8192]{0}', space=vmem, size = 0x2000, scoped, tag = 'output window, operand 0']
    %15 = vsyncpa [#allocation3], 0
    %s16 = scalar_lea.sflag [#allocation3], 1
    %17 = vsyncpa %s16, 0
    %18 = vsyncpa [#allocation6], 0
    %s19 = scalar_lea.sflag [#allocation6], 1
    %20 = vsyncpa %s19, 0
    %21 = vsyncpa [#allocation9], 0
    %22 = vsyncpa [#allocation4], 0
    %s23 = scalar_lea.sflag [#allocation4], 1
    %24 = vsyncpa %s23, 0
    loop: start=0, step=1, limit=4
    $region2: #{tpu_custom_call.1} parent=1 // loop_pre_header
      _
    $region3: #{tpu_custom_call.1} parent=1 // loop_header
      %s26 = sphi 0, %s30
      %p27 = scmp.ge.s32.totalorder %s26, 4
      %s33 = sphi 0, %s45
      %s34 = sphi 0, %s41
      %s35 = sphi 0, %s33
      %s36 = sphi 0, %s34
      %s37 = sphi 0, %s35
      %s38 = sphi 0, %s36
      %s50 = sphi 0, %s52
      %s53 = sphi 0, %s50
      %s54 = sphi 0, %s53
      %s70 = sphi 0, %s54
      %s78 = sphi 0, %s80
      %s81 = sphi 0, %s78
      %s82 = sphi 0, %s81
      %s98 = sphi 0, %s82
      %s104 = sphi 0, %s106
      %s107 = sphi 0, %s104
      %s108 = sphi 0, %s107
      %s124 = sphi 0, %s108
      %s128 = sphi 0, %s128
      %s130 = sphi 0, %s128
      %s131 = sphi 0, %s130
      %s145 = sphi 0, %s131
      %s149 = sphi 0, %s149
      %s151 = sphi 0, %s149
      %s152 = sphi 0, %s151
      %s166 = sphi 0, %s152
      %s170 = sphi 0, %s170
      %s172 = sphi 0, %s170
      %s173 = sphi 0, %s172
      %s187 = sphi 0, %s173
      %s191 = sphi 0, %s191
      %s193 = sphi 0, %s191
      %s194 = sphi 0, %s193
      %s208 = sphi 0, %s194
      %s212 = sphi 0, %s212
      %s214 = sphi 0, %s212
      %s215 = sphi 0, %s214
      %s229 = sphi 0, %s215
      %s233 = sphi 0, %s233
      %s235 = sphi 0, %s233
      %s236 = sphi 0, %s235
      %s250 = sphi 0, %s236
      %s254 = sphi 0, %s254
      %s256 = sphi 0, %s254
      %s257 = sphi 0, %s256
      %s271 = sphi 0, %s257
      %s279 = sphi 0, %s281
      %s282 = sphi 0, %s279
      %s283 = sphi 0, %s282
      %s299 = sphi 0, %s283
    $region4: #{tpu_custom_call.1} parent=1 // loop_header_branch
      %29 = sbr.rel (%p27) target = $region8
    $region5: #{tpu_custom_call.1} parent=1 // loop_body
      %s31 = ssub.s32 %s26, 1
      %s32 = ssub.s32 %s26, 2
      %s39 = sadd.s32 1, %s34
      %p40 = scmp.ge.s32.totalorder %s39, 1
      %s41 = scalar_select %p40, 0, %s39
      %s42 = sadd.s32 1, %s33
      %s43 = scalar_select %p40, %s42, %s33
      %p44 = scmp.ge.s32.totalorder %s43, 2
      %s45 = scalar_select %p44, 0, %s43
      %s46 = ssub.s32 %s33, %s45
      %s47 = ssub.s32 %s34, %s41
      %s48 = sor.u32 %s46, %s47
      %p49 = scmp.eq.s32.totalorder %s48, 0
      %s51 = sadd.s32 %s50, 1
      %s52 = scalar_select %p49, %s50, %s51
      %p55 = pneg %p49
      %p56 = scmp.eq.s32.totalorder %s26, 1
      %p57 = por %p55, %p56
      %p58 = scmp.ne.s32.totalorder %s50, %s53
      %p59 = scmp.eq.s32.totalorder %s26, 0
      %p60 = por %p58, %p59
      %p61 = scmp.ne.s32.totalorder %s50, %s53
      %p62 = scmp.eq.s32.totalorder %s31, 1
      %p63 = por %p61, %p62
      %p64 = scmp.ne.s32.totalorder %s53, %s54
      %p65 = scmp.eq.s32.totalorder %s31, 0
      %p66 = por %p64, %p65
      %p67 = scmp.ne.s32.totalorder %s53, %s54
      %p68 = scmp.eq.s32.totalorder %s32, 1
      %p69 = por %p67, %p68
      %p71 = scmp.ne.s32.totalorder %s54, %s70
      %p72 = scmp.eq.s32.totalorder %s32, 0
      %p73 = por %p71, %p72
      %s74 = ssub.s32 %s33, %s45
      %s75 = ssub.s32 %s34, %s41
      %s76 = sor.u32 %s74, %s75
      %p77 = scmp.eq.s32.totalorder %s76, 0
      %s79 = sadd.s32 %s78, 1
      %s80 = scalar_select %p77, %s78, %s79
      %p83 = pneg %p77
      %p84 = scmp.eq.s32.totalorder %s26, 1
      %p85 = por %p83, %p84
      %p86 = scmp.ne.s32.totalorder %s78, %s81
      %p87 = scmp.eq.s32.totalorder %s26, 0
      %p88 = por %p86, %p87
      %p89 = scmp.ne.s32.totalorder %s78, %s81
      %p90 = scmp.eq.s32.totalorder %s31, 1
      %p91 = por %p89, %p90
      %p92 = scmp.ne.s32.totalorder %s81, %s82
      %p93 = scmp.eq.s32.totalorder %s31, 0
      %p94 = por %p92, %p93
      %p95 = scmp.ne.s32.totalorder %s81, %s82
      %p96 = scmp.eq.s32.totalorder %s32, 1
      %p97 = por %p95, %p96
      %p99 = scmp.ne.s32.totalorder %s82, %s98
      %p100 = scmp.eq.s32.totalorder %s32, 0
      %p101 = por %p99, %p100
      %s102 = ssub.s32 %s33, %s45
      %p103 = scmp.eq.s32.totalorder %s102, 0
      %s105 = sadd.s32 %s104, 1
      %s106 = scalar_select %p103, %s104, %s105
      %p109 = pneg %p103
      %p110 = scmp.eq.s32.totalorder %s26, 1
      %p111 = por %p109, %p110
      %p112 = scmp.ne.s32.totalorder %s104, %s107
      %p113 = scmp.eq.s32.totalorder %s26, 0
      %p114 = por %p112, %p113
      %p115 = scmp.ne.s32.totalorder %s104, %s107
      %p116 = scmp.eq.s32.totalorder %s31, 1
      %p117 = por %p115, %p116
      %p118 = scmp.ne.s32.totalorder %s107, %s108
      %p119 = scmp.eq.s32.totalorder %s31, 0
      %p120 = por %p118, %p119
      %p121 = scmp.ne.s32.totalorder %s107, %s108
      %p122 = scmp.eq.s32.totalorder %s32, 1
      %p123 = por %p121, %p122
      %p125 = scmp.ne.s32.totalorder %s108, %s124
      %p126 = scmp.eq.s32.totalorder %s32, 0
      %p127 = por %p125, %p126
      %s129 = sadd.s32 %s128, 1
      %p132 = scmp.eq.s32.totalorder %s26, 1
      %p133 = scmp.ne.s32.totalorder %s128, %s130
      %p134 = scmp.eq.s32.totalorder %s26, 0
      %p135 = por %p133, %p134
      %p136 = scmp.ne.s32.totalorder %s128, %s130
      %p137 = scmp.eq.s32.totalorder %s31, 1
      %p138 = por %p136, %p137
      %p139 = scmp.ne.s32.totalorder %s130, %s131
      %p140 = scmp.eq.s32.totalorder %s31, 0
      %p141 = por %p139, %p140
      %p142 = scmp.ne.s32.totalorder %s130, %s131
      %p143 = scmp.eq.s32.totalorder %s32, 1
      %p144 = por %p142, %p143
      %p146 = scmp.ne.s32.totalorder %s131, %s145
      %p147 = scmp.eq.s32.totalorder %s32, 0
      %p148 = por %p146, %p147
      %s150 = sadd.s32 %s149, 1
      %p153 = scmp.eq.s32.totalorder %s26, 1
      %p154 = scmp.ne.s32.totalorder %s149, %s151
      %p155 = scmp.eq.s32.totalorder %s26, 0
      %p156 = por %p154, %p155
      %p157 = scmp.ne.s32.totalorder %s149, %s151
      %p158 = scmp.eq.s32.totalorder %s31, 1
      %p159 = por %p157, %p158
      %p160 = scmp.ne.s32.totalorder %s151, %s152
      %p161 = scmp.eq.s32.totalorder %s31, 0
      %p162 = por %p160, %p161
      %p163 = scmp.ne.s32.totalorder %s151, %s152
      %p164 = scmp.eq.s32.totalorder %s32, 1
      %p165 = por %p163, %p164
      %p167 = scmp.ne.s32.totalorder %s152, %s166
      %p168 = scmp.eq.s32.totalorder %s32, 0
      %p169 = por %p167, %p168
      %s171 = sadd.s32 %s170, 1
      %p174 = scmp.eq.s32.totalorder %s26, 1
      %p175 = scmp.ne.s32.totalorder %s170, %s172
      %p176 = scmp.eq.s32.totalorder %s26, 0
      %p177 = por %p175, %p176
      %p178 = scmp.ne.s32.totalorder %s170, %s172
      %p179 = scmp.eq.s32.totalorder %s31, 1
      %p180 = por %p178, %p179
      %p181 = scmp.ne.s32.totalorder %s172, %s173
      %p182 = scmp.eq.s32.totalorder %s31, 0
      %p183 = por %p181, %p182
      %p184 = scmp.ne.s32.totalorder %s172, %s173
      %p185 = scmp.eq.s32.totalorder %s32, 1
      %p186 = por %p184, %p185
      %p188 = scmp.ne.s32.totalorder %s173, %s187
      %p189 = scmp.eq.s32.totalorder %s32, 0
      %p190 = por %p188, %p189
      %s192 = sadd.s32 %s191, 1
      %p195 = scmp.eq.s32.totalorder %s26, 1
      %p196 = scmp.ne.s32.totalorder %s191, %s193
      %p197 = scmp.eq.s32.totalorder %s26, 0
      %p198 = por %p196, %p197
      %p199 = scmp.ne.s32.totalorder %s191, %s193
      %p200 = scmp.eq.s32.totalorder %s31, 1
      %p201 = por %p199, %p200
      %p202 = scmp.ne.s32.totalorder %s193, %s194
      %p203 = scmp.eq.s32.totalorder %s31, 0
      %p204 = por %p202, %p203
      %p205 = scmp.ne.s32.totalorder %s193, %s194
      %p206 = scmp.eq.s32.totalorder %s32, 1
      %p207 = por %p205, %p206
      %p209 = scmp.ne.s32.totalorder %s194, %s208
      %p210 = scmp.eq.s32.totalorder %s32, 0
      %p211 = por %p209, %p210
      %s213 = sadd.s32 %s212, 1
      %p216 = scmp.eq.s32.totalorder %s26, 1
      %p217 = scmp.ne.s32.totalorder %s212, %s214
      %p218 = scmp.eq.s32.totalorder %s26, 0
      %p219 = por %p217, %p218
      %p220 = scmp.ne.s32.totalorder %s212, %s214
      %p221 = scmp.eq.s32.totalorder %s31, 1
      %p222 = por %p220, %p221
      %p223 = scmp.ne.s32.totalorder %s214, %s215
      %p224 = scmp.eq.s32.totalorder %s31, 0
      %p225 = por %p223, %p224
      %p226 = scmp.ne.s32.totalorder %s214, %s215
      %p227 = scmp.eq.s32.totalorder %s32, 1
      %p228 = por %p226, %p227
      %p230 = scmp.ne.s32.totalorder %s215, %s229
      %p231 = scmp.eq.s32.totalorder %s32, 0
      %p232 = por %p230, %p231
      %s234 = sadd.s32 %s233, 1
      %p237 = scmp.eq.s32.totalorder %s26, 1
      %p238 = scmp.ne.s32.totalorder %s233, %s235
      %p239 = scmp.eq.s32.totalorder %s26, 0
      %p240 = por %p238, %p239
      %p241 = scmp.ne.s32.totalorder %s233, %s235
      %p242 = scmp.eq.s32.totalorder %s31, 1
      %p243 = por %p241, %p242
      %p244 = scmp.ne.s32.totalorder %s235, %s236
      %p245 = scmp.eq.s32.totalorder %s31, 0
      %p246 = por %p244, %p245
      %p247 = scmp.ne.s32.totalorder %s235, %s236
      %p248 = scmp.eq.s32.totalorder %s32, 1
      %p249 = por %p247, %p248
      %p251 = scmp.ne.s32.totalorder %s236, %s250
      %p252 = scmp.eq.s32.totalorder %s32, 0
      %p253 = por %p251, %p252
      %s255 = sadd.s32 %s254, 1
      %p258 = scmp.eq.s32.totalorder %s26, 1
      %p259 = scmp.ne.s32.totalorder %s254, %s256
      %p260 = scmp.eq.s32.totalorder %s26, 0
      %p261 = por %p259, %p260
      %p262 = scmp.ne.s32.totalorder %s254, %s256
      %p263 = scmp.eq.s32.totalorder %s31, 1
      %p264 = por %p262, %p263
      %p265 = scmp.ne.s32.totalorder %s256, %s257
      %p266 = scmp.eq.s32.totalorder %s31, 0
      %p267 = por %p265, %p266
      %p268 = scmp.ne.s32.totalorder %s256, %s257
      %p269 = scmp.eq.s32.totalorder %s32, 1
      %p270 = por %p268, %p269
      %p272 = scmp.ne.s32.totalorder %s257, %s271
      %p273 = scmp.eq.s32.totalorder %s32, 0
      %p274 = por %p272, %p273
      %s275 = ssub.s32 %s33, %s45
      %s276 = ssub.s32 %s34, %s41
      %s277 = sor.u32 %s275, %s276
      %p278 = scmp.eq.s32.totalorder %s277, 0
      %s280 = sadd.s32 %s279, 1
      %s281 = scalar_select %p278, %s279, %s280
      %p284 = pneg %p278
      %p285 = scmp.eq.s32.totalorder %s26, 1
      %p286 = por %p284, %p285
      %p287 = scmp.ne.s32.totalorder %s279, %s282
      %p288 = scmp.eq.s32.totalorder %s26, 0
      %p289 = por %p287, %p288
      %p290 = scmp.ne.s32.totalorder %s279, %s282
      %p291 = scmp.eq.s32.totalorder %s31, 1
      %p292 = por %p290, %p291
      %p293 = scmp.ne.s32.totalorder %s282, %s283
      %p294 = scmp.eq.s32.totalorder %s31, 0
      %p295 = por %p293, %p294
      %p296 = scmp.ne.s32.totalorder %s282, %s283
      %p297 = scmp.eq.s32.totalorder %s32, 1
      %p298 = por %p296, %p297
      %p300 = scmp.ne.s32.totalorder %s283, %s299
      %p301 = scmp.eq.s32.totalorder %s32, 0
      %p302 = por %p300, %p301
      %p303 = scmp.le.s32.totalorder 1, %s26
      %p304 = scmp.lt.s32.totalorder %s26, 3
      %p305 = pnand %p303, %p304
      %p306 = pneg %p305
      // Predicated region
      $region9: #{tpu_custom_call.1} parent=5 // pred_check
        _
      $region10: #{tpu_custom_call.1} parent=5 // pred_check_branch
        %308 = sbr.rel (%p305) target = $region12
      $region11: #{tpu_custom_call.1} parent=5 // pred_region
        %s309 = ssub.s32 %s26, 1
        // Predicated region
        $region13: #{tpu_custom_call.1} parent=11 // pred_check
          %p310 = pneg %p141
        $region14: #{tpu_custom_call.1} parent=11 // pred_check_branch
          %312 = sbr.rel (%p310) target = $region16
        $region15: #{tpu_custom_call.1} parent=11 // pred_region
          _
        $region16: #{tpu_custom_call.1} parent=11 // pred_fallthru
          _
        // Predicated region
        $region17: #{tpu_custom_call.1} parent=11 // pred_check
          %p313 = pneg %p162
        $region18: #{tpu_custom_call.1} parent=11 // pred_check_branch
          %315 = sbr.rel (%p313) target = $region20
        $region19: #{tpu_custom_call.1} parent=11 // pred_region
          _
        $region20: #{tpu_custom_call.1} parent=11 // pred_fallthru
          _
        // Predicated region
        $region21: #{tpu_custom_call.1} parent=11 // pred_check
          %p316 = pneg %p183
        $region22: #{tpu_custom_call.1} parent=11 // pred_check_branch
          %318 = sbr.rel (%p316) target = $region24
        $region23: #{tpu_custom_call.1} parent=11 // pred_region
          _
        $region24: #{tpu_custom_call.1} parent=11 // pred_fallthru
          _
        // Predicated region
        $region25: #{tpu_custom_call.1} parent=11 // pred_check
          %p319 = pneg %p204
        $region26: #{tpu_custom_call.1} parent=11 // pred_check_branch
          %321 = sbr.rel (%p319) target = $region28
        $region27: #{tpu_custom_call.1} parent=11 // pred_region
          _
        $region28: #{tpu_custom_call.1} parent=11 // pred_fallthru
          _
        // Predicated region
        $region29: #{tpu_custom_call.1} parent=11 // pred_check
          %p322 = pneg %p225
        $region30: #{tpu_custom_call.1} parent=11 // pred_check_branch
          %324 = sbr.rel (%p322) target = $region32
        $region31: #{tpu_custom_call.1} parent=11 // pred_region
          %s326 = ssub.s32 4096, 4096
          %327 = vsyncadd [#allocation6], %s326
          %s328 = sshll.u32 [#allocation7], 4
          %s329 = int_to_ptr.vmem [resolvable:$true] %s328
          %334 = dma.hbm_to_vmem [thread:$0]  %s7, 4096, %s329, [#allocation6], 256, 256, 16
        $region32: #{tpu_custom_call.1} parent=11 // pred_fallthru
          _
        // Predicated region
        $region33: #{tpu_custom_call.1} parent=11 // pred_check
          %p335 = pneg %p246
        $region34: #{tpu_custom_call.1} parent=11 // pred_check_branch
          %337 = sbr.rel (%p335) target = $region36
        $region35: #{tpu_custom_call.1} parent=11 // pred_region
          %s339 = ssub.s32 8192, 8192
          %340 = vsyncadd [#allocation9], %s339
          %s341 = sshll.u32 [#allocation8], 4
          %s342 = int_to_ptr.vmem [resolvable:$true] %s341
          %347 = dma.hbm_to_vmem [thread:$0]  %s8, 8192, %s342, [#allocation9], 512, 512, 32
        $region36: #{tpu_custom_call.1} parent=11 // pred_fallthru
          _
        // Predicated region
        $region37: #{tpu_custom_call.1} parent=11 // pred_check
          %p348 = pneg %p267
        $region38: #{tpu_custom_call.1} parent=11 // pred_check_branch
          %350 = sbr.rel (%p348) target = $region40
        $region39: #{tpu_custom_call.1} parent=11 // pred_region
          %s352 = ssub.s32 4096, 4096
          %353 = vsyncadd [#allocation9], %s352
          %s354 = sshll.u32 [#allocation10], 4
          %s355 = int_to_ptr.vmem [resolvable:$true] %s354
          %360 = dma.hbm_to_vmem [thread:$0]  %s9, 4096, %s355, [#allocation9], 64, 64, 4
        $region40: #{tpu_custom_call.1} parent=11 // pred_fallthru
          _
      $region12: #{tpu_custom_call.1} parent=5 // pred_fallthru
        _
      %p361 = scmp.lt.s32.totalorder %s26, 2
      // Predicated region
      $region41: #{tpu_custom_call.1} parent=5 // pred_check
        %p362 = pneg %p361
      $region42: #{tpu_custom_call.1} parent=5 // pred_check_branch
        %364 = sbr.rel (%p362) target = $region44
      $region43: #{tpu_custom_call.1} parent=5 // pred_region
        // Predicated region
        $region45: #{tpu_custom_call.1} parent=43 // pred_check
          %p365 = pneg %p60
        $region46: #{tpu_custom_call.1} parent=43 // pred_check_branch
          %367 = sbr.rel (%p365) target = $region48
        $region47: #{tpu_custom_call.1} parent=43 // pred_region
          %s368 = sand.u32 %s50, 1
          %s369 = scalar_lea.sflag [#allocation3], %s368
          %s370 = sand.u32 %s50, 1
          %s371 = smul.addr %s370, 8
          %s372 = scalar_lea.vmem [#allocation2], %s371
          %s374 = ssub.s32 128, 128
          %375 = vsyncadd %s369, %s374
          %s376 = smul.addr %s34, 2
          %s377 = smul.addr %s33, 2
          %s378 = sadd.s32 %s376, %s377
          %s379 = smul.addr %s378, 64
          %s380 = scalar_lea.hbm %s0, %s379
          %s381 = sshll.u32 %s372, 4
          %s382 = int_to_ptr.vmem [resolvable:$true] %s381
          %387 = dma.hbm_to_vmem [thread:$0]  %s380, 128, %s382, %s369, 64, 64, 4
        $region48: #{tpu_custom_call.1} parent=43 // pred_fallthru
          _
        // Predicated region
        $region49: #{tpu_custom_call.1} parent=43 // pred_check
          %p388 = pneg %p88
        $region50: #{tpu_custom_call.1} parent=43 // pred_check_branch
          %390 = sbr.rel (%p388) target = $region52
        $region51: #{tpu_custom_call.1} parent=43 // pred_region
          %s391 = sand.u32 %s26, 1
          %s392 = scalar_lea.sflag [#allocation6], %s391
          %s393 = sand.u32 %s78, 1
          %s394 = smul.addr %s393, 4
          %s395 = scalar_lea.vmem [#allocation5], %s394
          %s397 = ssub.s32 64, 64
          %398 = vsyncadd %s392, %s397
          %s399 = sadd.s32 %s34, %s33
          %s400 = smul.addr %s399, 64
          %s401 = scalar_lea.hbm %s1, %s400
          %s403 = sshll.u32 %s395, 4
          %s404 = int_to_ptr.vmem [resolvable:$true] %s403
          %406 = dma.hbm_to_vmem [thread:$0]  %s401, 64, %s404, %s392
        $region52: #{tpu_custom_call.1} parent=43 // pred_fallthru
          _
        // Predicated region
        $region53: #{tpu_custom_call.1} parent=43 // pred_check
          %p407 = pneg %p114
        $region54: #{tpu_custom_call.1} parent=43 // pred_check_branch
          %409 = sbr.rel (%p407) target = $region56
        $region55: #{tpu_custom_call.1} parent=43 // pred_region
          %p410 = scmp.lt.s32.totalorder %s33, 1
          %s411 = scalar_select %p410, %s33, 1
          %s412 = scalar_lea.vmem %s2, %s411
        $region56: #{tpu_custom_call.1} parent=43 // pred_fallthru
          _
      $region44: #{tpu_custom_call.1} parent=5 // pred_fallthru
        _
      %p413 = scmp.le.s32.totalorder 1, %s26
      %p414 = scmp.lt.s32.totalorder %s26, 3
      %p415 = pnand %p413, %p414
      %p416 = pneg %p415
      // Predicated region
      $region57: #{tpu_custom_call.1} parent=5 // pred_check
        _
      $region58: #{tpu_custom_call.1} parent=5 // pred_check_branch
        %418 = sbr.rel (%p415) target = $region60
      $region59: #{tpu_custom_call.1} parent=5 // pred_region
        %s419 = ssub.s32 %s26, 1
        %s420 = sand.u32 %s53, 1
        %s421 = scalar_lea.sflag [#allocation3], %s420
        %s422 = sand.u32 %s53, 1
        %s423 = smul.addr %s422, 8
        %s424 = scalar_lea.vmem [#allocation2], %s423
        // Predicated region
        $region61: #{tpu_custom_call.1} parent=59 // pred_check
          %p425 = pneg %p66
        $region62: #{tpu_custom_call.1} parent=59 // pred_check_branch
          %427 = sbr.rel (%p425) target = $region64
        $region63: #{tpu_custom_call.1} parent=59 // pred_region
          %428 = dma.done %s421, 128
        $region64: #{tpu_custom_call.1} parent=59 // pred_fallthru
          _
        %s429 = sand.u32 %s31, 1
        %s430 = scalar_lea.sflag [#allocation6], %s429
        %s431 = sand.u32 %s81, 1
        %s432 = smul.addr %s431, 4
        %s433 = scalar_lea.vmem [#allocation5], %s432
        // Predicated region
        $region65: #{tpu_custom_call.1} parent=59 // pred_check
          %p434 = pneg %p94
        $region66: #{tpu_custom_call.1} parent=59 // pred_check_branch
          %436 = sbr.rel (%p434) target = $region68
        $region67: #{tpu_custom_call.1} parent=59 // pred_region
          %437 = dma.done %s430, 64
        $region68: #{tpu_custom_call.1} parent=59 // pred_fallthru
          _
        // Predicated region
        $region69: #{tpu_custom_call.1} parent=59 // pred_check
          %p438 = pneg %p225
        $region70: #{tpu_custom_call.1} parent=59 // pred_check_branch
          %440 = sbr.rel (%p438) target = $region72
        $region71: #{tpu_custom_call.1} parent=59 // pred_region
          %441 = dma.done [#allocation6], 4096
        $region72: #{tpu_custom_call.1} parent=59 // pred_fallthru
          _
        // Predicated region
        $region73: #{tpu_custom_call.1} parent=59 // pred_check
          %p442 = pneg %p246
        $region74: #{tpu_custom_call.1} parent=59 // pred_check_branch
          %444 = sbr.rel (%p442) target = $region76
        $region75: #{tpu_custom_call.1} parent=59 // pred_region
          %445 = dma.done [#allocation9], 8192
        $region76: #{tpu_custom_call.1} parent=59 // pred_fallthru
          _
        // Predicated region
        $region77: #{tpu_custom_call.1} parent=59 // pred_check
          %p446 = pneg %p267
        $region78: #{tpu_custom_call.1} parent=59 // pred_check_branch
          %448 = sbr.rel (%p446) target = $region80
        $region79: #{tpu_custom_call.1} parent=59 // pred_region
          %449 = dma.done [#allocation9], 4096
        $region80: #{tpu_custom_call.1} parent=59 // pred_fallthru
          _
        %s450 = sand.u32 %s53, 1
        %s451 = scalar_lea.sflag [#allocation3], %s450
        %s452 = sand.u32 %s53, 1
        %s453 = smul.addr %s452, 8
        %s454 = scalar_lea.vmem [#allocation2], %s453
        %p455 = pneg %p66
        %p456 = pneg %p63
        %s457 = sand.u32 %s31, 1
        %s458 = scalar_lea.sflag [#allocation6], %s457
        %s459 = sand.u32 %s81, 1
        %s460 = smul.addr %s459, 4
        %s461 = scalar_lea.vmem [#allocation5], %s460
        %p462 = pneg %p94
        %p463 = pneg %p91
        %p464 = scmp.lt.s32.totalorder %s35, 1
        %s465 = scalar_select %p464, %s35, 1
        %s466 = scalar_lea.vmem %s2, %s465
        %p467 = pneg %p120
        %p468 = pneg %p117
        %p469 = pneg %p141
        %p470 = pneg %p138
        %p471 = pneg %p162
        %p472 = pneg %p159
        %p473 = pneg %p183
        %p474 = pneg %p180
        %p475 = pneg %p204
        %p476 = pneg %p201
        %p477 = pneg %p225
        %p478 = pneg %p222
        %p479 = pneg %p246
        %p480 = pneg %p243
        %p481 = pneg %p267
        %p482 = pneg %p264
        %p483 = pneg %p295
        %p484 = pneg %p292
        %s485 = sand.u32 %s282, 1
        %s486 = scalar_lea.sflag [#allocation4], %s485
        %s487 = sand.u32 %s282, 1
        %s488 = smul.addr %s487, 8
        %s489 = scalar_lea.vmem [#allocation11], %s488
        %p490 = scmp.lt.s32.totalorder %s35, 1
        %s491 = scalar_select %p490, %s35, 1
        %s492 = scalar_lea.vmem %s2, %s491
        %v494 = vld [vmem:[%s424] sm:$0xf]
        %v495 = vld [vmem:[%s424 + $0x4] sm:$0xf]
        %v496 = vunpack.c.l.bf16 %v494
        %v497 = vunpack.c.l.bf16 %v495
        %v498 = vld [vmem:[%s433] sm:$0xf]
        %v499 = vunpack.c.l.bf16 %v498
        %v500 = vld [vmem:[%s3] sm:$0x1]
        %v501 = vld [vmem:[%s4] sm:$0x1]
        %v502 = vlaneseq
        %v503 = vand.u32 %v502, 127
        %vm504 = vcmp.lt.s32.totalorder %v503, 32
        %505 = vadd.xlane.f32.xlu0 %v496
        %v506 = vpop.xlane.xlu0 %505
        %507 = vadd.xlane.f32.xlu0 %v497
        %v508 = vpop.xlane.xlu0 %507
        %v509 = vmul.f32 %v506, 0.03125
        %v510 = vmul.f32 %v508, 0.03125
        %v511 = vsub.f32 %v496, %v509
        %v512 = vsub.f32 %v497, %v510
        %v513 = vsel %vm504, 1, 0
        %vm514 = vcmp.eq.s32.totalorder %v513, 1
        %v515 = vsel %vm514, %v511, 0.0
        %v516 = vsel %vm514, %v512, 0.0
        %v517 = vmul.f32 %v515, %v515
        %v518 = vmul.f32 %v516, %v516
        %519 = vadd.xlane.f32.xlu0 %v517
        %v520 = vpop.xlane.xlu0 %519
        %521 = vadd.xlane.f32.xlu0 %v518
        %v522 = vpop.xlane.xlu0 %521
        %v523 = vmul.f32 %v520, 0.03125
        %v524 = vmul.f32 %v522, 0.03125
        %v525 = vadd.f32 %v523, 1e-05
        %v526 = vadd.f32 %v524, 1e-05
        %v527 = vrsqrt.pop %v525
        %v528 = vrsqrt.pop %v526
        %v529 = vmul.f32 %v511, %v527
        %v530 = vmul.f32 %v512, %v528
        %v532 = vlaneseq
        %v533 = vshrl.u32 %v532, 7
        %v534 = vsub.s32 0, %v533
        %v535 = vrot.slane %v500, %v534
        %v537 = vmul.f32 %v529, %v535
        %v538 = vmul.f32 %v530, %v535
        %v540 = vlaneseq
        %v541 = vshrl.u32 %v540, 7
        %v542 = vsub.s32 0, %v541
        %v543 = vrot.slane %v501, %v542
        %v545 = vadd.f32 %v537, %v543
        %v546 = vadd.f32 %v538, %v543
        %v547 = vld [vmem:[%s5] sm:$0x1]
        %v548 = vld [vmem:[%s6] sm:$0x1]
        %549 = vadd.xlane.f32.xlu0 %v499
        %v550 = vpop.xlane.xlu0 %549
        %v551 = vmul.f32 %v550, 0.03125
        %v552 = vsub.f32 %v499, %v551
        %v553 = vsel %vm514, %v552, 0.0
        %v554 = vmul.f32 %v553, %v553
        %555 = vadd.xlane.f32.xlu0 %v554
        %v556 = vpop.xlane.xlu0 %555
        %v557 = vmul.f32 %v556, 0.03125
        %v558 = vadd.f32 %v557, 1e-05
        %v559 = vrsqrt.pop %v558
        %v560 = vmul.f32 %v552, %v559
        %v562 = vlaneseq
        %v563 = vshrl.u32 %v562, 7
        %v564 = vsub.s32 0, %v563
        %v565 = vrot.slane %v547, %v564
        %v567 = vmul.f32 %v560, %v565
        %v569 = vlaneseq
        %v570 = vshrl.u32 %v569, 7
        %v571 = vsub.s32 0, %v570
        %v572 = vrot.slane %v548, %v571
        %v574 = vadd.f32 %v567, %v572
        %v575 = vpack.c.bf16 %v546, %v545
        %v576 = vpack.c.bf16 %v574, %v574
        %v577 = vld [vmem:[#allocation7] sm:$0xff]
        %v578 = vld [vmem:[#allocation7 + $0x8] sm:$0xff]
        %v579 = vld [vmem:[#allocation7 + $0x10] sm:$0xff]
        %v580 = vld [vmem:[#allocation7 + $0x18] sm:$0xff]
        %v581 = vld [vmem:[#allocation7 + $0x20] sm:$0xff]
        %v582 = vld [vmem:[#allocation7 + $0x28] sm:$0xff]
        %v583 = vld [vmem:[#allocation7 + $0x30] sm:$0xff]
        %v584 = vld [vmem:[#allocation7 + $0x38] sm:$0xff]
        %v585 = vld [vmem:[#allocation7 + $0x40] sm:$0xff]
        %v586 = vld [vmem:[#allocation7 + $0x48] sm:$0xff]
        %v587 = vld [vmem:[#allocation7 + $0x50] sm:$0xff]
        %v588 = vld [vmem:[#allocation7 + $0x58] sm:$0xff]
        %v589 = vld [vmem:[#allocation7 + $0x60] sm:$0xff]
        %v590 = vld [vmem:[#allocation7 + $0x68] sm:$0xff]
        %v591 = vld [vmem:[#allocation7 + $0x70] sm:$0xff]
        %v592 = vld [vmem:[#allocation7 + $0x78] sm:$0xff]
        %v593 = vld [vmem:[#allocation7 + $0x80] sm:$0xff]
        %v594 = vld [vmem:[#allocation7 + $0x88] sm:$0xff]
        %v595 = vld [vmem:[#allocation7 + $0x90] sm:$0xff]
        %v596 = vld [vmem:[#allocation7 + $0x98] sm:$0xff]
        %v597 = vld [vmem:[#allocation7 + $0xa0] sm:$0xff]
        %v598 = vld [vmem:[#allocation7 + $0xa8] sm:$0xff]
        %v599 = vld [vmem:[#allocation7 + $0xb0] sm:$0xff]
        %v600 = vld [vmem:[#allocation7 + $0xb8] sm:$0xff]
        %v601 = vld [vmem:[#allocation7 + $0xc0] sm:$0xff]
        %v602 = vld [vmem:[#allocation7 + $0xc8] sm:$0xff]
        %v603 = vld [vmem:[#allocation7 + $0xd0] sm:$0xff]
        %v604 = vld [vmem:[#allocation7 + $0xd8] sm:$0xff]
        %v605 = vld [vmem:[#allocation7 + $0xe0] sm:$0xff]
        %v606 = vld [vmem:[#allocation7 + $0xe8] sm:$0xff]
        %v607 = vld [vmem:[#allocation7 + $0xf0] sm:$0xff]
        %v608 = vld [vmem:[#allocation7 + $0xf8] sm:$0xff]
        %v641 = vunpack.c.l.b16 %v577
        %v642 = vunpack.c.h.b16 %v577
        %v643 = vunpack.c.l.b16 %v578
        %v644 = vunpack.c.h.b16 %v578
        %v645 = vunpack.c.l.b16 %v579
        %v646 = vunpack.c.h.b16 %v579
        %v647 = vunpack.c.l.b16 %v580
        %v648 = vunpack.c.h.b16 %v580
        %v649 = vunpack.c.l.b16 %v581
        %v650 = vunpack.c.h.b16 %v581
        %v651 = vunpack.c.l.b16 %v582
        %v652 = vunpack.c.h.b16 %v582
        %v653 = vunpack.c.l.b16 %v583
        %v654 = vunpack.c.h.b16 %v583
        %v655 = vunpack.c.l.b16 %v584
        %v656 = vunpack.c.h.b16 %v584
        %v657 = vunpack.c.l.b16 %v585
        %v658 = vunpack.c.h.b16 %v585
        %v659 = vunpack.c.l.b16 %v586
        %v660 = vunpack.c.h.b16 %v586
        %v661 = vunpack.c.l.b16 %v587
        %v662 = vunpack.c.h.b16 %v587
        %v663 = vunpack.c.l.b16 %v588
        %v664 = vunpack.c.h.b16 %v588
        %v665 = vunpack.c.l.b16 %v589
        %v666 = vunpack.c.h.b16 %v589
        %v667 = vunpack.c.l.b16 %v590
        %v668 = vunpack.c.h.b16 %v590
        %v669 = vunpack.c.l.b16 %v591
        %v670 = vunpack.c.h.b16 %v591
        %v671 = vunpack.c.l.b16 %v592
        %v672 = vunpack.c.h.b16 %v592
        %v673 = vunpack.c.l.b16 %v593
        %v674 = vunpack.c.h.b16 %v593
        %v675 = vunpack.c.l.b16 %v594
        %v676 = vunpack.c.h.b16 %v594
        %v677 = vunpack.c.l.b16 %v595
        %v678 = vunpack.c.h.b16 %v595
        %v679 = vunpack.c.l.b16 %v596
        %v680 = vunpack.c.h.b16 %v596
        %v681 = vunpack.c.l.b16 %v597
        %v682 = vunpack.c.h.b16 %v597
        %v683 = vunpack.c.l.b16 %v598
        %v684 = vunpack.c.h.b16 %v598
        %v685 = vunpack.c.l.b16 %v599
        %v686 = vunpack.c.h.b16 %v599
        %v687 = vunpack.c.l.b16 %v600
        %v688 = vunpack.c.h.b16 %v600
        %v689 = vunpack.c.l.b16 %v601
        %v690 = vunpack.c.h.b16 %v601
        %v691 = vunpack.c.l.b16 %v602
        %v692 = vunpack.c.h.b16 %v602
        %v693 = vunpack.c.l.b16 %v603
        %v694 = vunpack.c.h.b16 %v603
        %v695 = vunpack.c.l.b16 %v604
        %v696 = vunpack.c.h.b16 %v604
        %v697 = vunpack.c.l.b16 %v605
        %v698 = vunpack.c.h.b16 %v605
        %v699 = vunpack.c.l.b16 %v606
        %v700 = vunpack.c.h.b16 %v606
        %v701 = vunpack.c.l.b16 %v607
        %v702 = vunpack.c.h.b16 %v607
        %v703 = vunpack.c.l.b16 %v608
        %v704 = vunpack.c.h.b16 %v608
        %v705 = vpack.c.b16 %v645, %v641
        %v706 = vpack.c.b16 %v646, %v642
        %v707 = vpack.c.b16 %v647, %v643
        %v708 = vpack.c.b16 %v648, %v644
        %v709 = vpack.c.b16 %v653, %v649
        %v710 = vpack.c.b16 %v654, %v650
        %v711 = vpack.c.b16 %v655, %v651
        %v712 = vpack.c.b16 %v656, %v652
        %v713 = vpack.c.b16 %v661, %v657
        %v714 = vpack.c.b16 %v662, %v658
        %v715 = vpack.c.b16 %v663, %v659
        %v716 = vpack.c.b16 %v664, %v660
        %v717 = vpack.c.b16 %v669, %v665
        %v718 = vpack.c.b16 %v670, %v666
        %v719 = vpack.c.b16 %v671, %v667
        %v720 = vpack.c.b16 %v672, %v668
        %v721 = vpack.c.b16 %v677, %v673
        %v722 = vpack.c.b16 %v678, %v674
        %v723 = vpack.c.b16 %v679, %v675
        %v724 = vpack.c.b16 %v680, %v676
        %v725 = vpack.c.b16 %v685, %v681
        %v726 = vpack.c.b16 %v686, %v682
        %v727 = vpack.c.b16 %v687, %v683
        %v728 = vpack.c.b16 %v688, %v684
        %v729 = vpack.c.b16 %v693, %v689
        %v730 = vpack.c.b16 %v694, %v690
        %v731 = vpack.c.b16 %v695, %v691
        %v732 = vpack.c.b16 %v696, %v692
        %v733 = vpack.c.b16 %v701, %v697
        %v734 = vpack.c.b16 %v702, %v698
        %v735 = vpack.c.b16 %v703, %v699
        %v736 = vpack.c.b16 %v704, %v700
        %769 = vmatprep.subr.bf16.mxu0 %v706
        %770 = vmatpush1.bf16.msra.mxu0 %v705
        %771 = vmatprep.subr.bf16.mxu0 %v710
        %772 = vmatpush1.bf16.msra.mxu0 %v709
        %773 = vmatprep.subr.bf16.mxu0 %v714
        %774 = vmatpush1.bf16.msra.mxu0 %v713
        %775 = vmatprep.subr.bf16.mxu0 %v718
        %776 = vmatpush1.bf16.msra.mxu0 %v717
        %777 = vmatprep.subr.bf16.mxu0 %v722
        %778 = vmatpush1.bf16.msra.mxu0 %v721
        %779 = vmatprep.subr.bf16.mxu0 %v726
        %780 = vmatpush1.bf16.msra.mxu0 %v725
        %781 = vmatprep.subr.bf16.mxu0 %v730
        %782 = vmatpush1.bf16.msra.mxu0 %v729
        %783 = vmatprep.subr.bf16.mxu0 %v734
        %784 = vmatpush1.bf16.msra.mxu0 %v733
        %785 = vmatprep.subr.bf16.mxu0 0
        %786 = vmatpush1.bf16.msra.mxu0 0
        %787 = vmatprep.subr.bf16.mxu0 0
        %788 = vmatpush1.bf16.msra.mxu0 0
        %789 = vmatprep.subr.bf16.mxu0 0
        %790 = vmatpush1.bf16.msra.mxu0 0
        %791 = vmatprep.subr.bf16.mxu0 0
        %792 = vmatpush1.bf16.msra.mxu0 0
        %793 = vmatprep.subr.bf16.mxu0 0
        %794 = vmatpush1.bf16.msra.mxu0 0
        %795 = vmatprep.subr.bf16.mxu0 0
        %796 = vmatpush1.bf16.msra.mxu0 0
        %797 = vmatprep.subr.bf16.mxu0 0
        %798 = vmatpush1.bf16.msra.mxu0 0
        %799 = vmatprep.subr.bf16.mxu0 0
        %800 = vmatpush1.bf16.msra.mxu0 0
        %801 = vmatprep.mubr.bf16.mxu0 0
        %802 = vmatmul.mubr.bf16.gmra.mrb[0].mxu0 %v576
        %v803 = vpop.f32.mrb[0].mxu0
        %v804 = vadd.f32 0.0, %v803
        %v805 = vpop.f32.mrb[0].mxu0
        %v806 = vadd.f32 0.0, %v805
        %v807 = vpop.f32.mrb[0].mxu0
        %v808 = vpop.f32.mrb[0].mxu0
        %809 = vdwg.mxu0
        %810 = vmatprep.subr.bf16.mxu0 %v708
        %811 = vmatpush1.bf16.msra.mxu0 %v707
        %812 = vmatprep.subr.bf16.mxu0 %v712
        %813 = vmatpush1.bf16.msra.mxu0 %v711
        %814 = vmatprep.subr.bf16.mxu0 %v716
        %815 = vmatpush1.bf16.msra.mxu0 %v715
        %816 = vmatprep.subr.bf16.mxu0 %v720
        %817 = vmatpush1.bf16.msra.mxu0 %v719
        %818 = vmatprep.subr.bf16.mxu0 %v724
        %819 = vmatpush1.bf16.msra.mxu0 %v723
        %820 = vmatprep.subr.bf16.mxu0 %v728
        %821 = vmatpush1.bf16.msra.mxu0 %v727
        %822 = vmatprep.subr.bf16.mxu0 %v732
        %823 = vmatpush1.bf16.msra.mxu0 %v731
        %824 = vmatprep.subr.bf16.mxu0 %v736
        %825 = vmatpush1.bf16.msra.mxu0 %v735
        %826 = vmatprep.subr.bf16.mxu0 0
        %827 = vmatpush1.bf16.msra.mxu0 0
        %828 = vmatprep.subr.bf16.mxu0 0
        %829 = vmatpush1.bf16.msra.mxu0 0
        %830 = vmatprep.subr.bf16.mxu0 0
        %831 = vmatpush1.bf16.msra.mxu0 0
        %832 = vmatprep.subr.bf16.mxu0 0
        %833 = vmatpush1.bf16.msra.mxu0 0
        %834 = vmatprep.subr.bf16.mxu0 0
        %835 = vmatpush1.bf16.msra.mxu0 0
        %836 = vmatprep.subr.bf16.mxu0 0
        %837 = vmatpush1.bf16.msra.mxu0 0
        %838 = vmatprep.subr.bf16.mxu0 0
        %839 = vmatpush1.bf16.msra.mxu0 0
        %840 = vmatprep.subr.bf16.mxu0 0
        %841 = vmatpush1.bf16.msra.mxu0 0
        %842 = vmatprep.mubr.bf16.mxu0 0
        %843 = vmatmul.mubr.bf16.gmra.mrb[0].mxu0 %v576
        %v844 = vpop.f32.mrb[0].mxu0
        %v845 = vadd.f32 0.0, %v844
        %v846 = vpop.f32.mrb[0].mxu0
        %v847 = vadd.f32 0.0, %v846
        %v848 = vpop.f32.mrb[0].mxu0
        %v849 = vpop.f32.mrb[0].mxu0
        %850 = vdwg.mxu0
        %v851 = vld [vmem:[#allocation8] sm:$0xff]
        %v852 = vld [vmem:[#allocation8 + $0x8] sm:$0xff]
        %v853 = vld [vmem:[#allocation8 + $0x10] sm:$0xff]
        %v854 = vld [vmem:[#allocation8 + $0x18] sm:$0xff]
        %v855 = vld [vmem:[#allocation8 + $0x20] sm:$0xff]
        %v856 = vld [vmem:[#allocation8 + $0x28] sm:$0xff]
        %v857 = vld [vmem:[#allocation8 + $0x30] sm:$0xff]
        %v858 = vld [vmem:[#allocation8 + $0x38] sm:$0xff]
        %v859 = vld [vmem:[#allocation8 + $0x40] sm:$0xff]
        %v860 = vld [vmem:[#allocation8 + $0x48] sm:$0xff]
        %v861 = vld [vmem:[#allocation8 + $0x50] sm:$0xff]
        %v862 = vld [vmem:[#allocation8 + $0x58] sm:$0xff]
        %v863 = vld [vmem:[#allocation8 + $0x60] sm:$0xff]
        %v864 = vld [vmem:[#allocation8 + $0x68] sm:$0xff]
        %v865 = vld [vmem:[#allocation8 + $0x70] sm:$0xff]
        %v866 = vld [vmem:[#allocation8 + $0x78] sm:$0xff]
        %v867 = vld [vmem:[#allocation8 + $0x80] sm:$0xff]
        %v868 = vld [vmem:[#allocation8 + $0x88] sm:$0xff]
        %v869 = vld [vmem:[#allocation8 + $0x90] sm:$0xff]
        %v870 = vld [vmem:[#allocation8 + $0x98] sm:$0xff]
        %v871 = vld [vmem:[#allocation8 + $0xa0] sm:$0xff]
        %v872 = vld [vmem:[#allocation8 + $0xa8] sm:$0xff]
        %v873 = vld [vmem:[#allocation8 + $0xb0] sm:$0xff]
        %v874 = vld [vmem:[#allocation8 + $0xb8] sm:$0xff]
        %v875 = vld [vmem:[#allocation8 + $0xc0] sm:$0xff]
        %v876 = vld [vmem:[#allocation8 + $0xc8] sm:$0xff]
        %v877 = vld [vmem:[#allocation8 + $0xd0] sm:$0xff]
        %v878 = vld [vmem:[#allocation8 + $0xd8] sm:$0xff]
        %v879 = vld [vmem:[#allocation8 + $0xe0] sm:$0xff]
        %v880 = vld [vmem:[#allocation8 + $0xe8] sm:$0xff]
        %v881 = vld [vmem:[#allocation8 + $0xf0] sm:$0xff]
        %v882 = vld [vmem:[#allocation8 + $0xf8] sm:$0xff]
        %v883 = vld [vmem:[#allocation8 + $0x100] sm:$0xff]
        %v884 = vld [vmem:[#allocation8 + $0x108] sm:$0xff]
        %v885 = vld [vmem:[#allocation8 + $0x110] sm:$0xff]
        %v886 = vld [vmem:[#allocation8 + $0x118] sm:$0xff]
        %v887 = vld [vmem:[#allocation8 + $0x120] sm:$0xff]
        %v888 = vld [vmem:[#allocation8 + $0x128] sm:$0xff]
        %v889 = vld [vmem:[#allocation8 + $0x130] sm:$0xff]
        %v890 = vld [vmem:[#allocation8 + $0x138] sm:$0xff]
        %v891 = vld [vmem:[#allocation8 + $0x140] sm:$0xff]
        %v892 = vld [vmem:[#allocation8 + $0x148] sm:$0xff]
        %v893 = vld [vmem:[#allocation8 + $0x150] sm:$0xff]
        %v894 = vld [vmem:[#allocation8 + $0x158] sm:$0xff]
        %v895 = vld [vmem:[#allocation8 + $0x160] sm:$0xff]
        %v896 = vld [vmem:[#allocation8 + $0x168] sm:$0xff]
        %v897 = vld [vmem:[#allocation8 + $0x170] sm:$0xff]
        %v898 = vld [vmem:[#allocation8 + $0x178] sm:$0xff]
        %v899 = vld [vmem:[#allocation8 + $0x180] sm:$0xff]
        %v900 = vld [vmem:[#allocation8 + $0x188] sm:$0xff]
        %v901 = vld [vmem:[#allocation8 + $0x190] sm:$0xff]
        %v902 = vld [vmem:[#allocation8 + $0x198] sm:$0xff]
        %v903 = vld [vmem:[#allocation8 + $0x1a0] sm:$0xff]
        %v904 = vld [vmem:[#allocation8 + $0x1a8] sm:$0xff]
        %v905 = vld [vmem:[#allocation8 + $0x1b0] sm:$0xff]
        %v906 = vld [vmem:[#allocation8 + $0x1b8] sm:$0xff]
        %v907 = vld [vmem:[#allocation8 + $0x1c0] sm:$0xff]
        %v908 = vld [vmem:[#allocation8 + $0x1c8] sm:$0xff]
        %v909 = vld [vmem:[#allocation8 + $0x1d0] sm:$0xff]
        %v910 = vld [vmem:[#allocation8 + $0x1d8] sm:$0xff]
        %v911 = vld [vmem:[#allocation8 + $0x1e0] sm:$0xff]
        %v912 = vld [vmem:[#allocation8 + $0x1e8] sm:$0xff]
        %v913 = vld [vmem:[#allocation8 + $0x1f0] sm:$0xff]
        %v914 = vld [vmem:[#allocation8 + $0x1f8] sm:$0xff]
        %v979 = vunpack.c.l.b16 %v851
        %v980 = vunpack.c.h.b16 %v851
        %v981 = vunpack.c.l.b16 %v852
        %v982 = vunpack.c.h.b16 %v852
        %v983 = vunpack.c.l.b16 %v853
        %v984 = vunpack.c.h.b16 %v853
        %v985 = vunpack.c.l.b16 %v854
        %v986 = vunpack.c.h.b16 %v854
        %v987 = vunpack.c.l.b16 %v855
        %v988 = vunpack.c.h.b16 %v855
        %v989 = vunpack.c.l.b16 %v856
        %v990 = vunpack.c.h.b16 %v856
        %v991 = vunpack.c.l.b16 %v857
        %v992 = vunpack.c.h.b16 %v857
        %v993 = vunpack.c.l.b16 %v858
        %v994 = vunpack.c.h.b16 %v858
        %v995 = vunpack.c.l.b16 %v859
        %v996 = vunpack.c.h.b16 %v859
        %v997 = vunpack.c.l.b16 %v860
        %v998 = vunpack.c.h.b16 %v860
        %v999 = vunpack.c.l.b16 %v861
        %v1000 = vunpack.c.h.b16 %v861
        %v1001 = vunpack.c.l.b16 %v862
        %v1002 = vunpack.c.h.b16 %v862
        %v1003 = vunpack.c.l.b16 %v863
        %v1004 = vunpack.c.h.b16 %v863
        %v1005 = vunpack.c.l.b16 %v864
        %v1006 = vunpack.c.h.b16 %v864
        %v1007 = vunpack.c.l.b16 %v865
        %v1008 = vunpack.c.h.b16 %v865
        %v1009 = vunpack.c.l.b16 %v866
        %v1010 = vunpack.c.h.b16 %v866
        %v1011 = vunpack.c.l.b16 %v867
        %v1012 = vunpack.c.h.b16 %v867
        %v1013 = vunpack.c.l.b16 %v868
        %v1014 = vunpack.c.h.b16 %v868
        %v1015 = vunpack.c.l.b16 %v869
        %v1016 = vunpack.c.h.b16 %v869
        %v1017 = vunpack.c.l.b16 %v870
        %v1018 = vunpack.c.h.b16 %v870
        %v1019 = vunpack.c.l.b16 %v871
        %v1020 = vunpack.c.h.b16 %v871
        %v1021 = vunpack.c.l.b16 %v872
        %v1022 = vunpack.c.h.b16 %v872
        %v1023 = vunpack.c.l.b16 %v873
        %v1024 = vunpack.c.h.b16 %v873
        %v1025 = vunpack.c.l.b16 %v874
        %v1026 = vunpack.c.h.b16 %v874
        %v1027 = vunpack.c.l.b16 %v875
        %v1028 = vunpack.c.h.b16 %v875
        %v1029 = vunpack.c.l.b16 %v876
        %v1030 = vunpack.c.h.b16 %v876
        %v1031 = vunpack.c.l.b16 %v877
        %v1032 = vunpack.c.h.b16 %v877
        %v1033 = vunpack.c.l.b16 %v878
        %v1034 = vunpack.c.h.b16 %v878
        %v1035 = vunpack.c.l.b16 %v879
        %v1036 = vunpack.c.h.b16 %v879
        %v1037 = vunpack.c.l.b16 %v880
        %v1038 = vunpack.c.h.b16 %v880
        %v1039 = vunpack.c.l.b16 %v881
        %v1040 = vunpack.c.h.b16 %v881
        %v1041 = vunpack.c.l.b16 %v882
        %v1042 = vunpack.c.h.b16 %v882
        %v1043 = vunpack.c.l.b16 %v883
        %v1044 = vunpack.c.h.b16 %v883
        %v1045 = vunpack.c.l.b16 %v884
        %v1046 = vunpack.c.h.b16 %v884
        %v1047 = vunpack.c.l.b16 %v885
        %v1048 = vunpack.c.h.b16 %v885
        %v1049 = vunpack.c.l.b16 %v886
        %v1050 = vunpack.c.h.b16 %v886
        %v1051 = vunpack.c.l.b16 %v887
        %v1052 = vunpack.c.h.b16 %v887
        %v1053 = vunpack.c.l.b16 %v888
        %v1054 = vunpack.c.h.b16 %v888
        %v1055 = vunpack.c.l.b16 %v889
        %v1056 = vunpack.c.h.b16 %v889
        %v1057 = vunpack.c.l.b16 %v890
        %v1058 = vunpack.c.h.b16 %v890
        %v1059 = vunpack.c.l.b16 %v891
        %v1060 = vunpack.c.h.b16 %v891
        %v1061 = vunpack.c.l.b16 %v892
        %v1062 = vunpack.c.h.b16 %v892
        %v1063 = vunpack.c.l.b16 %v893
        %v1064 = vunpack.c.h.b16 %v893
        %v1065 = vunpack.c.l.b16 %v894
        %v1066 = vunpack.c.h.b16 %v894
        %v1067 = vunpack.c.l.b16 %v895
        %v1068 = vunpack.c.h.b16 %v895
        %v1069 = vunpack.c.l.b16 %v896
        %v1070 = vunpack.c.h.b16 %v896
        %v1071 = vunpack.c.l.b16 %v897
        %v1072 = vunpack.c.h.b16 %v897
        %v1073 = vunpack.c.l.b16 %v898
        %v1074 = vunpack.c.h.b16 %v898
        %v1075 = vunpack.c.l.b16 %v899
        %v1076 = vunpack.c.h.b16 %v899
        %v1077 = vunpack.c.l.b16 %v900
        %v1078 = vunpack.c.h.b16 %v900
        %v1079 = vunpack.c.l.b16 %v901
        %v1080 = vunpack.c.h.b16 %v901
        %v1081 = vunpack.c.l.b16 %v902
        %v1082 = vunpack.c.h.b16 %v902
        %v1083 = vunpack.c.l.b16 %v903
        %v1084 = vunpack.c.h.b16 %v903
        %v1085 = vunpack.c.l.b16 %v904
        %v1086 = vunpack.c.h.b16 %v904
        %v1087 = vunpack.c.l.b16 %v905
        %v1088 = vunpack.c.h.b16 %v905
        %v1089 = vunpack.c.l.b16 %v906
        %v1090 = vunpack.c.h.b16 %v906
        %v1091 = vunpack.c.l.b16 %v907
        %v1092 = vunpack.c.h.b16 %v907
        %v1093 = vunpack.c.l.b16 %v908
        %v1094 = vunpack.c.h.b16 %v908
        %v1095 = vunpack.c.l.b16 %v909
        %v1096 = vunpack.c.h.b16 %v909
        %v1097 = vunpack.c.l.b16 %v910
        %v1098 = vunpack.c.h.b16 %v910
        %v1099 = vunpack.c.l.b16 %v911
        %v1100 = vunpack.c.h.b16 %v911
        %v1101 = vunpack.c.l.b16 %v912
        %v1102 = vunpack.c.h.b16 %v912
        %v1103 = vunpack.c.l.b16 %v913
        %v1104 = vunpack.c.h.b16 %v913
        %v1105 = vunpack.c.l.b16 %v914
        %v1106 = vunpack.c.h.b16 %v914
        %v1107 = vpack.c.b16 %v987, %v979
        %v1108 = vpack.c.b16 %v988, %v980
        %v1109 = vpack.c.b16 %v989, %v981
        %v1110 = vpack.c.b16 %v990, %v982
        %v1111 = vpack.c.b16 %v991, %v983
        %v1112 = vpack.c.b16 %v992, %v984
        %v1113 = vpack.c.b16 %v993, %v985
        %v1114 = vpack.c.b16 %v994, %v986
        %v1115 = vpack.c.b16 %v1003, %v995
        %v1116 = vpack.c.b16 %v1004, %v996
        %v1117 = vpack.c.b16 %v1005, %v997
        %v1118 = vpack.c.b16 %v1006, %v998
        %v1119 = vpack.c.b16 %v1007, %v999
        %v1120 = vpack.c.b16 %v1008, %v1000
        %v1121 = vpack.c.b16 %v1009, %v1001
        %v1122 = vpack.c.b16 %v1010, %v1002
        %v1123 = vpack.c.b16 %v1019, %v1011
        %v1124 = vpack.c.b16 %v1020, %v1012
        %v1125 = vpack.c.b16 %v1021, %v1013
        %v1126 = vpack.c.b16 %v1022, %v1014
        %v1127 = vpack.c.b16 %v1023, %v1015
        %v1128 = vpack.c.b16 %v1024, %v1016
        %v1129 = vpack.c.b16 %v1025, %v1017
        %v1130 = vpack.c.b16 %v1026, %v1018
        %v1131 = vpack.c.b16 %v1035, %v1027
        %v1132 = vpack.c.b16 %v1036, %v1028
        %v1133 = vpack.c.b16 %v1037, %v1029
        %v1134 = vpack.c.b16 %v1038, %v1030
        %v1135 = vpack.c.b16 %v1039, %v1031
        %v1136 = vpack.c.b16 %v1040, %v1032
        %v1137 = vpack.c.b16 %v1041, %v1033
        %v1138 = vpack.c.b16 %v1042, %v1034
        %v1139 = vpack.c.b16 %v1051, %v1043
        %v1140 = vpack.c.b16 %v1052, %v1044
        %v1141 = vpack.c.b16 %v1053, %v1045
        %v1142 = vpack.c.b16 %v1054, %v1046
        %v1143 = vpack.c.b16 %v1055, %v1047
        %v1144 = vpack.c.b16 %v1056, %v1048
        %v1145 = vpack.c.b16 %v1057, %v1049
        %v1146 = vpack.c.b16 %v1058, %v1050
        %v1147 = vpack.c.b16 %v1067, %v1059
        %v1148 = vpack.c.b16 %v1068, %v1060
        %v1149 = vpack.c.b16 %v1069, %v1061
        %v1150 = vpack.c.b16 %v1070, %v1062
        %v1151 = vpack.c.b16 %v1071, %v1063
        %v1152 = vpack.c.b16 %v1072, %v1064
        %v1153 = vpack.c.b16 %v1073, %v1065
        %v1154 = vpack.c.b16 %v1074, %v1066
        %v1155 = vpack.c.b16 %v1083, %v1075
        %v1156 = vpack.c.b16 %v1084, %v1076
        %v1157 = vpack.c.b16 %v1085, %v1077
        %v1158 = vpack.c.b16 %v1086, %v1078
        %v1159 = vpack.c.b16 %v1087, %v1079
        %v1160 = vpack.c.b16 %v1088, %v1080
        %v1161 = vpack.c.b16 %v1089, %v1081
        %v1162 = vpack.c.b16 %v1090, %v1082
        %v1163 = vpack.c.b16 %v1099, %v1091
        %v1164 = vpack.c.b16 %v1100, %v1092
        %v1165 = vpack.c.b16 %v1101, %v1093
        %v1166 = vpack.c.b16 %v1102, %v1094
        %v1167 = vpack.c.b16 %v1103, %v1095
        %v1168 = vpack.c.b16 %v1104, %v1096
        %v1169 = vpack.c.b16 %v1105, %v1097
        %v1170 = vpack.c.b16 %v1106, %v1098
        %1235 = vmatprep.subr.bf16.mxu0 %v1108
        %1236 = vmatpush1.bf16.msra.mxu0 %v1107
        %1237 = vmatprep.subr.bf16.mxu0 %v1116
        %1238 = vmatpush1.bf16.msra.mxu0 %v1115
        %1239 = vmatprep.subr.bf16.mxu0 %v1124
        %1240 = vmatpush1.bf16.msra.mxu0 %v1123
        %1241 = vmatprep.subr.bf16.mxu0 %v1132
        %1242 = vmatpush1.bf16.msra.mxu0 %v1131
        %1243 = vmatprep.subr.bf16.mxu0 %v1140
        %1244 = vmatpush1.bf16.msra.mxu0 %v1139
        %1245 = vmatprep.subr.bf16.mxu0 %v1148
        %1246 = vmatpush1.bf16.msra.mxu0 %v1147
        %1247 = vmatprep.subr.bf16.mxu0 %v1156
        %1248 = vmatpush1.bf16.msra.mxu0 %v1155
        %1249 = vmatprep.subr.bf16.mxu0 %v1164
        %1250 = vmatpush1.bf16.msra.mxu0 %v1163
        %1251 = vmatprep.subr.bf16.mxu0 0
        %1252 = vmatpush1.bf16.msra.mxu0 0
        %1253 = vmatprep.subr.bf16.mxu0 0
        %1254 = vmatpush1.bf16.msra.mxu0 0
        %1255 = vmatprep.subr.bf16.mxu0 0
        %1256 = vmatpush1.bf16.msra.mxu0 0
        %1257 = vmatprep.subr.bf16.mxu0 0
        %1258 = vmatpush1.bf16.msra.mxu0 0
        %1259 = vmatprep.subr.bf16.mxu0 0
        %1260 = vmatpush1.bf16.msra.mxu0 0
        %1261 = vmatprep.subr.bf16.mxu0 0
        %1262 = vmatpush1.bf16.msra.mxu0 0
        %1263 = vmatprep.subr.bf16.mxu0 0
        %1264 = vmatpush1.bf16.msra.mxu0 0
        %1265 = vmatprep.subr.bf16.mxu0 0
        %1266 = vmatpush1.bf16.msra.mxu0 0
        %1267 = vmatprep.mubr.bf16.mxu0 0
        %1268 = vmatmul.mubr.bf16.gmra.mrb[0].mxu0 %v575
        %v1269 = vpop.f32.mrb[0].mxu0
        %v1270 = vadd.f32 0.0, %v1269
        %v1271 = vpop.f32.mrb[0].mxu0
        %v1272 = vadd.f32 0.0, %v1271
        %v1273 = vpop.f32.mrb[0].mxu0
        %v1274 = vadd.f32 0.0, %v1273
        %v1275 = vpop.f32.mrb[0].mxu0
        %v1276 = vadd.f32 0.0, %v1275
        %1277 = vdwg.mxu0
        %1278 = vmatprep.subr.bf16.mxu0 %v1110
        %1279 = vmatpush1.bf16.msra.mxu0 %v1109
        %1280 = vmatprep.subr.bf16.mxu0 %v1118
        %1281 = vmatpush1.bf16.msra.mxu0 %v1117
        %1282 = vmatprep.subr.bf16.mxu0 %v1126
        %1283 = vmatpush1.bf16.msra.mxu0 %v1125
        %1284 = vmatprep.subr.bf16.mxu0 %v1134
        %1285 = vmatpush1.bf16.msra.mxu0 %v1133
        %1286 = vmatprep.subr.bf16.mxu0 %v1142
        %1287 = vmatpush1.bf16.msra.mxu0 %v1141
        %1288 = vmatprep.subr.bf16.mxu0 %v1150
        %1289 = vmatpush1.bf16.msra.mxu0 %v1149
        %1290 = vmatprep.subr.bf16.mxu0 %v1158
        %1291 = vmatpush1.bf16.msra.mxu0 %v1157
        %1292 = vmatprep.subr.bf16.mxu0 %v1166
        %1293 = vmatpush1.bf16.msra.mxu0 %v1165
        %1294 = vmatprep.subr.bf16.mxu0 0
        %1295 = vmatpush1.bf16.msra.mxu0 0
        %1296 = vmatprep.subr.bf16.mxu0 0
        %1297 = vmatpush1.bf16.msra.mxu0 0
        %1298 = vmatprep.subr.bf16.mxu0 0
        %1299 = vmatpush1.bf16.msra.mxu0 0
        %1300 = vmatprep.subr.bf16.mxu0 0
        %1301 = vmatpush1.bf16.msra.mxu0 0
        %1302 = vmatprep.subr.bf16.mxu0 0
        %1303 = vmatpush1.bf16.msra.mxu0 0
        %1304 = vmatprep.subr.bf16.mxu0 0
        %1305 = vmatpush1.bf16.msra.mxu0 0
        %1306 = vmatprep.subr.bf16.mxu0 0
        %1307 = vmatpush1.bf16.msra.mxu0 0
        %1308 = vmatprep.subr.bf16.mxu0 0
        %1309 = vmatpush1.bf16.msra.mxu0 0
        %1310 = vmatprep.mubr.bf16.mxu0 0
        %1311 = vmatmul.mubr.bf16.gmra.mrb[0].mxu0 %v575
        %v1312 = vpop.f32.mrb[0].mxu0
        %v1313 = vadd.f32 0.0, %v1312
        %v1314 = vpop.f32.mrb[0].mxu0
        %v1315 = vadd.f32 0.0, %v1314
        %v1316 = vpop.f32.mrb[0].mxu0
        %v1317 = vadd.f32 0.0, %v1316
        %v1318 = vpop.f32.mrb[0].mxu0
        %v1319 = vadd.f32 0.0, %v1318
        %1320 = vdwg.mxu0
        %1321 = vmatprep.subr.bf16.mxu0 %v1112
        %1322 = vmatpush1.bf16.msra.mxu0 %v1111
        %1323 = vmatprep.subr.bf16.mxu0 %v1120
        %1324 = vmatpush1.bf16.msra.mxu0 %v1119
        %1325 = vmatprep.subr.bf16.mxu0 %v1128
        %1326 = vmatpush1.bf16.msra.mxu0 %v1127
        %1327 = vmatprep.subr.bf16.mxu0 %v1136
        %1328 = vmatpush1.bf16.msra.mxu0 %v1135
        %1329 = vmatprep.subr.bf16.mxu0 %v1144
        %1330 = vmatpush1.bf16.msra.mxu0 %v1143
        %1331 = vmatprep.subr.bf16.mxu0 %v1152
        %1332 = vmatpush1.bf16.msra.mxu0 %v1151
        %1333 = vmatprep.subr.bf16.mxu0 %v1160
        %1334 = vmatpush1.bf16.msra.mxu0 %v1159
        %1335 = vmatprep.subr.bf16.mxu0 %v1168
        %1336 = vmatpush1.bf16.msra.mxu0 %v1167
        %1337 = vmatprep.subr.bf16.mxu0 0
        %1338 = vmatpush1.bf16.msra.mxu0 0
        %1339 = vmatprep.subr.bf16.mxu0 0
        %1340 = vmatpush1.bf16.msra.mxu0 0
        %1341 = vmatprep.subr.bf16.mxu0 0
        %1342 = vmatpush1.bf16.msra.mxu0 0
        %1343 = vmatprep.subr.bf16.mxu0 0
        %1344 = vmatpush1.bf16.msra.mxu0 0
        %1345 = vmatprep.subr.bf16.mxu0 0
        %1346 = vmatpush1.bf16.msra.mxu0 0
        %1347 = vmatprep.subr.bf16.mxu0 0
        %1348 = vmatpush1.bf16.msra.mxu0 0
        %1349 = vmatprep.subr.bf16.mxu0 0
        %1350 = vmatpush1.bf16.msra.mxu0 0
        %1351 = vmatprep.subr.bf16.mxu0 0
        %1352 = vmatpush1.bf16.msra.mxu0 0
        %1353 = vmatprep.mubr.bf16.mxu0 0
        %1354 = vmatmul.mubr.bf16.gmra.mrb[0].mxu0 %v575
        %v1355 = vpop.f32.mrb[0].mxu0
        %v1356 = vadd.f32 0.0, %v1355
        %v1357 = vpop.f32.mrb[0].mxu0
        %v1358 = vadd.f32 0.0, %v1357
        %v1359 = vpop.f32.mrb[0].mxu0
        %v1360 = vadd.f32 0.0, %v1359
        %v1361 = vpop.f32.mrb[0].mxu0
        %v1362 = vadd.f32 0.0, %v1361
        %1363 = vdwg.mxu0
        %1364 = vmatprep.subr.bf16.mxu0 %v1114
        %1365 = vmatpush1.bf16.msra.mxu0 %v1113
        %1366 = vmatprep.subr.bf16.mxu0 %v1122
        %1367 = vmatpush1.bf16.msra.mxu0 %v1121
        %1368 = vmatprep.subr.bf16.mxu0 %v1130
        %1369 = vmatpush1.bf16.msra.mxu0 %v1129
        %1370 = vmatprep.subr.bf16.mxu0 %v1138
        %1371 = vmatpush1.bf16.msra.mxu0 %v1137
        %1372 = vmatprep.subr.bf16.mxu0 %v1146
        %1373 = vmatpush1.bf16.msra.mxu0 %v1145
        %1374 = vmatprep.subr.bf16.mxu0 %v1154
        %1375 = vmatpush1.bf16.msra.mxu0 %v1153
        %1376 = vmatprep.subr.bf16.mxu0 %v1162
        %1377 = vmatpush1.bf16.msra.mxu0 %v1161
        %1378 = vmatprep.subr.bf16.mxu0 %v1170
        %1379 = vmatpush1.bf16.msra.mxu0 %v1169
        %1380 = vmatprep.subr.bf16.mxu0 0
        %1381 = vmatpush1.bf16.msra.mxu0 0
        %1382 = vmatprep.subr.bf16.mxu0 0
        %1383 = vmatpush1.bf16.msra.mxu0 0
        %1384 = vmatprep.subr.bf16.mxu0 0
        %1385 = vmatpush1.bf16.msra.mxu0 0
        %1386 = vmatprep.subr.bf16.mxu0 0
        %1387 = vmatpush1.bf16.msra.mxu0 0
        %1388 = vmatprep.subr.bf16.mxu0 0
        %1389 = vmatpush1.bf16.msra.mxu0 0
        %1390 = vmatprep.subr.bf16.mxu0 0
        %1391 = vmatpush1.bf16.msra.mxu0 0
        %1392 = vmatprep.subr.bf16.mxu0 0
        %1393 = vmatpush1.bf16.msra.mxu0 0
        %1394 = vmatprep.subr.bf16.mxu0 0
        %1395 = vmatpush1.bf16.msra.mxu0 0
        %1396 = vmatprep.mubr.bf16.mxu0 0
        %1397 = vmatmul.mubr.bf16.gmra.mrb[0].mxu0 %v575
        %v1398 = vpop.f32.mrb[0].mxu0
        %v1399 = vadd.f32 0.0, %v1398
        %v1400 = vpop.f32.mrb[0].mxu0
        %v1401 = vadd.f32 0.0, %v1400
        %v1402 = vpop.f32.mrb[0].mxu0
        %v1403 = vadd.f32 0.0, %v1402
        %v1404 = vpop.f32.mrb[0].mxu0
        %v1405 = vadd.f32 0.0, %v1404
        %1406 = vdwg.mxu0
        %1407 = vmatprep.subr.bf16.mxu0 %v1108
        %1408 = vmatpush1.bf16.msra.mxu0 %v1107
        %1409 = vmatprep.subr.bf16.mxu0 %v1116
        %1410 = vmatpush1.bf16.msra.mxu0 %v1115
        %1411 = vmatprep.subr.bf16.mxu0 %v1124
        %1412 = vmatpush1.bf16.msra.mxu0 %v1123
        %1413 = vmatprep.subr.bf16.mxu0 %v1132
        %1414 = vmatpush1.bf16.msra.mxu0 %v1131
        %1415 = vmatprep.subr.bf16.mxu0 %v1140
        %1416 = vmatpush1.bf16.msra.mxu0 %v1139
        %1417 = vmatprep.subr.bf16.mxu0 %v1148
        %1418 = vmatpush1.bf16.msra.mxu0 %v1147
        %1419 = vmatprep.subr.bf16.mxu0 %v1156
        %1420 = vmatpush1.bf16.msra.mxu0 %v1155
        %1421 = vmatprep.subr.bf16.mxu0 %v1164
        %1422 = vmatpush1.bf16.msra.mxu0 %v1163
        %1423 = vmatprep.subr.bf16.mxu0 0
        %1424 = vmatpush1.bf16.msra.mxu0 0
        %1425 = vmatprep.subr.bf16.mxu0 0
        %1426 = vmatpush1.bf16.msra.mxu0 0
        %1427 = vmatprep.subr.bf16.mxu0 0
        %1428 = vmatpush1.bf16.msra.mxu0 0
        %1429 = vmatprep.subr.bf16.mxu0 0
        %1430 = vmatpush1.bf16.msra.mxu0 0
        %1431 = vmatprep.subr.bf16.mxu0 0
        %1432 = vmatpush1.bf16.msra.mxu0 0
        %1433 = vmatprep.subr.bf16.mxu0 0
        %1434 = vmatpush1.bf16.msra.mxu0 0
        %1435 = vmatprep.subr.bf16.mxu0 0
        %1436 = vmatpush1.bf16.msra.mxu0 0
        %1437 = vmatprep.subr.bf16.mxu0 0
        %1438 = vmatpush1.bf16.msra.mxu0 0
        %1439 = vmatprep.mubr.bf16.mxu0 0
        %1440 = vmatmul.mubr.bf16.gmra.mrb[0].mxu0 %v576
        %v1441 = vpop.f32.mrb[0].mxu0
        %v1442 = vadd.f32 0.0, %v1441
        %v1443 = vpop.f32.mrb[0].mxu0
        %v1444 = vadd.f32 0.0, %v1443
        %v1445 = vpop.f32.mrb[0].mxu0
        %v1446 = vpop.f32.mrb[0].mxu0
        %1447 = vdwg.mxu0
        %1448 = vmatprep.subr.bf16.mxu0 %v1110
        %1449 = vmatpush1.bf16.msra.mxu0 %v1109
        %1450 = vmatprep.subr.bf16.mxu0 %v1118
        %1451 = vmatpush1.bf16.msra.mxu0 %v1117
        %1452 = vmatprep.subr.bf16.mxu0 %v1126
        %1453 = vmatpush1.bf16.msra.mxu0 %v1125
        %1454 = vmatprep.subr.bf16.mxu0 %v1134
        %1455 = vmatpush1.bf16.msra.mxu0 %v1133
        %1456 = vmatprep.subr.bf16.mxu0 %v1142
        %1457 = vmatpush1.bf16.msra.mxu0 %v1141
        %1458 = vmatprep.subr.bf16.mxu0 %v1150
        %1459 = vmatpush1.bf16.msra.mxu0 %v1149
        %1460 = vmatprep.subr.bf16.mxu0 %v1158
        %1461 = vmatpush1.bf16.msra.mxu0 %v1157
        %1462 = vmatprep.subr.bf16.mxu0 %v1166
        %1463 = vmatpush1.bf16.msra.mxu0 %v1165
        %1464 = vmatprep.subr.bf16.mxu0 0
        %1465 = vmatpush1.bf16.msra.mxu0 0
        %1466 = vmatprep.subr.bf16.mxu0 0
        %1467 = vmatpush1.bf16.msra.mxu0 0
        %1468 = vmatprep.subr.bf16.mxu0 0
        %1469 = vmatpush1.bf16.msra.mxu0 0
        %1470 = vmatprep.subr.bf16.mxu0 0
        %1471 = vmatpush1.bf16.msra.mxu0 0
        %1472 = vmatprep.subr.bf16.mxu0 0
        %1473 = vmatpush1.bf16.msra.mxu0 0
        %1474 = vmatprep.subr.bf16.mxu0 0
        %1475 = vmatpush1.bf16.msra.mxu0 0
        %1476 = vmatprep.subr.bf16.mxu0 0
        %1477 = vmatpush1.bf16.msra.mxu0 0
        %1478 = vmatprep.subr.bf16.mxu0 0
        %1479 = vmatpush1.bf16.msra.mxu0 0
        %1480 = vmatprep.mubr.bf16.mxu0 0
        %1481 = vmatmul.mubr.bf16.gmra.mrb[0].mxu0 %v576
        %v1482 = vpop.f32.mrb[0].mxu0
        %v1483 = vadd.f32 0.0, %v1482
        %v1484 = vpop.f32.mrb[0].mxu0
        %v1485 = vadd.f32 0.0, %v1484
        %v1486 = vpop.f32.mrb[0].mxu0
        %v1487 = vpop.f32.mrb[0].mxu0
        %1488 = vdwg.mxu0
        %1489 = vmatprep.subr.bf16.mxu0 %v1112
        %1490 = vmatpush1.bf16.msra.mxu0 %v1111
        %1491 = vmatprep.subr.bf16.mxu0 %v1120
        %1492 = vmatpush1.bf16.msra.mxu0 %v1119
        %1493 = vmatprep.subr.bf16.mxu0 %v1128
        %1494 = vmatpush1.bf16.msra.mxu0 %v1127
        %1495 = vmatprep.subr.bf16.mxu0 %v1136
        %1496 = vmatpush1.bf16.msra.mxu0 %v1135
        %1497 = vmatprep.subr.bf16.mxu0 %v1144
        %1498 = vmatpush1.bf16.msra.mxu0 %v1143
        %1499 = vmatprep.subr.bf16.mxu0 %v1152
        %1500 = vmatpush1.bf16.msra.mxu0 %v1151
        %1501 = vmatprep.subr.bf16.mxu0 %v1160
        %1502 = vmatpush1.bf16.msra.mxu0 %v1159
        %1503 = vmatprep.subr.bf16.mxu0 %v1168
        %1504 = vmatpush1.bf16.msra.mxu0 %v1167
        %1505 = vmatprep.subr.bf16.mxu0 0
        %1506 = vmatpush1.bf16.msra.mxu0 0
        %1507 = vmatprep.subr.bf16.mxu0 0
        %1508 = vmatpush1.bf16.msra.mxu0 0
        %1509 = vmatprep.subr.bf16.mxu0 0
        %1510 = vmatpush1.bf16.msra.mxu0 0
        %1511 = vmatprep.subr.bf16.mxu0 0
        %1512 = vmatpush1.bf16.msra.mxu0 0
        %1513 = vmatprep.subr.bf16.mxu0 0
        %1514 = vmatpush1.bf16.msra.mxu0 0
        %1515 = vmatprep.subr.bf16.mxu0 0
        %1516 = vmatpush1.bf16.msra.mxu0 0
        %1517 = vmatprep.subr.bf16.mxu0 0
        %1518 = vmatpush1.bf16.msra.mxu0 0
        %1519 = vmatprep.subr.bf16.mxu0 0
        %1520 = vmatpush1.bf16.msra.mxu0 0
        %1521 = vmatprep.mubr.bf16.mxu0 0
        %1522 = vmatmul.mubr.bf16.gmra.mrb[0].mxu0 %v576
        %v1523 = vpop.f32.mrb[0].mxu0
        %v1524 = vadd.f32 0.0, %v1523
        %v1525 = vpop.f32.mrb[0].mxu0
        %v1526 = vadd.f32 0.0, %v1525
        %v1527 = vpop.f32.mrb[0].mxu0
        %v1528 = vpop.f32.mrb[0].mxu0
        %1529 = vdwg.mxu0
        %1530 = vmatprep.subr.bf16.mxu0 %v1114
        %1531 = vmatpush1.bf16.msra.mxu0 %v1113
        %1532 = vmatprep.subr.bf16.mxu0 %v1122
        %1533 = vmatpush1.bf16.msra.mxu0 %v1121
        %1534 = vmatprep.subr.bf16.mxu0 %v1130
        %1535 = vmatpush1.bf16.msra.mxu0 %v1129
        %1536 = vmatprep.subr.bf16.mxu0 %v1138
        %1537 = vmatpush1.bf16.msra.mxu0 %v1137
        %1538 = vmatprep.subr.bf16.mxu0 %v1146
        %1539 = vmatpush1.bf16.msra.mxu0 %v1145
        %1540 = vmatprep.subr.bf16.mxu0 %v1154
        %1541 = vmatpush1.bf16.msra.mxu0 %v1153
        %1542 = vmatprep.subr.bf16.mxu0 %v1162
        %1543 = vmatpush1.bf16.msra.mxu0 %v1161
        %1544 = vmatprep.subr.bf16.mxu0 %v1170
        %1545 = vmatpush1.bf16.msra.mxu0 %v1169
        %1546 = vmatprep.subr.bf16.mxu0 0
        %1547 = vmatpush1.bf16.msra.mxu0 0
        %1548 = vmatprep.subr.bf16.mxu0 0
        %1549 = vmatpush1.bf16.msra.mxu0 0
        %1550 = vmatprep.subr.bf16.mxu0 0
        %1551 = vmatpush1.bf16.msra.mxu0 0
        %1552 = vmatprep.subr.bf16.mxu0 0
        %1553 = vmatpush1.bf16.msra.mxu0 0
        %1554 = vmatprep.subr.bf16.mxu0 0
        %1555 = vmatpush1.bf16.msra.mxu0 0
        %1556 = vmatprep.subr.bf16.mxu0 0
        %1557 = vmatpush1.bf16.msra.mxu0 0
        %1558 = vmatprep.subr.bf16.mxu0 0
        %1559 = vmatpush1.bf16.msra.mxu0 0
        %1560 = vmatprep.subr.bf16.mxu0 0
        %1561 = vmatpush1.bf16.msra.mxu0 0
        %1562 = vmatprep.mubr.bf16.mxu0 0
        %1563 = vmatmul.mubr.bf16.gmra.mrb[0].mxu0 %v576
        %v1564 = vpop.f32.mrb[0].mxu0
        %v1565 = vadd.f32 0.0, %v1564
        %v1566 = vpop.f32.mrb[0].mxu0
        %v1567 = vadd.f32 0.0, %v1566
        %v1568 = vpop.f32.mrb[0].mxu0
        %v1569 = vpop.f32.mrb[0].mxu0
        %1570 = vdwg.mxu0
        %v1571 = vpack.c.bf16 %v804, %v804
        %v1573 = vunpack.c.l.s4 1983009808
        %v1574 = vunpack.c.0.s8 %v1573
        %v1575 = vlaneseq
        %v1576 = vshrl.u32 %v1575, 7
        %v1577 = vsub.s32 %v1574, %v1576
        %v1578 = vrot.slane %v1571, %v1577
        %v1579 = vpack.c.bf16 %v845, %v845
        %v1581 = vunpack.c.l.s4 1983009808
        %v1582 = vunpack.c.0.s8 %v1581
        %v1583 = vlaneseq
        %v1584 = vshrl.u32 %v1583, 7
        %v1585 = vsub.s32 %v1582, %v1584
        %v1586 = vrot.slane %v1579, %v1585
        %v1587 = vcombine.low %v1578, %v1586
        %v1588 = vcombine.high %v1578, %v1586
        %v1590 = vunpack.c.l.s4 1934713408
        %v1591 = vunpack.c.0.s8 %v1590
        %v1592 = vlaneseq
        %v1593 = vshrl.u32 %v1592, 7
        %v1594 = vsub.s32 %v1591, %v1593
        %v1595 = vrot.slane %v1587, %v1594
        %v1597 = vunpack.c.l.s4 1934713408
        %v1598 = vunpack.c.0.s8 %v1597
        %v1599 = vlaneseq
        %v1600 = vshrl.u32 %v1599, 7
        %v1601 = vsub.s32 %v1598, %v1600
        %v1602 = vrot.slane %v1588, %v1601
        %v1603 = vcombine.high %v1595, 0
        %v1604 = vcombine.high %v1602, 0
        %v1605 = vpack.c.bf16 %v806, %v806
        %v1607 = vunpack.c.l.s4 1983009808
        %v1608 = vunpack.c.0.s8 %v1607
        %v1609 = vlaneseq
        %v1610 = vshrl.u32 %v1609, 7
        %v1611 = vsub.s32 %v1608, %v1610
        %v1612 = vrot.slane %v1605, %v1611
        %v1613 = vpack.c.bf16 %v847, %v847
        %v1615 = vunpack.c.l.s4 1983009808
        %v1616 = vunpack.c.0.s8 %v1615
        %v1617 = vlaneseq
        %v1618 = vshrl.u32 %v1617, 7
        %v1619 = vsub.s32 %v1616, %v1618
        %v1620 = vrot.slane %v1613, %v1619
        %v1621 = vcombine.low %v1612, %v1620
        %v1622 = vcombine.high %v1612, %v1620
        %v1624 = vunpack.c.l.s4 1934713408
        %v1625 = vunpack.c.0.s8 %v1624
        %v1626 = vlaneseq
        %v1627 = vshrl.u32 %v1626, 7
        %v1628 = vsub.s32 %v1625, %v1627
        %v1629 = vrot.slane %v1621, %v1628
        %v1631 = vunpack.c.l.s4 1934713408
        %v1632 = vunpack.c.0.s8 %v1631
        %v1633 = vlaneseq
        %v1634 = vshrl.u32 %v1633, 7
        %v1635 = vsub.s32 %v1632, %v1634
        %v1636 = vrot.slane %v1622, %v1635
        %v1637 = vcombine.high %v1629, 0
        %v1638 = vcombine.high %v1636, 0
        %v1641 = vpack.i.b16 %v1629, %v1595
        %v1643 = vshrl.u32 %v1595, 16
        %v1644 = vshrl.u32 %v1629, 16
        %v1645 = vpack.i.b16 %v1644, %v1643
        %v1649 = vpack.i.b16 %v1637, %v1603
        %v1651 = vshrl.u32 %v1603, 16
        %v1652 = vshrl.u32 %v1637, 16
        %v1653 = vpack.i.b16 %v1652, %v1651
        %v1657 = vpack.i.b16 %v1636, %v1602
        %v1659 = vshrl.u32 %v1602, 16
        %v1660 = vshrl.u32 %v1636, 16
        %v1661 = vpack.i.b16 %v1660, %v1659
        %v1665 = vpack.i.b16 %v1638, %v1604
        %v1667 = vshrl.u32 %v1604, 16
        %v1668 = vshrl.u32 %v1638, 16
        %v1669 = vpack.i.b16 %v1668, %v1667
        %v1671 = vcombine.low %v1641, %v1657
        %v1673 = vunpack.c.l.s4 1983009808
        %v1674 = vunpack.c.0.s8 %v1673
        %v1675 = vlaneseq
        %v1676 = vshrl.u32 %v1675, 7
        %v1677 = vsub.s32 %v1674, %v1676
        %v1678 = vrot.slane %v1671, %v1677
        %v1679 = vcombine.low %v1649, %v1665
        %v1681 = vunpack.c.l.s4 1983009808
        %v1682 = vunpack.c.0.s8 %v1681
        %v1683 = vlaneseq
        %v1684 = vshrl.u32 %v1683, 7
        %v1685 = vsub.s32 %v1682, %v1684
        %v1686 = vrot.slane %v1679, %v1685
        %v1687 = vcombine.low %v1678, %v1686
        %v1689 = vunpack.c.l.s4 1934713408
        %v1690 = vunpack.c.0.s8 %v1689
        %v1691 = vlaneseq
        %v1692 = vshrl.u32 %v1691, 7
        %v1693 = vsub.s32 %v1690, %v1692
        %v1694 = vrot.slane %v1687, %v1693
        %v1695 = vcombine.high %v1694, 0
        %v1696 = vcombine.low %v1645, %v1661
        %v1698 = vunpack.c.l.s4 1983009808
        %v1699 = vunpack.c.0.s8 %v1698
        %v1700 = vlaneseq
        %v1701 = vshrl.u32 %v1700, 7
        %v1702 = vsub.s32 %v1699, %v1701
        %v1703 = vrot.slane %v1696, %v1702
        %v1704 = vcombine.low %v1653, %v1669
        %v1706 = vunpack.c.l.s4 1983009808
        %v1707 = vunpack.c.0.s8 %v1706
        %v1708 = vlaneseq
        %v1709 = vshrl.u32 %v1708, 7
        %v1710 = vsub.s32 %v1707, %v1709
        %v1711 = vrot.slane %v1704, %v1710
        %v1712 = vcombine.low %v1703, %v1711
        %v1714 = vunpack.c.l.s4 1934713408
        %v1715 = vunpack.c.0.s8 %v1714
        %v1716 = vlaneseq
        %v1717 = vshrl.u32 %v1716, 7
        %v1718 = vsub.s32 %v1715, %v1717
        %v1719 = vrot.slane %v1712, %v1718
        %v1720 = vcombine.high %v1719, 0
        %v1723 = vpack.i.b16 %v1719, %v1694
        %v1725 = vshrl.u32 %v1694, 16
        %v1726 = vshrl.u32 %v1719, 16
        %v1727 = vpack.i.b16 %v1726, %v1725
        %v1731 = vpack.i.b16 %v1720, %v1695
        %v1733 = vshrl.u32 %v1695, 16
        %v1734 = vshrl.u32 %v1720, 16
        %v1735 = vpack.i.b16 %v1734, %v1733
        %v1737 = vpack.c.bf16 %v1274, %v1270
        %v1738 = vpack.c.bf16 %v1276, %v1272
        %v1739 = vpack.c.bf16 %v1317, %v1313
        %v1740 = vpack.c.bf16 %v1319, %v1315
        %v1743 = vpack.i.b16 %v1738, %v1737
        %v1745 = vshrl.u32 %v1737, 16
        %v1746 = vshrl.u32 %v1738, 16
        %v1747 = vpack.i.b16 %v1746, %v1745
        %v1751 = vpack.i.b16 %v1740, %v1739
        %v1753 = vshrl.u32 %v1739, 16
        %v1754 = vshrl.u32 %v1740, 16
        %v1755 = vpack.i.b16 %v1754, %v1753
        %v1758 = vpack.i.b16 0, 0
        %v1760 = vshrl.u32 0, 16
        %v1761 = vpack.i.b16 %v1760, %v1760
        %v1763 = vcombine.high %v1743, %v1758
        %v1765 = vunpack.c.l.s4 1983009808
        %v1766 = vunpack.c.0.s8 %v1765
        %v1767 = vlaneseq
        %v1768 = vshrl.u32 %v1767, 7
        %v1769 = vsub.s32 %v1766, %v1768
        %v1770 = vrot.slane %v1743, %v1769
        %v1772 = vunpack.c.l.s4 1983009808
        %v1773 = vunpack.c.0.s8 %v1772
        %v1774 = vlaneseq
        %v1775 = vshrl.u32 %v1774, 7
        %v1776 = vsub.s32 %v1773, %v1775
        %v1777 = vrot.slane %v1763, %v1776
        %v1778 = vcombine.high %v1751, %v1758
        %v1780 = vunpack.c.l.s4 1983009808
        %v1781 = vunpack.c.0.s8 %v1780
        %v1782 = vlaneseq
        %v1783 = vshrl.u32 %v1782, 7
        %v1784 = vsub.s32 %v1781, %v1783
        %v1785 = vrot.slane %v1751, %v1784
        %v1787 = vunpack.c.l.s4 1983009808
        %v1788 = vunpack.c.0.s8 %v1787
        %v1789 = vlaneseq
        %v1790 = vshrl.u32 %v1789, 7
        %v1791 = vsub.s32 %v1788, %v1790
        %v1792 = vrot.slane %v1778, %v1791
        %v1793 = vcombine.low %v1770, %v1785
        %v1794 = vcombine.high %v1770, %v1785
        %v1796 = vunpack.c.l.s4 1934713408
        %v1797 = vunpack.c.0.s8 %v1796
        %v1798 = vlaneseq
        %v1799 = vshrl.u32 %v1798, 7
        %v1800 = vsub.s32 %v1797, %v1799
        %v1801 = vrot.slane %v1793, %v1800
        %v1803 = vunpack.c.l.s4 1934713408
        %v1804 = vunpack.c.0.s8 %v1803
        %v1805 = vlaneseq
        %v1806 = vshrl.u32 %v1805, 7
        %v1807 = vsub.s32 %v1804, %v1806
        %v1808 = vrot.slane %v1794, %v1807
        %v1809 = vcombine.low %v1777, %v1792
        %v1810 = vcombine.high %v1777, %v1792
        %v1812 = vunpack.c.l.s4 1934713408
        %v1813 = vunpack.c.0.s8 %v1812
        %v1814 = vlaneseq
        %v1815 = vshrl.u32 %v1814, 7
        %v1816 = vsub.s32 %v1813, %v1815
        %v1817 = vrot.slane %v1809, %v1816
        %v1819 = vunpack.c.l.s4 1934713408
        %v1820 = vunpack.c.0.s8 %v1819
        %v1821 = vlaneseq
        %v1822 = vshrl.u32 %v1821, 7
        %v1823 = vsub.s32 %v1820, %v1822
        %v1824 = vrot.slane %v1810, %v1823
        %v1825 = vcombine.high %v1801, 0
        %v1826 = vcombine.high %v1808, 0
        %v1827 = vcombine.high %v1817, 0
        %v1828 = vcombine.high %v1824, 0
        %v1829 = vcombine.high %v1747, %v1761
        %v1831 = vunpack.c.l.s4 1983009808
        %v1832 = vunpack.c.0.s8 %v1831
        %v1833 = vlaneseq
        %v1834 = vshrl.u32 %v1833, 7
        %v1835 = vsub.s32 %v1832, %v1834
        %v1836 = vrot.slane %v1747, %v1835
        %v1838 = vunpack.c.l.s4 1983009808
        %v1839 = vunpack.c.0.s8 %v1838
        %v1840 = vlaneseq
        %v1841 = vshrl.u32 %v1840, 7
        %v1842 = vsub.s32 %v1839, %v1841
        %v1843 = vrot.slane %v1829, %v1842
        %v1844 = vcombine.high %v1755, %v1761
        %v1846 = vunpack.c.l.s4 1983009808
        %v1847 = vunpack.c.0.s8 %v1846
        %v1848 = vlaneseq
        %v1849 = vshrl.u32 %v1848, 7
        %v1850 = vsub.s32 %v1847, %v1849
        %v1851 = vrot.slane %v1755, %v1850
        %v1853 = vunpack.c.l.s4 1983009808
        %v1854 = vunpack.c.0.s8 %v1853
        %v1855 = vlaneseq
        %v1856 = vshrl.u32 %v1855, 7
        %v1857 = vsub.s32 %v1854, %v1856
        %v1858 = vrot.slane %v1844, %v1857
        %v1859 = vcombine.low %v1836, %v1851
        %v1860 = vcombine.high %v1836, %v1851
        %v1862 = vunpack.c.l.s4 1934713408
        %v1863 = vunpack.c.0.s8 %v1862
        %v1864 = vlaneseq
        %v1865 = vshrl.u32 %v1864, 7
        %v1866 = vsub.s32 %v1863, %v1865
        %v1867 = vrot.slane %v1859, %v1866
        %v1869 = vunpack.c.l.s4 1934713408
        %v1870 = vunpack.c.0.s8 %v1869
        %v1871 = vlaneseq
        %v1872 = vshrl.u32 %v1871, 7
        %v1873 = vsub.s32 %v1870, %v1872
        %v1874 = vrot.slane %v1860, %v1873
        %v1875 = vcombine.low %v1843, %v1858
        %v1876 = vcombine.high %v1843, %v1858
        %v1878 = vunpack.c.l.s4 1934713408
        %v1879 = vunpack.c.0.s8 %v1878
        %v1880 = vlaneseq
        %v1881 = vshrl.u32 %v1880, 7
        %v1882 = vsub.s32 %v1879, %v1881
        %v1883 = vrot.slane %v1875, %v1882
        %v1885 = vunpack.c.l.s4 1934713408
        %v1886 = vunpack.c.0.s8 %v1885
        %v1887 = vlaneseq
        %v1888 = vshrl.u32 %v1887, 7
        %v1889 = vsub.s32 %v1886, %v1888
        %v1890 = vrot.slane %v1876, %v1889
        %v1891 = vcombine.high %v1867, 0
        %v1892 = vcombine.high %v1874, 0
        %v1893 = vcombine.high %v1883, 0
        %v1894 = vcombine.high %v1890, 0
        %v1895 = vcombine.low %v1801, %v1808
        %v1897 = vunpack.c.l.s4 1983009808
        %v1898 = vunpack.c.0.s8 %v1897
        %v1899 = vlaneseq
        %v1900 = vshrl.u32 %v1899, 7
        %v1901 = vsub.s32 %v1898, %v1900
        %v1902 = vrot.slane %v1895, %v1901
        %v1903 = vcombine.low %v1825, %v1826
        %v1905 = vunpack.c.l.s4 1983009808
        %v1906 = vunpack.c.0.s8 %v1905
        %v1907 = vlaneseq
        %v1908 = vshrl.u32 %v1907, 7
        %v1909 = vsub.s32 %v1906, %v1908
        %v1910 = vrot.slane %v1903, %v1909
        %v1911 = vcombine.low %v1817, %v1824
        %v1913 = vunpack.c.l.s4 1983009808
        %v1914 = vunpack.c.0.s8 %v1913
        %v1915 = vlaneseq
        %v1916 = vshrl.u32 %v1915, 7
        %v1917 = vsub.s32 %v1914, %v1916
        %v1918 = vrot.slane %v1911, %v1917
        %v1919 = vcombine.low %v1827, %v1828
        %v1921 = vunpack.c.l.s4 1983009808
        %v1922 = vunpack.c.0.s8 %v1921
        %v1923 = vlaneseq
        %v1924 = vshrl.u32 %v1923, 7
        %v1925 = vsub.s32 %v1922, %v1924
        %v1926 = vrot.slane %v1919, %v1925
        %v1927 = vcombine.low %v1902, %v1910
        %v1929 = vunpack.c.l.s4 1934713408
        %v1930 = vunpack.c.0.s8 %v1929
        %v1931 = vlaneseq
        %v1932 = vshrl.u32 %v1931, 7
        %v1933 = vsub.s32 %v1930, %v1932
        %v1934 = vrot.slane %v1927, %v1933
        %v1935 = vcombine.low %v1918, %v1926
        %v1937 = vunpack.c.l.s4 1934713408
        %v1938 = vunpack.c.0.s8 %v1937
        %v1939 = vlaneseq
        %v1940 = vshrl.u32 %v1939, 7
        %v1941 = vsub.s32 %v1938, %v1940
        %v1942 = vrot.slane %v1935, %v1941
        %v1943 = vcombine.low %v1934, %v1942
        %v1944 = vcombine.high %v1934, %v1942
        %v1945 = vcombine.low %v1867, %v1874
        %v1947 = vunpack.c.l.s4 1983009808
        %v1948 = vunpack.c.0.s8 %v1947
        %v1949 = vlaneseq
        %v1950 = vshrl.u32 %v1949, 7
        %v1951 = vsub.s32 %v1948, %v1950
        %v1952 = vrot.slane %v1945, %v1951
        %v1953 = vcombine.low %v1891, %v1892
        %v1955 = vunpack.c.l.s4 1983009808
        %v1956 = vunpack.c.0.s8 %v1955
        %v1957 = vlaneseq
        %v1958 = vshrl.u32 %v1957, 7
        %v1959 = vsub.s32 %v1956, %v1958
        %v1960 = vrot.slane %v1953, %v1959
        %v1961 = vcombine.low %v1883, %v1890
        %v1963 = vunpack.c.l.s4 1983009808
        %v1964 = vunpack.c.0.s8 %v1963
        %v1965 = vlaneseq
        %v1966 = vshrl.u32 %v1965, 7
        %v1967 = vsub.s32 %v1964, %v1966
        %v1968 = vrot.slane %v1961, %v1967
        %v1969 = vcombine.low %v1893, %v1894
        %v1971 = vunpack.c.l.s4 1983009808
        %v1972 = vunpack.c.0.s8 %v1971
        %v1973 = vlaneseq
        %v1974 = vshrl.u32 %v1973, 7
        %v1975 = vsub.s32 %v1972, %v1974
        %v1976 = vrot.slane %v1969, %v1975
        %v1977 = vcombine.low %v1952, %v1960
        %v1979 = vunpack.c.l.s4 1934713408
        %v1980 = vunpack.c.0.s8 %v1979
        %v1981 = vlaneseq
        %v1982 = vshrl.u32 %v1981, 7
        %v1983 = vsub.s32 %v1980, %v1982
        %v1984 = vrot.slane %v1977, %v1983
        %v1985 = vcombine.low %v1968, %v1976
        %v1987 = vunpack.c.l.s4 1934713408
        %v1988 = vunpack.c.0.s8 %v1987
        %v1989 = vlaneseq
        %v1990 = vshrl.u32 %v1989, 7
        %v1991 = vsub.s32 %v1988, %v1990
        %v1992 = vrot.slane %v1985, %v1991
        %v1993 = vcombine.low %v1984, %v1992
        %v1994 = vcombine.high %v1984, %v1992
        %v1997 = vpack.i.b16 %v1993, %v1943
        %v1999 = vshrl.u32 %v1943, 16
        %v2000 = vshrl.u32 %v1993, 16
        %v2001 = vpack.i.b16 %v2000, %v1999
        %v2005 = vpack.i.b16 %v1994, %v1944
        %v2007 = vshrl.u32 %v1944, 16
        %v2008 = vshrl.u32 %v1994, 16
        %v2009 = vpack.i.b16 %v2008, %v2007
        %v2011 = vpack.c.bf16 %v1360, %v1356
        %v2012 = vpack.c.bf16 %v1362, %v1358
        %v2013 = vpack.c.bf16 %v1403, %v1399
        %v2014 = vpack.c.bf16 %v1405, %v1401
        %v2017 = vpack.i.b16 %v2012, %v2011
        %v2019 = vshrl.u32 %v2011, 16
        %v2020 = vshrl.u32 %v2012, 16
        %v2021 = vpack.i.b16 %v2020, %v2019
        %v2025 = vpack.i.b16 %v2014, %v2013
        %v2027 = vshrl.u32 %v2013, 16
        %v2028 = vshrl.u32 %v2014, 16
        %v2029 = vpack.i.b16 %v2028, %v2027
        %v2031 = vcombine.high %v2017, %v1758
        %v2033 = vunpack.c.l.s4 1983009808
        %v2034 = vunpack.c.0.s8 %v2033
        %v2035 = vlaneseq
        %v2036 = vshrl.u32 %v2035, 7
        %v2037 = vsub.s32 %v2034, %v2036
        %v2038 = vrot.slane %v2017, %v2037
        %v2040 = vunpack.c.l.s4 1983009808
        %v2041 = vunpack.c.0.s8 %v2040
        %v2042 = vlaneseq
        %v2043 = vshrl.u32 %v2042, 7
        %v2044 = vsub.s32 %v2041, %v2043
        %v2045 = vrot.slane %v2031, %v2044
        %v2046 = vcombine.high %v2025, %v1758
        %v2048 = vunpack.c.l.s4 1983009808
        %v2049 = vunpack.c.0.s8 %v2048
        %v2050 = vlaneseq
        %v2051 = vshrl.u32 %v2050, 7
        %v2052 = vsub.s32 %v2049, %v2051
        %v2053 = vrot.slane %v2025, %v2052
        %v2055 = vunpack.c.l.s4 1983009808
        %v2056 = vunpack.c.0.s8 %v2055
        %v2057 = vlaneseq
        %v2058 = vshrl.u32 %v2057, 7
        %v2059 = vsub.s32 %v2056, %v2058
        %v2060 = vrot.slane %v2046, %v2059
        %v2061 = vcombine.low %v2038, %v2053
        %v2062 = vcombine.high %v2038, %v2053
        %v2064 = vunpack.c.l.s4 1934713408
        %v2065 = vunpack.c.0.s8 %v2064
        %v2066 = vlaneseq
        %v2067 = vshrl.u32 %v2066, 7
        %v2068 = vsub.s32 %v2065, %v2067
        %v2069 = vrot.slane %v2061, %v2068
        %v2071 = vunpack.c.l.s4 1934713408
        %v2072 = vunpack.c.0.s8 %v2071
        %v2073 = vlaneseq
        %v2074 = vshrl.u32 %v2073, 7
        %v2075 = vsub.s32 %v2072, %v2074
        %v2076 = vrot.slane %v2062, %v2075
        %v2077 = vcombine.low %v2045, %v2060
        %v2078 = vcombine.high %v2045, %v2060
        %v2080 = vunpack.c.l.s4 1934713408
        %v2081 = vunpack.c.0.s8 %v2080
        %v2082 = vlaneseq
        %v2083 = vshrl.u32 %v2082, 7
        %v2084 = vsub.s32 %v2081, %v2083
        %v2085 = vrot.slane %v2077, %v2084
        %v2087 = vunpack.c.l.s4 1934713408
        %v2088 = vunpack.c.0.s8 %v2087
        %v2089 = vlaneseq
        %v2090 = vshrl.u32 %v2089, 7
        %v2091 = vsub.s32 %v2088, %v2090
        %v2092 = vrot.slane %v2078, %v2091
        %v2093 = vcombine.high %v2069, 0
        %v2094 = vcombine.high %v2076, 0
        %v2095 = vcombine.high %v2085, 0
        %v2096 = vcombine.high %v2092, 0
        %v2097 = vcombine.high %v2021, %v1761
        %v2099 = vunpack.c.l.s4 1983009808
        %v2100 = vunpack.c.0.s8 %v2099
        %v2101 = vlaneseq
        %v2102 = vshrl.u32 %v2101, 7
        %v2103 = vsub.s32 %v2100, %v2102
        %v2104 = vrot.slane %v2021, %v2103
        %v2106 = vunpack.c.l.s4 1983009808
        %v2107 = vunpack.c.0.s8 %v2106
        %v2108 = vlaneseq
        %v2109 = vshrl.u32 %v2108, 7
        %v2110 = vsub.s32 %v2107, %v2109
        %v2111 = vrot.slane %v2097, %v2110
        %v2112 = vcombine.high %v2029, %v1761
        %v2114 = vunpack.c.l.s4 1983009808
        %v2115 = vunpack.c.0.s8 %v2114
        %v2116 = vlaneseq
        %v2117 = vshrl.u32 %v2116, 7
        %v2118 = vsub.s32 %v2115, %v2117
        %v2119 = vrot.slane %v2029, %v2118
        %v2121 = vunpack.c.l.s4 1983009808
        %v2122 = vunpack.c.0.s8 %v2121
        %v2123 = vlaneseq
        %v2124 = vshrl.u32 %v2123, 7
        %v2125 = vsub.s32 %v2122, %v2124
        %v2126 = vrot.slane %v2112, %v2125
        %v2127 = vcombine.low %v2104, %v2119
        %v2128 = vcombine.high %v2104, %v2119
        %v2130 = vunpack.c.l.s4 1934713408
        %v2131 = vunpack.c.0.s8 %v2130
        %v2132 = vlaneseq
        %v2133 = vshrl.u32 %v2132, 7
        %v2134 = vsub.s32 %v2131, %v2133
        %v2135 = vrot.slane %v2127, %v2134
        %v2137 = vunpack.c.l.s4 1934713408
        %v2138 = vunpack.c.0.s8 %v2137
        %v2139 = vlaneseq
        %v2140 = vshrl.u32 %v2139, 7
        %v2141 = vsub.s32 %v2138, %v2140
        %v2142 = vrot.slane %v2128, %v2141
        %v2143 = vcombine.low %v2111, %v2126
        %v2144 = vcombine.high %v2111, %v2126
        %v2146 = vunpack.c.l.s4 1934713408
        %v2147 = vunpack.c.0.s8 %v2146
        %v2148 = vlaneseq
        %v2149 = vshrl.u32 %v2148, 7
        %v2150 = vsub.s32 %v2147, %v2149
        %v2151 = vrot.slane %v2143, %v2150
        %v2153 = vunpack.c.l.s4 1934713408
        %v2154 = vunpack.c.0.s8 %v2153
        %v2155 = vlaneseq
        %v2156 = vshrl.u32 %v2155, 7
        %v2157 = vsub.s32 %v2154, %v2156
        %v2158 = vrot.slane %v2144, %v2157
        %v2159 = vcombine.high %v2135, 0
        %v2160 = vcombine.high %v2142, 0
        %v2161 = vcombine.high %v2151, 0
        %v2162 = vcombine.high %v2158, 0
        %v2163 = vcombine.low %v2069, %v2076
        %v2165 = vunpack.c.l.s4 1983009808
        %v2166 = vunpack.c.0.s8 %v2165
        %v2167 = vlaneseq
        %v2168 = vshrl.u32 %v2167, 7
        %v2169 = vsub.s32 %v2166, %v2168
        %v2170 = vrot.slane %v2163, %v2169
        %v2171 = vcombine.low %v2093, %v2094
        %v2173 = vunpack.c.l.s4 1983009808
        %v2174 = vunpack.c.0.s8 %v2173
        %v2175 = vlaneseq
        %v2176 = vshrl.u32 %v2175, 7
        %v2177 = vsub.s32 %v2174, %v2176
        %v2178 = vrot.slane %v2171, %v2177
        %v2179 = vcombine.low %v2085, %v2092
        %v2181 = vunpack.c.l.s4 1983009808
        %v2182 = vunpack.c.0.s8 %v2181
        %v2183 = vlaneseq
        %v2184 = vshrl.u32 %v2183, 7
        %v2185 = vsub.s32 %v2182, %v2184
        %v2186 = vrot.slane %v2179, %v2185
        %v2187 = vcombine.low %v2095, %v2096
        %v2189 = vunpack.c.l.s4 1983009808
        %v2190 = vunpack.c.0.s8 %v2189
        %v2191 = vlaneseq
        %v2192 = vshrl.u32 %v2191, 7
        %v2193 = vsub.s32 %v2190, %v2192
        %v2194 = vrot.slane %v2187, %v2193
        %v2195 = vcombine.low %v2170, %v2178
        %v2197 = vunpack.c.l.s4 1934713408
        %v2198 = vunpack.c.0.s8 %v2197
        %v2199 = vlaneseq
        %v2200 = vshrl.u32 %v2199, 7
        %v2201 = vsub.s32 %v2198, %v2200
        %v2202 = vrot.slane %v2195, %v2201
        %v2203 = vcombine.low %v2186, %v2194
        %v2205 = vunpack.c.l.s4 1934713408
        %v2206 = vunpack.c.0.s8 %v2205
        %v2207 = vlaneseq
        %v2208 = vshrl.u32 %v2207, 7
        %v2209 = vsub.s32 %v2206, %v2208
        %v2210 = vrot.slane %v2203, %v2209
        %v2211 = vcombine.low %v2202, %v2210
        %v2212 = vcombine.high %v2202, %v2210
        %v2213 = vcombine.low %v2135, %v2142
        %v2215 = vunpack.c.l.s4 1983009808
        %v2216 = vunpack.c.0.s8 %v2215
        %v2217 = vlaneseq
        %v2218 = vshrl.u32 %v2217, 7
        %v2219 = vsub.s32 %v2216, %v2218
        %v2220 = vrot.slane %v2213, %v2219
        %v2221 = vcombine.low %v2159, %v2160
        %v2223 = vunpack.c.l.s4 1983009808
        %v2224 = vunpack.c.0.s8 %v2223
        %v2225 = vlaneseq
        %v2226 = vshrl.u32 %v2225, 7
        %v2227 = vsub.s32 %v2224, %v2226
        %v2228 = vrot.slane %v2221, %v2227
        %v2229 = vcombine.low %v2151, %v2158
        %v2231 = vunpack.c.l.s4 1983009808
        %v2232 = vunpack.c.0.s8 %v2231
        %v2233 = vlaneseq
        %v2234 = vshrl.u32 %v2233, 7
        %v2235 = vsub.s32 %v2232, %v2234
        %v2236 = vrot.slane %v2229, %v2235
        %v2237 = vcombine.low %v2161, %v2162
        %v2239 = vunpack.c.l.s4 1983009808
        %v2240 = vunpack.c.0.s8 %v2239
        %v2241 = vlaneseq
        %v2242 = vshrl.u32 %v2241, 7
        %v2243 = vsub.s32 %v2240, %v2242
        %v2244 = vrot.slane %v2237, %v2243
        %v2245 = vcombine.low %v2220, %v2228
        %v2247 = vunpack.c.l.s4 1934713408
        %v2248 = vunpack.c.0.s8 %v2247
        %v2249 = vlaneseq
        %v2250 = vshrl.u32 %v2249, 7
        %v2251 = vsub.s32 %v2248, %v2250
        %v2252 = vrot.slane %v2245, %v2251
        %v2253 = vcombine.low %v2236, %v2244
        %v2255 = vunpack.c.l.s4 1934713408
        %v2256 = vunpack.c.0.s8 %v2255
        %v2257 = vlaneseq
        %v2258 = vshrl.u32 %v2257, 7
        %v2259 = vsub.s32 %v2256, %v2258
        %v2260 = vrot.slane %v2253, %v2259
        %v2261 = vcombine.low %v2252, %v2260
        %v2262 = vcombine.high %v2252, %v2260
        %v2265 = vpack.i.b16 %v2261, %v2211
        %v2267 = vshrl.u32 %v2211, 16
        %v2268 = vshrl.u32 %v2261, 16
        %v2269 = vpack.i.b16 %v2268, %v2267
        %v2273 = vpack.i.b16 %v2262, %v2212
        %v2275 = vshrl.u32 %v2212, 16
        %v2276 = vshrl.u32 %v2262, 16
        %v2277 = vpack.i.b16 %v2276, %v2275
        %v2279 = vpack.c.bf16 %v1442, %v1442
        %v2281 = vunpack.c.l.s4 1983009808
        %v2282 = vunpack.c.0.s8 %v2281
        %v2283 = vlaneseq
        %v2284 = vshrl.u32 %v2283, 7
        %v2285 = vsub.s32 %v2282, %v2284
        %v2286 = vrot.slane %v2279, %v2285
        %v2287 = vpack.c.bf16 %v1483, %v1483
        %v2289 = vunpack.c.l.s4 1983009808
        %v2290 = vunpack.c.0.s8 %v2289
        %v2291 = vlaneseq
        %v2292 = vshrl.u32 %v2291, 7
        %v2293 = vsub.s32 %v2290, %v2292
        %v2294 = vrot.slane %v2287, %v2293
        %v2295 = vcombine.low %v2286, %v2294
        %v2296 = vcombine.high %v2286, %v2294
        %v2298 = vunpack.c.l.s4 1934713408
        %v2299 = vunpack.c.0.s8 %v2298
        %v2300 = vlaneseq
        %v2301 = vshrl.u32 %v2300, 7
        %v2302 = vsub.s32 %v2299, %v2301
        %v2303 = vrot.slane %v2295, %v2302
        %v2305 = vunpack.c.l.s4 1934713408
        %v2306 = vunpack.c.0.s8 %v2305
        %v2307 = vlaneseq
        %v2308 = vshrl.u32 %v2307, 7
        %v2309 = vsub.s32 %v2306, %v2308
        %v2310 = vrot.slane %v2296, %v2309
        %v2311 = vcombine.high %v2303, 0
        %v2312 = vcombine.high %v2310, 0
        %v2313 = vpack.c.bf16 %v1444, %v1444
        %v2315 = vunpack.c.l.s4 1983009808
        %v2316 = vunpack.c.0.s8 %v2315
        %v2317 = vlaneseq
        %v2318 = vshrl.u32 %v2317, 7
        %v2319 = vsub.s32 %v2316, %v2318
        %v2320 = vrot.slane %v2313, %v2319
        %v2321 = vpack.c.bf16 %v1485, %v1485
        %v2323 = vunpack.c.l.s4 1983009808
        %v2324 = vunpack.c.0.s8 %v2323
        %v2325 = vlaneseq
        %v2326 = vshrl.u32 %v2325, 7
        %v2327 = vsub.s32 %v2324, %v2326
        %v2328 = vrot.slane %v2321, %v2327
        %v2329 = vcombine.low %v2320, %v2328
        %v2330 = vcombine.high %v2320, %v2328
        %v2332 = vunpack.c.l.s4 1934713408
        %v2333 = vunpack.c.0.s8 %v2332
        %v2334 = vlaneseq
        %v2335 = vshrl.u32 %v2334, 7
        %v2336 = vsub.s32 %v2333, %v2335
        %v2337 = vrot.slane %v2329, %v2336
        %v2339 = vunpack.c.l.s4 1934713408
        %v2340 = vunpack.c.0.s8 %v2339
        %v2341 = vlaneseq
        %v2342 = vshrl.u32 %v2341, 7
        %v2343 = vsub.s32 %v2340, %v2342
        %v2344 = vrot.slane %v2330, %v2343
        %v2345 = vcombine.high %v2337, 0
        %v2346 = vcombine.high %v2344, 0
        %v2349 = vpack.i.b16 %v2337, %v2303
        %v2351 = vshrl.u32 %v2303, 16
        %v2352 = vshrl.u32 %v2337, 16
        %v2353 = vpack.i.b16 %v2352, %v2351
        %v2357 = vpack.i.b16 %v2345, %v2311
        %v2359 = vshrl.u32 %v2311, 16
        %v2360 = vshrl.u32 %v2345, 16
        %v2361 = vpack.i.b16 %v2360, %v2359
        %v2365 = vpack.i.b16 %v2344, %v2310
        %v2367 = vshrl.u32 %v2310, 16
        %v2368 = vshrl.u32 %v2344, 16
        %v2369 = vpack.i.b16 %v2368, %v2367
        %v2373 = vpack.i.b16 %v2346, %v2312
        %v2375 = vshrl.u32 %v2312, 16
        %v2376 = vshrl.u32 %v2346, 16
        %v2377 = vpack.i.b16 %v2376, %v2375
        %v2379 = vcombine.low %v2349, %v2365
        %v2381 = vunpack.c.l.s4 1983009808
        %v2382 = vunpack.c.0.s8 %v2381
        %v2383 = vlaneseq
        %v2384 = vshrl.u32 %v2383, 7
        %v2385 = vsub.s32 %v2382, %v2384
        %v2386 = vrot.slane %v2379, %v2385
        %v2387 = vcombine.low %v2357, %v2373
        %v2389 = vunpack.c.l.s4 1983009808
        %v2390 = vunpack.c.0.s8 %v2389
        %v2391 = vlaneseq
        %v2392 = vshrl.u32 %v2391, 7
        %v2393 = vsub.s32 %v2390, %v2392
        %v2394 = vrot.slane %v2387, %v2393
        %v2395 = vcombine.low %v2386, %v2394
        %v2397 = vunpack.c.l.s4 1934713408
        %v2398 = vunpack.c.0.s8 %v2397
        %v2399 = vlaneseq
        %v2400 = vshrl.u32 %v2399, 7
        %v2401 = vsub.s32 %v2398, %v2400
        %v2402 = vrot.slane %v2395, %v2401
        %v2403 = vcombine.high %v2402, 0
        %v2404 = vcombine.low %v2353, %v2369
        %v2406 = vunpack.c.l.s4 1983009808
        %v2407 = vunpack.c.0.s8 %v2406
        %v2408 = vlaneseq
        %v2409 = vshrl.u32 %v2408, 7
        %v2410 = vsub.s32 %v2407, %v2409
        %v2411 = vrot.slane %v2404, %v2410
        %v2412 = vcombine.low %v2361, %v2377
        %v2414 = vunpack.c.l.s4 1983009808
        %v2415 = vunpack.c.0.s8 %v2414
        %v2416 = vlaneseq
        %v2417 = vshrl.u32 %v2416, 7
        %v2418 = vsub.s32 %v2415, %v2417
        %v2419 = vrot.slane %v2412, %v2418
        %v2420 = vcombine.low %v2411, %v2419
        %v2422 = vunpack.c.l.s4 1934713408
        %v2423 = vunpack.c.0.s8 %v2422
        %v2424 = vlaneseq
        %v2425 = vshrl.u32 %v2424, 7
        %v2426 = vsub.s32 %v2423, %v2425
        %v2427 = vrot.slane %v2420, %v2426
        %v2428 = vcombine.high %v2427, 0
        %v2431 = vpack.i.b16 %v2427, %v2402
        %v2433 = vshrl.u32 %v2402, 16
        %v2434 = vshrl.u32 %v2427, 16
        %v2435 = vpack.i.b16 %v2434, %v2433
        %v2439 = vpack.i.b16 %v2428, %v2403
        %v2441 = vshrl.u32 %v2403, 16
        %v2442 = vshrl.u32 %v2428, 16
        %v2443 = vpack.i.b16 %v2442, %v2441
        %v2445 = vpack.c.bf16 %v1524, %v1524
        %v2447 = vunpack.c.l.s4 1983009808
        %v2448 = vunpack.c.0.s8 %v2447
        %v2449 = vlaneseq
        %v2450 = vshrl.u32 %v2449, 7
        %v2451 = vsub.s32 %v2448, %v2450
        %v2452 = vrot.slane %v2445, %v2451
        %v2453 = vpack.c.bf16 %v1565, %v1565
        %v2455 = vunpack.c.l.s4 1983009808
        %v2456 = vunpack.c.0.s8 %v2455
        %v2457 = vlaneseq
        %v2458 = vshrl.u32 %v2457, 7
        %v2459 = vsub.s32 %v2456, %v2458
        %v2460 = vrot.slane %v2453, %v2459
        %v2461 = vcombine.low %v2452, %v2460
        %v2462 = vcombine.high %v2452, %v2460
        %v2464 = vunpack.c.l.s4 1934713408
        %v2465 = vunpack.c.0.s8 %v2464
        %v2466 = vlaneseq
        %v2467 = vshrl.u32 %v2466, 7
        %v2468 = vsub.s32 %v2465, %v2467
        %v2469 = vrot.slane %v2461, %v2468
        %v2471 = vunpack.c.l.s4 1934713408
        %v2472 = vunpack.c.0.s8 %v2471
        %v2473 = vlaneseq
        %v2474 = vshrl.u32 %v2473, 7
        %v2475 = vsub.s32 %v2472, %v2474
        %v2476 = vrot.slane %v2462, %v2475
        %v2477 = vcombine.high %v2469, 0
        %v2478 = vcombine.high %v2476, 0
        %v2479 = vpack.c.bf16 %v1526, %v1526
        %v2481 = vunpack.c.l.s4 1983009808
        %v2482 = vunpack.c.0.s8 %v2481
        %v2483 = vlaneseq
        %v2484 = vshrl.u32 %v2483, 7
        %v2485 = vsub.s32 %v2482, %v2484
        %v2486 = vrot.slane %v2479, %v2485
        %v2487 = vpack.c.bf16 %v1567, %v1567
        %v2489 = vunpack.c.l.s4 1983009808
        %v2490 = vunpack.c.0.s8 %v2489
        %v2491 = vlaneseq
        %v2492 = vshrl.u32 %v2491, 7
        %v2493 = vsub.s32 %v2490, %v2492
        %v2494 = vrot.slane %v2487, %v2493
        %v2495 = vcombine.low %v2486, %v2494
        %v2496 = vcombine.high %v2486, %v2494
        %v2498 = vunpack.c.l.s4 1934713408
        %v2499 = vunpack.c.0.s8 %v2498
        %v2500 = vlaneseq
        %v2501 = vshrl.u32 %v2500, 7
        %v2502 = vsub.s32 %v2499, %v2501
        %v2503 = vrot.slane %v2495, %v2502
        %v2505 = vunpack.c.l.s4 1934713408
        %v2506 = vunpack.c.0.s8 %v2505
        %v2507 = vlaneseq
        %v2508 = vshrl.u32 %v2507, 7
        %v2509 = vsub.s32 %v2506, %v2508
        %v2510 = vrot.slane %v2496, %v2509
        %v2511 = vcombine.high %v2503, 0
        %v2512 = vcombine.high %v2510, 0
        %v2515 = vpack.i.b16 %v2503, %v2469
        %v2517 = vshrl.u32 %v2469, 16
        %v2518 = vshrl.u32 %v2503, 16
        %v2519 = vpack.i.b16 %v2518, %v2517
        %v2523 = vpack.i.b16 %v2511, %v2477
        %v2525 = vshrl.u32 %v2477, 16
        %v2526 = vshrl.u32 %v2511, 16
        %v2527 = vpack.i.b16 %v2526, %v2525
        %v2531 = vpack.i.b16 %v2510, %v2476
        %v2533 = vshrl.u32 %v2476, 16
        %v2534 = vshrl.u32 %v2510, 16
        %v2535 = vpack.i.b16 %v2534, %v2533
        %v2539 = vpack.i.b16 %v2512, %v2478
        %v2541 = vshrl.u32 %v2478, 16
        %v2542 = vshrl.u32 %v2512, 16
        %v2543 = vpack.i.b16 %v2542, %v2541
        %v2545 = vcombine.low %v2515, %v2531
        %v2547 = vunpack.c.l.s4 1983009808
        %v2548 = vunpack.c.0.s8 %v2547
        %v2549 = vlaneseq
        %v2550 = vshrl.u32 %v2549, 7
        %v2551 = vsub.s32 %v2548, %v2550
        %v2552 = vrot.slane %v2545, %v2551
        %v2553 = vcombine.low %v2523, %v2539
        %v2555 = vunpack.c.l.s4 1983009808
        %v2556 = vunpack.c.0.s8 %v2555
        %v2557 = vlaneseq
        %v2558 = vshrl.u32 %v2557, 7
        %v2559 = vsub.s32 %v2556, %v2558
        %v2560 = vrot.slane %v2553, %v2559
        %v2561 = vcombine.low %v2552, %v2560
        %v2563 = vunpack.c.l.s4 1934713408
        %v2564 = vunpack.c.0.s8 %v2563
        %v2565 = vlaneseq
        %v2566 = vshrl.u32 %v2565, 7
        %v2567 = vsub.s32 %v2564, %v2566
        %v2568 = vrot.slane %v2561, %v2567
        %v2569 = vcombine.high %v2568, 0
        %v2570 = vcombine.low %v2519, %v2535
        %v2572 = vunpack.c.l.s4 1983009808
        %v2573 = vunpack.c.0.s8 %v2572
        %v2574 = vlaneseq
        %v2575 = vshrl.u32 %v2574, 7
        %v2576 = vsub.s32 %v2573, %v2575
        %v2577 = vrot.slane %v2570, %v2576
        %v2578 = vcombine.low %v2527, %v2543
        %v2580 = vunpack.c.l.s4 1983009808
        %v2581 = vunpack.c.0.s8 %v2580
        %v2582 = vlaneseq
        %v2583 = vshrl.u32 %v2582, 7
        %v2584 = vsub.s32 %v2581, %v2583
        %v2585 = vrot.slane %v2578, %v2584
        %v2586 = vcombine.low %v2577, %v2585
        %v2588 = vunpack.c.l.s4 1934713408
        %v2589 = vunpack.c.0.s8 %v2588
        %v2590 = vlaneseq
        %v2591 = vshrl.u32 %v2590, 7
        %v2592 = vsub.s32 %v2589, %v2591
        %v2593 = vrot.slane %v2586, %v2592
        %v2594 = vcombine.high %v2593, 0
        %v2597 = vpack.i.b16 %v2593, %v2568
        %v2598 = vshrl.u32 %v2568, 16
        %v2599 = vshrl.u32 %v2593, 16
        %v2600 = vpack.i.b16 %v2599, %v2598
        %v2603 = vpack.i.b16 %v2594, %v2569
        %v2604 = vshrl.u32 %v2569, 16
        %v2605 = vshrl.u32 %v2594, 16
        %v2606 = vpack.i.b16 %v2605, %v2604
        %2607 = vmatprep.subr.bf16.mxu0 0
        %2608 = vmatpush1.bf16.xpose.msra.mxu0 %v2431
        %2609 = vmatprep.subr.bf16.mxu0 0
        %2610 = vmatpush1.bf16.xpose.msra.mxu0 0
        %2611 = vmatprep.subr.bf16.mxu0 0
        %2612 = vmatpush1.bf16.xpose.msra.mxu0 0
        %2613 = vmatprep.subr.bf16.mxu0 0
        %2614 = vmatpush1.bf16.xpose.msra.mxu0 0
        %2615 = vmatprep.subr.bf16.mxu0 0
        %2616 = vmatpush1.bf16.xpose.msra.mxu0 0
        %2617 = vmatprep.subr.bf16.mxu0 0
        %2618 = vmatpush1.bf16.xpose.msra.mxu0 0
        %2619 = vmatprep.subr.bf16.mxu0 0
        %2620 = vmatpush1.bf16.xpose.msra.mxu0 0
        %2621 = vmatprep.subr.bf16.mxu0 0
        %2622 = vmatpush1.bf16.xpose.msra.mxu0 0
        %2623 = vmatprep.subr.bf16.mxu0 0
        %2624 = vmatpush1.bf16.xpose.msra.mxu0 0
        %2625 = vmatprep.subr.bf16.mxu0 0
        %2626 = vmatpush1.bf16.xpose.msra.mxu0 0
        %2627 = vmatprep.subr.bf16.mxu0 0
        %2628 = vmatpush1.bf16.xpose.msra.mxu0 0
        %2629 = vmatprep.subr.bf16.mxu0 0
        %2630 = vmatpush1.bf16.xpose.msra.mxu0 0
        %2631 = vmatprep.subr.bf16.mxu0 0
        %2632 = vmatpush1.bf16.xpose.msra.mxu0 0
        %2633 = vmatprep.subr.bf16.mxu0 0
        %2634 = vmatpush1.bf16.xpose.msra.mxu0 0
        %2635 = vmatprep.subr.bf16.mxu0 0
        %2636 = vmatpush1.bf16.xpose.msra.mxu0 0
        %2637 = vmatprep.subr.bf16.mxu0 0
        %2638 = vmatpush1.bf16.xpose.msra.mxu0 0
        %2639 = vmatprep.mubr.bf16.mxu0 0
        %2640 = vmatmul.mubr.bf16.gmra.mrb[0].mxu0 %v1723
        %v2641 = vpop.f32.mrb[0].mxu0
        %v2642 = vadd.f32 0.0, %v2641
        %v2643 = vpop.f32.mrb[0].mxu0
        %v2644 = vpop.f32.mrb[0].mxu0
        %v2645 = vpop.f32.mrb[0].mxu0
        %2646 = vdwg.mxu0
        %2647 = vmatprep.subr.bf16.mxu0 0
        %2648 = vmatpush1.bf16.xpose.msra.mxu0 %v2435
        %2649 = vmatprep.subr.bf16.mxu0 0
        %2650 = vmatpush1.bf16.xpose.msra.mxu0 0
        %2651 = vmatprep.subr.bf16.mxu0 0
        %2652 = vmatpush1.bf16.xpose.msra.mxu0 0
        %2653 = vmatprep.subr.bf16.mxu0 0
        %2654 = vmatpush1.bf16.xpose.msra.mxu0 0
        %2655 = vmatprep.subr.bf16.mxu0 0
        %2656 = vmatpush1.bf16.xpose.msra.mxu0 0
        %2657 = vmatprep.subr.bf16.mxu0 0
        %2658 = vmatpush1.bf16.xpose.msra.mxu0 0
        %2659 = vmatprep.subr.bf16.mxu0 0
        %2660 = vmatpush1.bf16.xpose.msra.mxu0 0
        %2661 = vmatprep.subr.bf16.mxu0 0
        %2662 = vmatpush1.bf16.xpose.msra.mxu0 0
        %2663 = vmatprep.subr.bf16.mxu0 0
        %2664 = vmatpush1.bf16.xpose.msra.mxu0 0
        %2665 = vmatprep.subr.bf16.mxu0 0
        %2666 = vmatpush1.bf16.xpose.msra.mxu0 0
        %2667 = vmatprep.subr.bf16.mxu0 0
        %2668 = vmatpush1.bf16.xpose.msra.mxu0 0
        %2669 = vmatprep.subr.bf16.mxu0 0
        %2670 = vmatpush1.bf16.xpose.msra.mxu0 0
        %2671 = vmatprep.subr.bf16.mxu0 0
        %2672 = vmatpush1.bf16.xpose.msra.mxu0 0
        %2673 = vmatprep.subr.bf16.mxu0 0
        %2674 = vmatpush1.bf16.xpose.msra.mxu0 0
        %2675 = vmatprep.subr.bf16.mxu0 0
        %2676 = vmatpush1.bf16.xpose.msra.mxu0 0
        %2677 = vmatprep.subr.bf16.mxu0 0
        %2678 = vmatpush1.bf16.xpose.msra.mxu0 0
        %2679 = vmatprep.mubr.bf16.mxu0 0
        %2680 = vmatmul.mubr.bf16.gmra.mrb[0].mxu0 %v1727
        %v2681 = vpop.f32.mrb[0].mxu0
        %v2682 = vadd.f32 0.0, %v2681
        %v2683 = vpop.f32.mrb[0].mxu0
        %v2684 = vpop.f32.mrb[0].mxu0
        %v2685 = vpop.f32.mrb[0].mxu0
        %2686 = vdwg.mxu0
        %2687 = vmatprep.subr.bf16.mxu0 0
        %2688 = vmatpush1.bf16.xpose.msra.mxu0 %v2439
        %2689 = vmatprep.subr.bf16.mxu0 0
        %2690 = vmatpush1.bf16.xpose.msra.mxu0 0
        %2691 = vmatprep.subr.bf16.mxu0 0
        %2692 = vmatpush1.bf16.xpose.msra.mxu0 0
        %2693 = vmatprep.subr.bf16.mxu0 0
        %2694 = vmatpush1.bf16.xpose.msra.mxu0 0
        %2695 = vmatprep.subr.bf16.mxu0 0
        %2696 = vmatpush1.bf16.xpose.msra.mxu0 0
        %2697 = vmatprep.subr.bf16.mxu0 0
        %2698 = vmatpush1.bf16.xpose.msra.mxu0 0
        %2699 = vmatprep.subr.bf16.mxu0 0
        %2700 = vmatpush1.bf16.xpose.msra.mxu0 0
        %2701 = vmatprep.subr.bf16.mxu0 0
        %2702 = vmatpush1.bf16.xpose.msra.mxu0 0
        %2703 = vmatprep.subr.bf16.mxu0 0
        %2704 = vmatpush1.bf16.xpose.msra.mxu0 0
        %2705 = vmatprep.subr.bf16.mxu0 0
        %2706 = vmatpush1.bf16.xpose.msra.mxu0 0
        %2707 = vmatprep.subr.bf16.mxu0 0
        %2708 = vmatpush1.bf16.xpose.msra.mxu0 0
        %2709 = vmatprep.subr.bf16.mxu0 0
        %2710 = vmatpush1.bf16.xpose.msra.mxu0 0
        %2711 = vmatprep.subr.bf16.mxu0 0
        %2712 = vmatpush1.bf16.xpose.msra.mxu0 0
        %2713 = vmatprep.subr.bf16.mxu0 0
        %2714 = vmatpush1.bf16.xpose.msra.mxu0 0
        %2715 = vmatprep.subr.bf16.mxu0 0
        %2716 = vmatpush1.bf16.xpose.msra.mxu0 0
        %2717 = vmatprep.subr.bf16.mxu0 0
        %2718 = vmatpush1.bf16.xpose.msra.mxu0 0
        %2719 = vmatprep.mubr.bf16.mxu0 0
        %2720 = vmatmul.mubr.bf16.gmra.mrb[0].mxu0 %v1731
        %v2721 = vpop.f32.mrb[0].mxu0
        %v2722 = vadd.f32 0.0, %v2721
        %v2723 = vpop.f32.mrb[0].mxu0
        %v2724 = vpop.f32.mrb[0].mxu0
        %v2725 = vpop.f32.mrb[0].mxu0
        %2726 = vdwg.mxu0
        %2727 = vmatprep.subr.bf16.mxu0 0
        %2728 = vmatpush1.bf16.xpose.msra.mxu0 %v2443
        %2729 = vmatprep.subr.bf16.mxu0 0
        %2730 = vmatpush1.bf16.xpose.msra.mxu0 0
        %2731 = vmatprep.subr.bf16.mxu0 0
        %2732 = vmatpush1.bf16.xpose.msra.mxu0 0
        %2733 = vmatprep.subr.bf16.mxu0 0
        %2734 = vmatpush1.bf16.xpose.msra.mxu0 0
        %2735 = vmatprep.subr.bf16.mxu0 0
        %2736 = vmatpush1.bf16.xpose.msra.mxu0 0
        %2737 = vmatprep.subr.bf16.mxu0 0
        %2738 = vmatpush1.bf16.xpose.msra.mxu0 0
        %2739 = vmatprep.subr.bf16.mxu0 0
        %2740 = vmatpush1.bf16.xpose.msra.mxu0 0
        %2741 = vmatprep.subr.bf16.mxu0 0
        %2742 = vmatpush1.bf16.xpose.msra.mxu0 0
        %2743 = vmatprep.subr.bf16.mxu0 0
        %2744 = vmatpush1.bf16.xpose.msra.mxu0 0
        %2745 = vmatprep.subr.bf16.mxu0 0
        %2746 = vmatpush1.bf16.xpose.msra.mxu0 0
        %2747 = vmatprep.subr.bf16.mxu0 0
        %2748 = vmatpush1.bf16.xpose.msra.mxu0 0
        %2749 = vmatprep.subr.bf16.mxu0 0
        %2750 = vmatpush1.bf16.xpose.msra.mxu0 0
        %2751 = vmatprep.subr.bf16.mxu0 0
        %2752 = vmatpush1.bf16.xpose.msra.mxu0 0
        %2753 = vmatprep.subr.bf16.mxu0 0
        %2754 = vmatpush1.bf16.xpose.msra.mxu0 0
        %2755 = vmatprep.subr.bf16.mxu0 0
        %2756 = vmatpush1.bf16.xpose.msra.mxu0 0
        %2757 = vmatprep.subr.bf16.mxu0 0
        %2758 = vmatpush1.bf16.xpose.msra.mxu0 0
        %2759 = vmatprep.mubr.bf16.mxu0 0
        %2760 = vmatmul.mubr.bf16.gmra.mrb[0].mxu0 %v1735
        %v2761 = vpop.f32.mrb[0].mxu0
        %v2762 = vadd.f32 0.0, %v2761
        %v2763 = vpop.f32.mrb[0].mxu0
        %v2764 = vpop.f32.mrb[0].mxu0
        %v2765 = vpop.f32.mrb[0].mxu0
        %2766 = vdwg.mxu0
        %v2767 = vld [vmem:[%s492] sm:$0x1]
        %vm2768 = vcmp.ne.f32.partialorder %v2767, 0.0
        %v2769 = vsel %vm2768, 0.0, -1e+30
        %v2771 = vlaneseq
        %v2772 = vshrl.u32 %v2771, 7
        %v2773 = vsub.s32 0, %v2772
        %v2774 = vrot.slane %v2769, %v2773
        %2776 = vmatprep.subr.bf16.mxu0 0
        %2777 = vmatpush1.bf16.xpose.msra.mxu0 %v1997
        %2778 = vmatprep.subr.bf16.mxu0 0
        %2779 = vmatpush1.bf16.xpose.msra.mxu0 0
        %2780 = vmatprep.subr.bf16.mxu0 0
        %2781 = vmatpush1.bf16.xpose.msra.mxu0 0
        %2782 = vmatprep.subr.bf16.mxu0 0
        %2783 = vmatpush1.bf16.xpose.msra.mxu0 0
        %2784 = vmatprep.subr.bf16.mxu0 0
        %2785 = vmatpush1.bf16.xpose.msra.mxu0 0
        %2786 = vmatprep.subr.bf16.mxu0 0
        %2787 = vmatpush1.bf16.xpose.msra.mxu0 0
        %2788 = vmatprep.subr.bf16.mxu0 0
        %2789 = vmatpush1.bf16.xpose.msra.mxu0 0
        %2790 = vmatprep.subr.bf16.mxu0 0
        %2791 = vmatpush1.bf16.xpose.msra.mxu0 0
        %2792 = vmatprep.subr.bf16.mxu0 0
        %2793 = vmatpush1.bf16.xpose.msra.mxu0 0
        %2794 = vmatprep.subr.bf16.mxu0 0
        %2795 = vmatpush1.bf16.xpose.msra.mxu0 0
        %2796 = vmatprep.subr.bf16.mxu0 0
        %2797 = vmatpush1.bf16.xpose.msra.mxu0 0
        %2798 = vmatprep.subr.bf16.mxu0 0
        %2799 = vmatpush1.bf16.xpose.msra.mxu0 0
        %2800 = vmatprep.subr.bf16.mxu0 0
        %2801 = vmatpush1.bf16.xpose.msra.mxu0 0
        %2802 = vmatprep.subr.bf16.mxu0 0
        %2803 = vmatpush1.bf16.xpose.msra.mxu0 0
        %2804 = vmatprep.subr.bf16.mxu0 0
        %2805 = vmatpush1.bf16.xpose.msra.mxu0 0
        %2806 = vmatprep.subr.bf16.mxu0 0
        %2807 = vmatpush1.bf16.xpose.msra.mxu0 0
        %2808 = vmatprep.mubr.bf16.mxu0 0
        %2809 = vmatmul.mubr.bf16.gmra.mrb[0].mxu0 %v1723
        %v2810 = vpop.f32.mrb[0].mxu0
        %v2811 = vadd.f32 %v2774, %v2810
        %v2812 = vpop.f32.mrb[0].mxu0
        %v2813 = vpop.f32.mrb[0].mxu0
        %v2814 = vpop.f32.mrb[0].mxu0
        %2815 = vdwg.mxu0
        %2816 = vmatprep.subr.bf16.mxu0 0
        %2817 = vmatpush1.bf16.xpose.msra.mxu0 %v2001
        %2818 = vmatprep.subr.bf16.mxu0 0
        %2819 = vmatpush1.bf16.xpose.msra.mxu0 0
        %2820 = vmatprep.subr.bf16.mxu0 0
        %2821 = vmatpush1.bf16.xpose.msra.mxu0 0
        %2822 = vmatprep.subr.bf16.mxu0 0
        %2823 = vmatpush1.bf16.xpose.msra.mxu0 0
        %2824 = vmatprep.subr.bf16.mxu0 0
        %2825 = vmatpush1.bf16.xpose.msra.mxu0 0
        %2826 = vmatprep.subr.bf16.mxu0 0
        %2827 = vmatpush1.bf16.xpose.msra.mxu0 0
        %2828 = vmatprep.subr.bf16.mxu0 0
        %2829 = vmatpush1.bf16.xpose.msra.mxu0 0
        %2830 = vmatprep.subr.bf16.mxu0 0
        %2831 = vmatpush1.bf16.xpose.msra.mxu0 0
        %2832 = vmatprep.subr.bf16.mxu0 0
        %2833 = vmatpush1.bf16.xpose.msra.mxu0 0
        %2834 = vmatprep.subr.bf16.mxu0 0
        %2835 = vmatpush1.bf16.xpose.msra.mxu0 0
        %2836 = vmatprep.subr.bf16.mxu0 0
        %2837 = vmatpush1.bf16.xpose.msra.mxu0 0
        %2838 = vmatprep.subr.bf16.mxu0 0
        %2839 = vmatpush1.bf16.xpose.msra.mxu0 0
        %2840 = vmatprep.subr.bf16.mxu0 0
        %2841 = vmatpush1.bf16.xpose.msra.mxu0 0
        %2842 = vmatprep.subr.bf16.mxu0 0
        %2843 = vmatpush1.bf16.xpose.msra.mxu0 0
        %2844 = vmatprep.subr.bf16.mxu0 0
        %2845 = vmatpush1.bf16.xpose.msra.mxu0 0
        %2846 = vmatprep.subr.bf16.mxu0 0
        %2847 = vmatpush1.bf16.xpose.msra.mxu0 0
        %2848 = vmatprep.mubr.bf16.mxu0 0
        %2849 = vmatmul.mubr.bf16.gmra.mrb[0].mxu0 %v1727
        %v2850 = vpop.f32.mrb[0].mxu0
        %v2851 = vadd.f32 %v2774, %v2850
        %v2852 = vpop.f32.mrb[0].mxu0
        %v2853 = vpop.f32.mrb[0].mxu0
        %v2854 = vpop.f32.mrb[0].mxu0
        %2855 = vdwg.mxu0
        %2856 = vmatprep.subr.bf16.mxu0 0
        %2857 = vmatpush1.bf16.xpose.msra.mxu0 %v2005
        %2858 = vmatprep.subr.bf16.mxu0 0
        %2859 = vmatpush1.bf16.xpose.msra.mxu0 0
        %2860 = vmatprep.subr.bf16.mxu0 0
        %2861 = vmatpush1.bf16.xpose.msra.mxu0 0
        %2862 = vmatprep.subr.bf16.mxu0 0
        %2863 = vmatpush1.bf16.xpose.msra.mxu0 0
        %2864 = vmatprep.subr.bf16.mxu0 0
        %2865 = vmatpush1.bf16.xpose.msra.mxu0 0
        %2866 = vmatprep.subr.bf16.mxu0 0
        %2867 = vmatpush1.bf16.xpose.msra.mxu0 0
        %2868 = vmatprep.subr.bf16.mxu0 0
        %2869 = vmatpush1.bf16.xpose.msra.mxu0 0
        %2870 = vmatprep.subr.bf16.mxu0 0
        %2871 = vmatpush1.bf16.xpose.msra.mxu0 0
        %2872 = vmatprep.subr.bf16.mxu0 0
        %2873 = vmatpush1.bf16.xpose.msra.mxu0 0
        %2874 = vmatprep.subr.bf16.mxu0 0
        %2875 = vmatpush1.bf16.xpose.msra.mxu0 0
        %2876 = vmatprep.subr.bf16.mxu0 0
        %2877 = vmatpush1.bf16.xpose.msra.mxu0 0
        %2878 = vmatprep.subr.bf16.mxu0 0
        %2879 = vmatpush1.bf16.xpose.msra.mxu0 0
        %2880 = vmatprep.subr.bf16.mxu0 0
        %2881 = vmatpush1.bf16.xpose.msra.mxu0 0
        %2882 = vmatprep.subr.bf16.mxu0 0
        %2883 = vmatpush1.bf16.xpose.msra.mxu0 0
        %2884 = vmatprep.subr.bf16.mxu0 0
        %2885 = vmatpush1.bf16.xpose.msra.mxu0 0
        %2886 = vmatprep.subr.bf16.mxu0 0
        %2887 = vmatpush1.bf16.xpose.msra.mxu0 0
        %2888 = vmatprep.mubr.bf16.mxu0 0
        %2889 = vmatmul.mubr.bf16.gmra.mrb[0].mxu0 %v1731
        %v2890 = vpop.f32.mrb[0].mxu0
        %v2891 = vadd.f32 %v2774, %v2890
        %v2892 = vpop.f32.mrb[0].mxu0
        %v2893 = vpop.f32.mrb[0].mxu0
        %v2894 = vpop.f32.mrb[0].mxu0
        %2895 = vdwg.mxu0
        %2896 = vmatprep.subr.bf16.mxu0 0
        %2897 = vmatpush1.bf16.xpose.msra.mxu0 %v2009
        %2898 = vmatprep.subr.bf16.mxu0 0
        %2899 = vmatpush1.bf16.xpose.msra.mxu0 0
        %2900 = vmatprep.subr.bf16.mxu0 0
        %2901 = vmatpush1.bf16.xpose.msra.mxu0 0
        %2902 = vmatprep.subr.bf16.mxu0 0
        %2903 = vmatpush1.bf16.xpose.msra.mxu0 0
        %2904 = vmatprep.subr.bf16.mxu0 0
        %2905 = vmatpush1.bf16.xpose.msra.mxu0 0
        %2906 = vmatprep.subr.bf16.mxu0 0
        %2907 = vmatpush1.bf16.xpose.msra.mxu0 0
        %2908 = vmatprep.subr.bf16.mxu0 0
        %2909 = vmatpush1.bf16.xpose.msra.mxu0 0
        %2910 = vmatprep.subr.bf16.mxu0 0
        %2911 = vmatpush1.bf16.xpose.msra.mxu0 0
        %2912 = vmatprep.subr.bf16.mxu0 0
        %2913 = vmatpush1.bf16.xpose.msra.mxu0 0
        %2914 = vmatprep.subr.bf16.mxu0 0
        %2915 = vmatpush1.bf16.xpose.msra.mxu0 0
        %2916 = vmatprep.subr.bf16.mxu0 0
        %2917 = vmatpush1.bf16.xpose.msra.mxu0 0
        %2918 = vmatprep.subr.bf16.mxu0 0
        %2919 = vmatpush1.bf16.xpose.msra.mxu0 0
        %2920 = vmatprep.subr.bf16.mxu0 0
        %2921 = vmatpush1.bf16.xpose.msra.mxu0 0
        %2922 = vmatprep.subr.bf16.mxu0 0
        %2923 = vmatpush1.bf16.xpose.msra.mxu0 0
        %2924 = vmatprep.subr.bf16.mxu0 0
        %2925 = vmatpush1.bf16.xpose.msra.mxu0 0
        %2926 = vmatprep.subr.bf16.mxu0 0
        %2927 = vmatpush1.bf16.xpose.msra.mxu0 0
        %2928 = vmatprep.mubr.bf16.mxu0 0
        %2929 = vmatmul.mubr.bf16.gmra.mrb[0].mxu0 %v1735
        %v2930 = vpop.f32.mrb[0].mxu0
        %v2931 = vadd.f32 %v2774, %v2930
        %v2932 = vpop.f32.mrb[0].mxu0
        %v2933 = vpop.f32.mrb[0].mxu0
        %v2934 = vpop.f32.mrb[0].mxu0
        %2935 = vdwg.mxu0
        %vm2936 = vcmask 130048
        %v2937 = vsel %vm2936, %v2811, -inf
        %2938 = vmax.xlane.f32.xlu0 %v2937
        %v2939 = vpop.xlane.xlu0 %2938
        %v2940 = vsel %vm2936, %v2851, -inf
        %2941 = vmax.xlane.f32.xlu0 %v2940
        %v2942 = vpop.xlane.xlu0 %2941
        %v2943 = vsel %vm2936, %v2891, -inf
        %2944 = vmax.xlane.f32.xlu0 %v2943
        %v2945 = vpop.xlane.xlu0 %2944
        %v2946 = vsel %vm2936, %v2931, -inf
        %2947 = vmax.xlane.f32.xlu0 %v2946
        %v2948 = vpop.xlane.xlu0 %2947
        %vm2949 = vcmask 64512
        %v2950 = vsel %vm2949, %v2642, -inf
        %2951 = vmax.xlane.f32.xlu0 %v2950
        %v2952 = vpop.xlane.xlu0 %2951
        %v2953 = vsel %vm2949, %v2682, -inf
        %2954 = vmax.xlane.f32.xlu0 %v2953
        %v2955 = vpop.xlane.xlu0 %2954
        %v2956 = vsel %vm2949, %v2722, -inf
        %2957 = vmax.xlane.f32.xlu0 %v2956
        %v2958 = vpop.xlane.xlu0 %2957
        %v2959 = vsel %vm2949, %v2762, -inf
        %2960 = vmax.xlane.f32.xlu0 %v2959
        %v2961 = vpop.xlane.xlu0 %2960
        %v2962 = vmax.f32 %v2939, %v2952
        %v2963 = vmax.f32 %v2942, %v2955
        %v2964 = vmax.f32 %v2945, %v2958
        %v2965 = vmax.f32 %v2948, %v2961
        %v2966 = vsub.f32 %v2811, %v2962
        %v2967 = vsub.f32 %v2851, %v2963
        %v2968 = vsub.f32 %v2891, %v2964
        %v2969 = vsub.f32 %v2931, %v2965
        %v2970 = vmul.f32 %v2966, 1.442695
        %v2971 = vpow.pop %v2970
        %v2972 = vmul.f32 %v2967, 1.442695
        %v2973 = vpow.pop %v2972
        %v2974 = vmul.f32 %v2968, 1.442695
        %v2975 = vpow.pop %v2974
        %v2976 = vmul.f32 %v2969, 1.442695
        %v2977 = vpow.pop %v2976
        %v2978 = vsub.f32 %v2642, %v2962
        %v2979 = vsub.f32 %v2682, %v2963
        %v2980 = vsub.f32 %v2722, %v2964
        %v2981 = vsub.f32 %v2762, %v2965
        %v2982 = vmul.f32 %v2978, 1.442695
        %v2983 = vpow.pop %v2982
        %v2984 = vmul.f32 %v2979, 1.442695
        %v2985 = vpow.pop %v2984
        %v2986 = vmul.f32 %v2980, 1.442695
        %v2987 = vpow.pop %v2986
        %v2988 = vmul.f32 %v2981, 1.442695
        %v2989 = vpow.pop %v2988
        %v2990 = vsel %vm2936, %v2971, 0.0
        %2991 = vadd.xlane.f32.xlu0 %v2990
        %v2992 = vpop.xlane.xlu0 %2991
        %v2993 = vsel %vm2936, %v2973, 0.0
        %2994 = vadd.xlane.f32.xlu0 %v2993
        %v2995 = vpop.xlane.xlu0 %2994
        %v2996 = vsel %vm2936, %v2975, 0.0
        %2997 = vadd.xlane.f32.xlu0 %v2996
        %v2998 = vpop.xlane.xlu0 %2997
        %v2999 = vsel %vm2936, %v2977, 0.0
        %3000 = vadd.xlane.f32.xlu0 %v2999
        %v3001 = vpop.xlane.xlu0 %3000
        %v3002 = vsel %vm2949, %v2983, 0.0
        %3003 = vadd.xlane.f32.xlu0 %v3002
        %v3004 = vpop.xlane.xlu0 %3003
        %v3005 = vsel %vm2949, %v2985, 0.0
        %3006 = vadd.xlane.f32.xlu0 %v3005
        %v3007 = vpop.xlane.xlu0 %3006
        %v3008 = vsel %vm2949, %v2987, 0.0
        %3009 = vadd.xlane.f32.xlu0 %v3008
        %v3010 = vpop.xlane.xlu0 %3009
        %v3011 = vsel %vm2949, %v2989, 0.0
        %3012 = vadd.xlane.f32.xlu0 %v3011
        %v3013 = vpop.xlane.xlu0 %3012
        %v3014 = vadd.f32 %v2992, %v3004
        %v3015 = vadd.f32 %v2995, %v3007
        %v3016 = vadd.f32 %v2998, %v3010
        %v3017 = vadd.f32 %v3001, %v3013
        %v3018 = vpack.c.bf16 %v2971, %v2971
        %v3019 = vpack.c.bf16 %v2973, %v2973
        %v3020 = vpack.c.bf16 %v2975, %v2975
        %v3021 = vpack.c.bf16 %v2977, %v2977
        %v3022 = vpack.c.bf16 %v2983, %v2983
        %v3023 = vpack.c.bf16 %v2985, %v2985
        %v3024 = vpack.c.bf16 %v2987, %v2987
        %v3025 = vpack.c.bf16 %v2989, %v2989
        %v3027 = vsel %vm2949, %v3022, 0
        %vm3029 = vcmask 1043456
        %v3031 = vsel %vm3029, %v2597, 0
        %3033 = vmatprep.subr.bf16.mxu0 0
        %3034 = vmatpush1.bf16.msra.mxu0 %v3031
        %3035 = vmatprep.subr.bf16.mxu0 0
        %3036 = vmatpush1.bf16.msra.mxu0 0
        %3037 = vmatprep.subr.bf16.mxu0 0
        %3038 = vmatpush1.bf16.msra.mxu0 0
        %3039 = vmatprep.subr.bf16.mxu0 0
        %3040 = vmatpush1.bf16.msra.mxu0 0
        %3041 = vmatprep.subr.bf16.mxu0 0
        %3042 = vmatpush1.bf16.msra.mxu0 0
        %3043 = vmatprep.subr.bf16.mxu0 0
        %3044 = vmatpush1.bf16.msra.mxu0 0
        %3045 = vmatprep.subr.bf16.mxu0 0
        %3046 = vmatpush1.bf16.msra.mxu0 0
        %3047 = vmatprep.subr.bf16.mxu0 0
        %3048 = vmatpush1.bf16.msra.mxu0 0
        %3049 = vmatprep.subr.bf16.mxu0 0
        %3050 = vmatpush1.bf16.msra.mxu0 0
        %3051 = vmatprep.subr.bf16.mxu0 0
        %3052 = vmatpush1.bf16.msra.mxu0 0
        %3053 = vmatprep.subr.bf16.mxu0 0
        %3054 = vmatpush1.bf16.msra.mxu0 0
        %3055 = vmatprep.subr.bf16.mxu0 0
        %3056 = vmatpush1.bf16.msra.mxu0 0
        %3057 = vmatprep.subr.bf16.mxu0 0
        %3058 = vmatpush1.bf16.msra.mxu0 0
        %3059 = vmatprep.subr.bf16.mxu0 0
        %3060 = vmatpush1.bf16.msra.mxu0 0
        %3061 = vmatprep.subr.bf16.mxu0 0
        %3062 = vmatpush1.bf16.msra.mxu0 0
        %3063 = vmatprep.subr.bf16.mxu0 0
        %3064 = vmatpush1.bf16.msra.mxu0 0
        %3065 = vmatprep.mubr.bf16.mxu0 0
        %3066 = vmatmul.mubr.bf16.gmra.mrb[0].mxu0 %v3027
        %v3067 = vpop.f32.mrb[0].mxu0
        %v3068 = vadd.f32 0.0, %v3067
        %v3069 = vpop.f32.mrb[0].mxu0
        %v3070 = vpop.f32.mrb[0].mxu0
        %v3071 = vpop.f32.mrb[0].mxu0
        %3072 = vdwg.mxu0
        %v3074 = vsel %vm2949, %v3023, 0
        %v3077 = vsel %vm3029, %v2600, 0
        %3079 = vmatprep.subr.bf16.mxu0 0
        %3080 = vmatpush1.bf16.msra.mxu0 %v3077
        %3081 = vmatprep.subr.bf16.mxu0 0
        %3082 = vmatpush1.bf16.msra.mxu0 0
        %3083 = vmatprep.subr.bf16.mxu0 0
        %3084 = vmatpush1.bf16.msra.mxu0 0
        %3085 = vmatprep.subr.bf16.mxu0 0
        %3086 = vmatpush1.bf16.msra.mxu0 0
        %3087 = vmatprep.subr.bf16.mxu0 0
        %3088 = vmatpush1.bf16.msra.mxu0 0
        %3089 = vmatprep.subr.bf16.mxu0 0
        %3090 = vmatpush1.bf16.msra.mxu0 0
        %3091 = vmatprep.subr.bf16.mxu0 0
        %3092 = vmatpush1.bf16.msra.mxu0 0
        %3093 = vmatprep.subr.bf16.mxu0 0
        %3094 = vmatpush1.bf16.msra.mxu0 0
        %3095 = vmatprep.subr.bf16.mxu0 0
        %3096 = vmatpush1.bf16.msra.mxu0 0
        %3097 = vmatprep.subr.bf16.mxu0 0
        %3098 = vmatpush1.bf16.msra.mxu0 0
        %3099 = vmatprep.subr.bf16.mxu0 0
        %3100 = vmatpush1.bf16.msra.mxu0 0
        %3101 = vmatprep.subr.bf16.mxu0 0
        %3102 = vmatpush1.bf16.msra.mxu0 0
        %3103 = vmatprep.subr.bf16.mxu0 0
        %3104 = vmatpush1.bf16.msra.mxu0 0
        %3105 = vmatprep.subr.bf16.mxu0 0
        %3106 = vmatpush1.bf16.msra.mxu0 0
        %3107 = vmatprep.subr.bf16.mxu0 0
        %3108 = vmatpush1.bf16.msra.mxu0 0
        %3109 = vmatprep.subr.bf16.mxu0 0
        %3110 = vmatpush1.bf16.msra.mxu0 0
        %3111 = vmatprep.mubr.bf16.mxu0 0
        %3112 = vmatmul.mubr.bf16.gmra.mrb[0].mxu0 %v3074
        %v3113 = vpop.f32.mrb[0].mxu0
        %v3114 = vadd.f32 0.0, %v3113
        %v3115 = vpop.f32.mrb[0].mxu0
        %v3116 = vpop.f32.mrb[0].mxu0
        %v3117 = vpop.f32.mrb[0].mxu0
        %3118 = vdwg.mxu0
        %v3120 = vsel %vm2949, %v3024, 0
        %v3123 = vsel %vm3029, %v2603, 0
        %3125 = vmatprep.subr.bf16.mxu0 0
        %3126 = vmatpush1.bf16.msra.mxu0 %v3123
        %3127 = vmatprep.subr.bf16.mxu0 0
        %3128 = vmatpush1.bf16.msra.mxu0 0
        %3129 = vmatprep.subr.bf16.mxu0 0
        %3130 = vmatpush1.bf16.msra.mxu0 0
        %3131 = vmatprep.subr.bf16.mxu0 0
        %3132 = vmatpush1.bf16.msra.mxu0 0
        %3133 = vmatprep.subr.bf16.mxu0 0
        %3134 = vmatpush1.bf16.msra.mxu0 0
        %3135 = vmatprep.subr.bf16.mxu0 0
        %3136 = vmatpush1.bf16.msra.mxu0 0
        %3137 = vmatprep.subr.bf16.mxu0 0
        %3138 = vmatpush1.bf16.msra.mxu0 0
        %3139 = vmatprep.subr.bf16.mxu0 0
        %3140 = vmatpush1.bf16.msra.mxu0 0
        %3141 = vmatprep.subr.bf16.mxu0 0
        %3142 = vmatpush1.bf16.msra.mxu0 0
        %3143 = vmatprep.subr.bf16.mxu0 0
        %3144 = vmatpush1.bf16.msra.mxu0 0
        %3145 = vmatprep.subr.bf16.mxu0 0
        %3146 = vmatpush1.bf16.msra.mxu0 0
        %3147 = vmatprep.subr.bf16.mxu0 0
        %3148 = vmatpush1.bf16.msra.mxu0 0
        %3149 = vmatprep.subr.bf16.mxu0 0
        %3150 = vmatpush1.bf16.msra.mxu0 0
        %3151 = vmatprep.subr.bf16.mxu0 0
        %3152 = vmatpush1.bf16.msra.mxu0 0
        %3153 = vmatprep.subr.bf16.mxu0 0
        %3154 = vmatpush1.bf16.msra.mxu0 0
        %3155 = vmatprep.subr.bf16.mxu0 0
        %3156 = vmatpush1.bf16.msra.mxu0 0
        %3157 = vmatprep.mubr.bf16.mxu0 0
        %3158 = vmatmul.mubr.bf16.gmra.mrb[0].mxu0 %v3120
        %v3159 = vpop.f32.mrb[0].mxu0
        %v3160 = vadd.f32 0.0, %v3159
        %v3161 = vpop.f32.mrb[0].mxu0
        %v3162 = vpop.f32.mrb[0].mxu0
        %v3163 = vpop.f32.mrb[0].mxu0
        %3164 = vdwg.mxu0
        %v3166 = vsel %vm2949, %v3025, 0
        %v3169 = vsel %vm3029, %v2606, 0
        %3171 = vmatprep.subr.bf16.mxu0 0
        %3172 = vmatpush1.bf16.msra.mxu0 %v3169
        %3173 = vmatprep.subr.bf16.mxu0 0
        %3174 = vmatpush1.bf16.msra.mxu0 0
        %3175 = vmatprep.subr.bf16.mxu0 0
        %3176 = vmatpush1.bf16.msra.mxu0 0
        %3177 = vmatprep.subr.bf16.mxu0 0
        %3178 = vmatpush1.bf16.msra.mxu0 0
        %3179 = vmatprep.subr.bf16.mxu0 0
        %3180 = vmatpush1.bf16.msra.mxu0 0
        %3181 = vmatprep.subr.bf16.mxu0 0
        %3182 = vmatpush1.bf16.msra.mxu0 0
        %3183 = vmatprep.subr.bf16.mxu0 0
        %3184 = vmatpush1.bf16.msra.mxu0 0
        %3185 = vmatprep.subr.bf16.mxu0 0
        %3186 = vmatpush1.bf16.msra.mxu0 0
        %3187 = vmatprep.subr.bf16.mxu0 0
        %3188 = vmatpush1.bf16.msra.mxu0 0
        %3189 = vmatprep.subr.bf16.mxu0 0
        %3190 = vmatpush1.bf16.msra.mxu0 0
        %3191 = vmatprep.subr.bf16.mxu0 0
        %3192 = vmatpush1.bf16.msra.mxu0 0
        %3193 = vmatprep.subr.bf16.mxu0 0
        %3194 = vmatpush1.bf16.msra.mxu0 0
        %3195 = vmatprep.subr.bf16.mxu0 0
        %3196 = vmatpush1.bf16.msra.mxu0 0
        %3197 = vmatprep.subr.bf16.mxu0 0
        %3198 = vmatpush1.bf16.msra.mxu0 0
        %3199 = vmatprep.subr.bf16.mxu0 0
        %3200 = vmatpush1.bf16.msra.mxu0 0
        %3201 = vmatprep.subr.bf16.mxu0 0
        %3202 = vmatpush1.bf16.msra.mxu0 0
        %3203 = vmatprep.mubr.bf16.mxu0 0
        %3204 = vmatmul.mubr.bf16.gmra.mrb[0].mxu0 %v3166
        %v3205 = vpop.f32.mrb[0].mxu0
        %v3206 = vadd.f32 0.0, %v3205
        %v3207 = vpop.f32.mrb[0].mxu0
        %v3208 = vpop.f32.mrb[0].mxu0
        %v3209 = vpop.f32.mrb[0].mxu0
        %3210 = vdwg.mxu0
        %v3212 = vsel %vm2936, %v3018, 0
        %3214 = vmatprep.subr.bf16.mxu0 0
        %3215 = vmatpush1.bf16.msra.mxu0 %v2265
        %3216 = vmatprep.subr.bf16.mxu0 0
        %3217 = vmatpush1.bf16.msra.mxu0 0
        %3218 = vmatprep.subr.bf16.mxu0 0
        %3219 = vmatpush1.bf16.msra.mxu0 0
        %3220 = vmatprep.subr.bf16.mxu0 0
        %3221 = vmatpush1.bf16.msra.mxu0 0
        %3222 = vmatprep.subr.bf16.mxu0 0
        %3223 = vmatpush1.bf16.msra.mxu0 0
        %3224 = vmatprep.subr.bf16.mxu0 0
        %3225 = vmatpush1.bf16.msra.mxu0 0
        %3226 = vmatprep.subr.bf16.mxu0 0
        %3227 = vmatpush1.bf16.msra.mxu0 0
        %3228 = vmatprep.subr.bf16.mxu0 0
        %3229 = vmatpush1.bf16.msra.mxu0 0
        %3230 = vmatprep.subr.bf16.mxu0 0
        %3231 = vmatpush1.bf16.msra.mxu0 0
        %3232 = vmatprep.subr.bf16.mxu0 0
        %3233 = vmatpush1.bf16.msra.mxu0 0
        %3234 = vmatprep.subr.bf16.mxu0 0
        %3235 = vmatpush1.bf16.msra.mxu0 0
        %3236 = vmatprep.subr.bf16.mxu0 0
        %3237 = vmatpush1.bf16.msra.mxu0 0
        %3238 = vmatprep.subr.bf16.mxu0 0
        %3239 = vmatpush1.bf16.msra.mxu0 0
        %3240 = vmatprep.subr.bf16.mxu0 0
        %3241 = vmatpush1.bf16.msra.mxu0 0
        %3242 = vmatprep.subr.bf16.mxu0 0
        %3243 = vmatpush1.bf16.msra.mxu0 0
        %3244 = vmatprep.subr.bf16.mxu0 0
        %3245 = vmatpush1.bf16.msra.mxu0 0
        %3246 = vmatprep.mubr.bf16.mxu0 0
        %3247 = vmatmul.mubr.bf16.gmra.mrb[0].mxu0 %v3212
        %v3248 = vpop.f32.mrb[0].mxu0
        %v3249 = vadd.f32 %v3068, %v3248
        %v3250 = vpop.f32.mrb[0].mxu0
        %v3251 = vpop.f32.mrb[0].mxu0
        %v3252 = vpop.f32.mrb[0].mxu0
        %3253 = vdwg.mxu0
        %v3255 = vsel %vm2936, %v3019, 0
        %3257 = vmatprep.subr.bf16.mxu0 0
        %3258 = vmatpush1.bf16.msra.mxu0 %v2269
        %3259 = vmatprep.subr.bf16.mxu0 0
        %3260 = vmatpush1.bf16.msra.mxu0 0
        %3261 = vmatprep.subr.bf16.mxu0 0
        %3262 = vmatpush1.bf16.msra.mxu0 0
        %3263 = vmatprep.subr.bf16.mxu0 0
        %3264 = vmatpush1.bf16.msra.mxu0 0
        %3265 = vmatprep.subr.bf16.mxu0 0
        %3266 = vmatpush1.bf16.msra.mxu0 0
        %3267 = vmatprep.subr.bf16.mxu0 0
        %3268 = vmatpush1.bf16.msra.mxu0 0
        %3269 = vmatprep.subr.bf16.mxu0 0
        %3270 = vmatpush1.bf16.msra.mxu0 0
        %3271 = vmatprep.subr.bf16.mxu0 0
        %3272 = vmatpush1.bf16.msra.mxu0 0
        %3273 = vmatprep.subr.bf16.mxu0 0
        %3274 = vmatpush1.bf16.msra.mxu0 0
        %3275 = vmatprep.subr.bf16.mxu0 0
        %3276 = vmatpush1.bf16.msra.mxu0 0
        %3277 = vmatprep.subr.bf16.mxu0 0
        %3278 = vmatpush1.bf16.msra.mxu0 0
        %3279 = vmatprep.subr.bf16.mxu0 0
        %3280 = vmatpush1.bf16.msra.mxu0 0
        %3281 = vmatprep.subr.bf16.mxu0 0
        %3282 = vmatpush1.bf16.msra.mxu0 0
        %3283 = vmatprep.subr.bf16.mxu0 0
        %3284 = vmatpush1.bf16.msra.mxu0 0
        %3285 = vmatprep.subr.bf16.mxu0 0
        %3286 = vmatpush1.bf16.msra.mxu0 0
        %3287 = vmatprep.subr.bf16.mxu0 0
        %3288 = vmatpush1.bf16.msra.mxu0 0
        %3289 = vmatprep.mubr.bf16.mxu0 0
        %3290 = vmatmul.mubr.bf16.gmra.mrb[0].mxu0 %v3255
        %v3291 = vpop.f32.mrb[0].mxu0
        %v3292 = vadd.f32 %v3114, %v3291
        %v3293 = vpop.f32.mrb[0].mxu0
        %v3294 = vpop.f32.mrb[0].mxu0
        %v3295 = vpop.f32.mrb[0].mxu0
        %3296 = vdwg.mxu0
        %v3298 = vsel %vm2936, %v3020, 0
        %3300 = vmatprep.subr.bf16.mxu0 0
        %3301 = vmatpush1.bf16.msra.mxu0 %v2273
        %3302 = vmatprep.subr.bf16.mxu0 0
        %3303 = vmatpush1.bf16.msra.mxu0 0
        %3304 = vmatprep.subr.bf16.mxu0 0
        %3305 = vmatpush1.bf16.msra.mxu0 0
        %3306 = vmatprep.subr.bf16.mxu0 0
        %3307 = vmatpush1.bf16.msra.mxu0 0
        %3308 = vmatprep.subr.bf16.mxu0 0
        %3309 = vmatpush1.bf16.msra.mxu0 0
        %3310 = vmatprep.subr.bf16.mxu0 0
        %3311 = vmatpush1.bf16.msra.mxu0 0
        %3312 = vmatprep.subr.bf16.mxu0 0
        %3313 = vmatpush1.bf16.msra.mxu0 0
        %3314 = vmatprep.subr.bf16.mxu0 0
        %3315 = vmatpush1.bf16.msra.mxu0 0
        %3316 = vmatprep.subr.bf16.mxu0 0
        %3317 = vmatpush1.bf16.msra.mxu0 0
        %3318 = vmatprep.subr.bf16.mxu0 0
        %3319 = vmatpush1.bf16.msra.mxu0 0
        %3320 = vmatprep.subr.bf16.mxu0 0
        %3321 = vmatpush1.bf16.msra.mxu0 0
        %3322 = vmatprep.subr.bf16.mxu0 0
        %3323 = vmatpush1.bf16.msra.mxu0 0
        %3324 = vmatprep.subr.bf16.mxu0 0
        %3325 = vmatpush1.bf16.msra.mxu0 0
        %3326 = vmatprep.subr.bf16.mxu0 0
        %3327 = vmatpush1.bf16.msra.mxu0 0
        %3328 = vmatprep.subr.bf16.mxu0 0
        %3329 = vmatpush1.bf16.msra.mxu0 0
        %3330 = vmatprep.subr.bf16.mxu0 0
        %3331 = vmatpush1.bf16.msra.mxu0 0
        %3332 = vmatprep.mubr.bf16.mxu0 0
        %3333 = vmatmul.mubr.bf16.gmra.mrb[0].mxu0 %v3298
        %v3334 = vpop.f32.mrb[0].mxu0
        %v3335 = vadd.f32 %v3160, %v3334
        %v3336 = vpop.f32.mrb[0].mxu0
        %v3337 = vpop.f32.mrb[0].mxu0
        %v3338 = vpop.f32.mrb[0].mxu0
        %3339 = vdwg.mxu0
        %v3341 = vsel %vm2936, %v3021, 0
        %3343 = vmatprep.subr.bf16.mxu0 0
        %3344 = vmatpush1.bf16.msra.mxu0 %v2277
        %3345 = vmatprep.subr.bf16.mxu0 0
        %3346 = vmatpush1.bf16.msra.mxu0 0
        %3347 = vmatprep.subr.bf16.mxu0 0
        %3348 = vmatpush1.bf16.msra.mxu0 0
        %3349 = vmatprep.subr.bf16.mxu0 0
        %3350 = vmatpush1.bf16.msra.mxu0 0
        %3351 = vmatprep.subr.bf16.mxu0 0
        %3352 = vmatpush1.bf16.msra.mxu0 0
        %3353 = vmatprep.subr.bf16.mxu0 0
        %3354 = vmatpush1.bf16.msra.mxu0 0
        %3355 = vmatprep.subr.bf16.mxu0 0
        %3356 = vmatpush1.bf16.msra.mxu0 0
        %3357 = vmatprep.subr.bf16.mxu0 0
        %3358 = vmatpush1.bf16.msra.mxu0 0
        %3359 = vmatprep.subr.bf16.mxu0 0
        %3360 = vmatpush1.bf16.msra.mxu0 0
        %3361 = vmatprep.subr.bf16.mxu0 0
        %3362 = vmatpush1.bf16.msra.mxu0 0
        %3363 = vmatprep.subr.bf16.mxu0 0
        %3364 = vmatpush1.bf16.msra.mxu0 0
        %3365 = vmatprep.subr.bf16.mxu0 0
        %3366 = vmatpush1.bf16.msra.mxu0 0
        %3367 = vmatprep.subr.bf16.mxu0 0
        %3368 = vmatpush1.bf16.msra.mxu0 0
        %3369 = vmatprep.subr.bf16.mxu0 0
        %3370 = vmatpush1.bf16.msra.mxu0 0
        %3371 = vmatprep.subr.bf16.mxu0 0
        %3372 = vmatpush1.bf16.msra.mxu0 0
        %3373 = vmatprep.subr.bf16.mxu0 0
        %3374 = vmatpush1.bf16.msra.mxu0 0
        %3375 = vmatprep.mubr.bf16.mxu0 0
        %3376 = vmatmul.mubr.bf16.gmra.mrb[0].mxu0 %v3341
        %v3377 = vpop.f32.mrb[0].mxu0
        %v3378 = vadd.f32 %v3206, %v3377
        %v3379 = vpop.f32.mrb[0].mxu0
        %v3380 = vpop.f32.mrb[0].mxu0
        %v3381 = vpop.f32.mrb[0].mxu0
        %3382 = vdwg.mxu0
        %v3383 = vrcp.pop %v3014
        %v3384 = vrcp.pop %v3015
        %v3385 = vrcp.pop %v3016
        %v3386 = vrcp.pop %v3017
        %v3387 = vmul.f32 %v3249, %v3383
        %v3388 = vmul.f32 %v3292, %v3384
        %v3389 = vmul.f32 %v3335, %v3385
        %v3390 = vmul.f32 %v3378, %v3386
        %v3391 = vpack.c.bf16 %v3387, %v3387
        %v3393 = vunpack.c.l.s4 1983009808
        %v3394 = vunpack.c.0.s8 %v3393
        %v3395 = vlaneseq
        %v3396 = vshrl.u32 %v3395, 7
        %v3397 = vsub.s32 %v3394, %v3396
        %v3398 = vrot.slane %v3391, %v3397
        %v3399 = vpack.c.bf16 %v3389, %v3389
        %v3401 = vunpack.c.l.s4 1983009808
        %v3402 = vunpack.c.0.s8 %v3401
        %v3403 = vlaneseq
        %v3404 = vshrl.u32 %v3403, 7
        %v3405 = vsub.s32 %v3402, %v3404
        %v3406 = vrot.slane %v3399, %v3405
        %v3407 = vcombine.low %v3398, %v3406
        %v3408 = vcombine.high %v3398, %v3406
        %v3410 = vunpack.c.l.s4 1934713408
        %v3411 = vunpack.c.0.s8 %v3410
        %v3412 = vlaneseq
        %v3413 = vshrl.u32 %v3412, 7
        %v3414 = vsub.s32 %v3411, %v3413
        %v3415 = vrot.slane %v3407, %v3414
        %v3417 = vunpack.c.l.s4 1934713408
        %v3418 = vunpack.c.0.s8 %v3417
        %v3419 = vlaneseq
        %v3420 = vshrl.u32 %v3419, 7
        %v3421 = vsub.s32 %v3418, %v3420
        %v3422 = vrot.slane %v3408, %v3421
        %v3423 = vcombine.high %v3415, 0
        %v3424 = vcombine.high %v3422, 0
        %v3425 = vpack.c.bf16 %v3388, %v3388
        %v3427 = vunpack.c.l.s4 1983009808
        %v3428 = vunpack.c.0.s8 %v3427
        %v3429 = vlaneseq
        %v3430 = vshrl.u32 %v3429, 7
        %v3431 = vsub.s32 %v3428, %v3430
        %v3432 = vrot.slane %v3425, %v3431
        %v3433 = vpack.c.bf16 %v3390, %v3390
        %v3435 = vunpack.c.l.s4 1983009808
        %v3436 = vunpack.c.0.s8 %v3435
        %v3437 = vlaneseq
        %v3438 = vshrl.u32 %v3437, 7
        %v3439 = vsub.s32 %v3436, %v3438
        %v3440 = vrot.slane %v3433, %v3439
        %v3441 = vcombine.low %v3432, %v3440
        %v3442 = vcombine.high %v3432, %v3440
        %v3444 = vunpack.c.l.s4 1934713408
        %v3445 = vunpack.c.0.s8 %v3444
        %v3446 = vlaneseq
        %v3447 = vshrl.u32 %v3446, 7
        %v3448 = vsub.s32 %v3445, %v3447
        %v3449 = vrot.slane %v3441, %v3448
        %v3451 = vunpack.c.l.s4 1934713408
        %v3452 = vunpack.c.0.s8 %v3451
        %v3453 = vlaneseq
        %v3454 = vshrl.u32 %v3453, 7
        %v3455 = vsub.s32 %v3452, %v3454
        %v3456 = vrot.slane %v3442, %v3455
        %v3457 = vcombine.high %v3449, 0
        %v3458 = vcombine.high %v3456, 0
        %v3461 = vpack.i.b16 %v3449, %v3415
        %v3463 = vshrl.u32 %v3415, 16
        %v3464 = vshrl.u32 %v3449, 16
        %v3465 = vpack.i.b16 %v3464, %v3463
        %v3469 = vpack.i.b16 %v3457, %v3423
        %v3471 = vshrl.u32 %v3423, 16
        %v3472 = vshrl.u32 %v3457, 16
        %v3473 = vpack.i.b16 %v3472, %v3471
        %v3477 = vpack.i.b16 %v3456, %v3422
        %v3479 = vshrl.u32 %v3422, 16
        %v3480 = vshrl.u32 %v3456, 16
        %v3481 = vpack.i.b16 %v3480, %v3479
        %v3485 = vpack.i.b16 %v3458, %v3424
        %v3487 = vshrl.u32 %v3424, 16
        %v3488 = vshrl.u32 %v3458, 16
        %v3489 = vpack.i.b16 %v3488, %v3487
        %v3491 = vcombine.low %v3461, %v3477
        %v3493 = vunpack.c.l.s4 1983009808
        %v3494 = vunpack.c.0.s8 %v3493
        %v3495 = vlaneseq
        %v3496 = vshrl.u32 %v3495, 7
        %v3497 = vsub.s32 %v3494, %v3496
        %v3498 = vrot.slane %v3491, %v3497
        %v3499 = vcombine.low %v3469, %v3485
        %v3501 = vunpack.c.l.s4 1983009808
        %v3502 = vunpack.c.0.s8 %v3501
        %v3503 = vlaneseq
        %v3504 = vshrl.u32 %v3503, 7
        %v3505 = vsub.s32 %v3502, %v3504
        %v3506 = vrot.slane %v3499, %v3505
        %v3507 = vcombine.low %v3498, %v3506
        %v3509 = vunpack.c.l.s4 1934713408
        %v3510 = vunpack.c.0.s8 %v3509
        %v3511 = vlaneseq
        %v3512 = vshrl.u32 %v3511, 7
        %v3513 = vsub.s32 %v3510, %v3512
        %v3514 = vrot.slane %v3507, %v3513
        %v3515 = vcombine.high %v3514, 0
        %v3516 = vcombine.low %v3465, %v3481
        %v3518 = vunpack.c.l.s4 1983009808
        %v3519 = vunpack.c.0.s8 %v3518
        %v3520 = vlaneseq
        %v3521 = vshrl.u32 %v3520, 7
        %v3522 = vsub.s32 %v3519, %v3521
        %v3523 = vrot.slane %v3516, %v3522
        %v3524 = vcombine.low %v3473, %v3489
        %v3526 = vunpack.c.l.s4 1983009808
        %v3527 = vunpack.c.0.s8 %v3526
        %v3528 = vlaneseq
        %v3529 = vshrl.u32 %v3528, 7
        %v3530 = vsub.s32 %v3527, %v3529
        %v3531 = vrot.slane %v3524, %v3530
        %v3532 = vcombine.low %v3523, %v3531
        %v3534 = vunpack.c.l.s4 1934713408
        %v3535 = vunpack.c.0.s8 %v3534
        %v3536 = vlaneseq
        %v3537 = vshrl.u32 %v3536, 7
        %v3538 = vsub.s32 %v3535, %v3537
        %v3539 = vrot.slane %v3532, %v3538
        %v3540 = vcombine.high %v3539, 0
        %v3543 = vpack.i.b16 %v3539, %v3514
        %v3545 = vshrl.u32 %v3514, 16
        %v3546 = vshrl.u32 %v3539, 16
        %v3547 = vpack.i.b16 %v3546, %v3545
        %v3551 = vpack.i.b16 %v3540, %v3515
        %v3553 = vshrl.u32 %v3515, 16
        %v3554 = vshrl.u32 %v3540, 16
        %v3555 = vpack.i.b16 %v3554, %v3553
        %v3557 = vld [vmem:[#allocation10] sm:$0xf]
        %v3558 = vld [vmem:[#allocation10 + $0x4] sm:$0xf]
        %v3559 = vld [vmem:[#allocation10 + $0x8] sm:$0xf]
        %v3560 = vld [vmem:[#allocation10 + $0xc] sm:$0xf]
        %v3561 = vld [vmem:[#allocation10 + $0x10] sm:$0xf]
        %v3562 = vld [vmem:[#allocation10 + $0x14] sm:$0xf]
        %v3563 = vld [vmem:[#allocation10 + $0x18] sm:$0xf]
        %v3564 = vld [vmem:[#allocation10 + $0x1c] sm:$0xf]
        %v3565 = vld [vmem:[#allocation10 + $0x20] sm:$0xf]
        %v3566 = vld [vmem:[#allocation10 + $0x24] sm:$0xf]
        %v3567 = vld [vmem:[#allocation10 + $0x28] sm:$0xf]
        %v3568 = vld [vmem:[#allocation10 + $0x2c] sm:$0xf]
        %v3569 = vld [vmem:[#allocation10 + $0x30] sm:$0xf]
        %v3570 = vld [vmem:[#allocation10 + $0x34] sm:$0xf]
        %v3571 = vld [vmem:[#allocation10 + $0x38] sm:$0xf]
        %v3572 = vld [vmem:[#allocation10 + $0x3c] sm:$0xf]
        %v3573 = vld [vmem:[#allocation10 + $0x40] sm:$0xf]
        %v3574 = vld [vmem:[#allocation10 + $0x44] sm:$0xf]
        %v3575 = vld [vmem:[#allocation10 + $0x48] sm:$0xf]
        %v3576 = vld [vmem:[#allocation10 + $0x4c] sm:$0xf]
        %v3577 = vld [vmem:[#allocation10 + $0x50] sm:$0xf]
        %v3578 = vld [vmem:[#allocation10 + $0x54] sm:$0xf]
        %v3579 = vld [vmem:[#allocation10 + $0x58] sm:$0xf]
        %v3580 = vld [vmem:[#allocation10 + $0x5c] sm:$0xf]
        %v3581 = vld [vmem:[#allocation10 + $0x60] sm:$0xf]
        %v3582 = vld [vmem:[#allocation10 + $0x64] sm:$0xf]
        %v3583 = vld [vmem:[#allocation10 + $0x68] sm:$0xf]
        %v3584 = vld [vmem:[#allocation10 + $0x6c] sm:$0xf]
        %v3585 = vld [vmem:[#allocation10 + $0x70] sm:$0xf]
        %v3586 = vld [vmem:[#allocation10 + $0x74] sm:$0xf]
        %v3587 = vld [vmem:[#allocation10 + $0x78] sm:$0xf]
        %v3588 = vld [vmem:[#allocation10 + $0x7c] sm:$0xf]
        %v3589 = vld [vmem:[#allocation10 + $0x80] sm:$0xf]
        %v3590 = vld [vmem:[#allocation10 + $0x84] sm:$0xf]
        %v3591 = vld [vmem:[#allocation10 + $0x88] sm:$0xf]
        %v3592 = vld [vmem:[#allocation10 + $0x8c] sm:$0xf]
        %v3593 = vld [vmem:[#allocation10 + $0x90] sm:$0xf]
        %v3594 = vld [vmem:[#allocation10 + $0x94] sm:$0xf]
        %v3595 = vld [vmem:[#allocation10 + $0x98] sm:$0xf]
        %v3596 = vld [vmem:[#allocation10 + $0x9c] sm:$0xf]
        %v3597 = vld [vmem:[#allocation10 + $0xa0] sm:$0xf]
        %v3598 = vld [vmem:[#allocation10 + $0xa4] sm:$0xf]
        %v3599 = vld [vmem:[#allocation10 + $0xa8] sm:$0xf]
        %v3600 = vld [vmem:[#allocation10 + $0xac] sm:$0xf]
        %v3601 = vld [vmem:[#allocation10 + $0xb0] sm:$0xf]
        %v3602 = vld [vmem:[#allocation10 + $0xb4] sm:$0xf]
        %v3603 = vld [vmem:[#allocation10 + $0xb8] sm:$0xf]
        %v3604 = vld [vmem:[#allocation10 + $0xbc] sm:$0xf]
        %v3605 = vld [vmem:[#allocation10 + $0xc0] sm:$0xf]
        %v3606 = vld [vmem:[#allocation10 + $0xc4] sm:$0xf]
        %v3607 = vld [vmem:[#allocation10 + $0xc8] sm:$0xf]
        %v3608 = vld [vmem:[#allocation10 + $0xcc] sm:$0xf]
        %v3609 = vld [vmem:[#allocation10 + $0xd0] sm:$0xf]
        %v3610 = vld [vmem:[#allocation10 + $0xd4] sm:$0xf]
        %v3611 = vld [vmem:[#allocation10 + $0xd8] sm:$0xf]
        %v3612 = vld [vmem:[#allocation10 + $0xdc] sm:$0xf]
        %v3613 = vld [vmem:[#allocation10 + $0xe0] sm:$0xf]
        %v3614 = vld [vmem:[#allocation10 + $0xe4] sm:$0xf]
        %v3615 = vld [vmem:[#allocation10 + $0xe8] sm:$0xf]
        %v3616 = vld [vmem:[#allocation10 + $0xec] sm:$0xf]
        %v3617 = vld [vmem:[#allocation10 + $0xf0] sm:$0xf]
        %v3618 = vld [vmem:[#allocation10 + $0xf4] sm:$0xf]
        %v3619 = vld [vmem:[#allocation10 + $0xf8] sm:$0xf]
        %v3620 = vld [vmem:[#allocation10 + $0xfc] sm:$0xf]
        %v3685 = vunpack.c.l.b16 %v3557
        %v3686 = vunpack.c.l.b16 %v3558
        %v3687 = vunpack.c.l.b16 %v3559
        %v3688 = vunpack.c.l.b16 %v3560
        %v3689 = vunpack.c.l.b16 %v3561
        %v3690 = vunpack.c.l.b16 %v3562
        %v3691 = vunpack.c.l.b16 %v3563
        %v3692 = vunpack.c.l.b16 %v3564
        %v3693 = vunpack.c.l.b16 %v3565
        %v3694 = vunpack.c.l.b16 %v3566
        %v3695 = vunpack.c.l.b16 %v3567
        %v3696 = vunpack.c.l.b16 %v3568
        %v3697 = vunpack.c.l.b16 %v3569
        %v3698 = vunpack.c.l.b16 %v3570
        %v3699 = vunpack.c.l.b16 %v3571
        %v3700 = vunpack.c.l.b16 %v3572
        %v3701 = vunpack.c.l.b16 %v3573
        %v3702 = vunpack.c.l.b16 %v3574
        %v3703 = vunpack.c.l.b16 %v3575
        %v3704 = vunpack.c.l.b16 %v3576
        %v3705 = vunpack.c.l.b16 %v3577
        %v3706 = vunpack.c.l.b16 %v3578
        %v3707 = vunpack.c.l.b16 %v3579
        %v3708 = vunpack.c.l.b16 %v3580
        %v3709 = vunpack.c.l.b16 %v3581
        %v3710 = vunpack.c.l.b16 %v3582
        %v3711 = vunpack.c.l.b16 %v3583
        %v3712 = vunpack.c.l.b16 %v3584
        %v3713 = vunpack.c.l.b16 %v3585
        %v3714 = vunpack.c.l.b16 %v3586
        %v3715 = vunpack.c.l.b16 %v3587
        %v3716 = vunpack.c.l.b16 %v3588
        %v3717 = vunpack.c.l.b16 %v3589
        %v3718 = vunpack.c.l.b16 %v3590
        %v3719 = vunpack.c.l.b16 %v3591
        %v3720 = vunpack.c.l.b16 %v3592
        %v3721 = vunpack.c.l.b16 %v3593
        %v3722 = vunpack.c.l.b16 %v3594
        %v3723 = vunpack.c.l.b16 %v3595
        %v3724 = vunpack.c.l.b16 %v3596
        %v3725 = vunpack.c.l.b16 %v3597
        %v3726 = vunpack.c.l.b16 %v3598
        %v3727 = vunpack.c.l.b16 %v3599
        %v3728 = vunpack.c.l.b16 %v3600
        %v3729 = vunpack.c.l.b16 %v3601
        %v3730 = vunpack.c.l.b16 %v3602
        %v3731 = vunpack.c.l.b16 %v3603
        %v3732 = vunpack.c.l.b16 %v3604
        %v3733 = vunpack.c.l.b16 %v3605
        %v3734 = vunpack.c.l.b16 %v3606
        %v3735 = vunpack.c.l.b16 %v3607
        %v3736 = vunpack.c.l.b16 %v3608
        %v3737 = vunpack.c.l.b16 %v3609
        %v3738 = vunpack.c.l.b16 %v3610
        %v3739 = vunpack.c.l.b16 %v3611
        %v3740 = vunpack.c.l.b16 %v3612
        %v3741 = vunpack.c.l.b16 %v3613
        %v3742 = vunpack.c.l.b16 %v3614
        %v3743 = vunpack.c.l.b16 %v3615
        %v3744 = vunpack.c.l.b16 %v3616
        %v3745 = vunpack.c.l.b16 %v3617
        %v3746 = vunpack.c.l.b16 %v3618
        %v3747 = vunpack.c.l.b16 %v3619
        %v3748 = vunpack.c.l.b16 %v3620
        %v3749 = vpack.c.b16 %v3686, %v3685
        %v3750 = vpack.c.b16 %v3688, %v3687
        %v3751 = vpack.c.b16 %v3690, %v3689
        %v3752 = vpack.c.b16 %v3692, %v3691
        %v3753 = vpack.c.b16 %v3694, %v3693
        %v3754 = vpack.c.b16 %v3696, %v3695
        %v3755 = vpack.c.b16 %v3698, %v3697
        %v3756 = vpack.c.b16 %v3700, %v3699
        %v3757 = vpack.c.b16 %v3702, %v3701
        %v3758 = vpack.c.b16 %v3704, %v3703
        %v3759 = vpack.c.b16 %v3706, %v3705
        %v3760 = vpack.c.b16 %v3708, %v3707
        %v3761 = vpack.c.b16 %v3710, %v3709
        %v3762 = vpack.c.b16 %v3712, %v3711
        %v3763 = vpack.c.b16 %v3714, %v3713
        %v3764 = vpack.c.b16 %v3716, %v3715
        %v3765 = vpack.c.b16 %v3718, %v3717
        %v3766 = vpack.c.b16 %v3720, %v3719
        %v3767 = vpack.c.b16 %v3722, %v3721
        %v3768 = vpack.c.b16 %v3724, %v3723
        %v3769 = vpack.c.b16 %v3726, %v3725
        %v3770 = vpack.c.b16 %v3728, %v3727
        %v3771 = vpack.c.b16 %v3730, %v3729
        %v3772 = vpack.c.b16 %v3732, %v3731
        %v3773 = vpack.c.b16 %v3734, %v3733
        %v3774 = vpack.c.b16 %v3736, %v3735
        %v3775 = vpack.c.b16 %v3738, %v3737
        %v3776 = vpack.c.b16 %v3740, %v3739
        %v3777 = vpack.c.b16 %v3742, %v3741
        %v3778 = vpack.c.b16 %v3744, %v3743
        %v3779 = vpack.c.b16 %v3746, %v3745
        %v3780 = vpack.c.b16 %v3748, %v3747
        %3813 = vmatprep.subr.bf16.mxu0 0
        %3814 = vmatpush1.bf16.msra.mxu0 %v3749
        %3815 = vmatprep.subr.bf16.mxu0 0
        %3816 = vmatpush1.bf16.msra.mxu0 %v3750
        %3817 = vmatprep.subr.bf16.mxu0 0
        %3818 = vmatpush1.bf16.msra.mxu0 %v3751
        %3819 = vmatprep.subr.bf16.mxu0 0
        %3820 = vmatpush1.bf16.msra.mxu0 %v3752
        %3821 = vmatprep.subr.bf16.mxu0 0
        %3822 = vmatpush1.bf16.msra.mxu0 %v3753
        %3823 = vmatprep.subr.bf16.mxu0 0
        %3824 = vmatpush1.bf16.msra.mxu0 %v3754
        %3825 = vmatprep.subr.bf16.mxu0 0
        %3826 = vmatpush1.bf16.msra.mxu0 %v3755
        %3827 = vmatprep.subr.bf16.mxu0 0
        %3828 = vmatpush1.bf16.msra.mxu0 %v3756
        %3829 = vmatprep.subr.bf16.mxu0 0
        %3830 = vmatpush1.bf16.msra.mxu0 %v3757
        %3831 = vmatprep.subr.bf16.mxu0 0
        %3832 = vmatpush1.bf16.msra.mxu0 %v3758
        %3833 = vmatprep.subr.bf16.mxu0 0
        %3834 = vmatpush1.bf16.msra.mxu0 %v3759
        %3835 = vmatprep.subr.bf16.mxu0 0
        %3836 = vmatpush1.bf16.msra.mxu0 %v3760
        %3837 = vmatprep.subr.bf16.mxu0 0
        %3838 = vmatpush1.bf16.msra.mxu0 %v3761
        %3839 = vmatprep.subr.bf16.mxu0 0
        %3840 = vmatpush1.bf16.msra.mxu0 %v3762
        %3841 = vmatprep.subr.bf16.mxu0 0
        %3842 = vmatpush1.bf16.msra.mxu0 %v3763
        %3843 = vmatprep.subr.bf16.mxu0 0
        %3844 = vmatpush1.bf16.msra.mxu0 %v3764
        %3845 = vmatprep.mubr.bf16.mxu0 %v3547
        %3846 = vmatmul.mubr.bf16.gmra.mrb[0].mxu0 %v3543
        %v3847 = vpop.f32.mrb[0].mxu0
        %v3848 = vadd.f32 0.0, %v3847
        %v3849 = vpop.f32.mrb[0].mxu0
        %v3850 = vpop.f32.mrb[0].mxu0
        %v3851 = vpop.f32.mrb[0].mxu0
        %3852 = vdwg.mxu0
        %3853 = vmatprep.subr.bf16.mxu0 0
        %3854 = vmatpush1.bf16.msra.mxu0 %v3765
        %3855 = vmatprep.subr.bf16.mxu0 0
        %3856 = vmatpush1.bf16.msra.mxu0 %v3766
        %3857 = vmatprep.subr.bf16.mxu0 0
        %3858 = vmatpush1.bf16.msra.mxu0 %v3767
        %3859 = vmatprep.subr.bf16.mxu0 0
        %3860 = vmatpush1.bf16.msra.mxu0 %v3768
        %3861 = vmatprep.subr.bf16.mxu0 0
        %3862 = vmatpush1.bf16.msra.mxu0 %v3769
        %3863 = vmatprep.subr.bf16.mxu0 0
        %3864 = vmatpush1.bf16.msra.mxu0 %v3770
        %3865 = vmatprep.subr.bf16.mxu0 0
        %3866 = vmatpush1.bf16.msra.mxu0 %v3771
        %3867 = vmatprep.subr.bf16.mxu0 0
        %3868 = vmatpush1.bf16.msra.mxu0 %v3772
        %3869 = vmatprep.subr.bf16.mxu0 0
        %3870 = vmatpush1.bf16.msra.mxu0 %v3773
        %3871 = vmatprep.subr.bf16.mxu0 0
        %3872 = vmatpush1.bf16.msra.mxu0 %v3774
        %3873 = vmatprep.subr.bf16.mxu0 0
        %3874 = vmatpush1.bf16.msra.mxu0 %v3775
        %3875 = vmatprep.subr.bf16.mxu0 0
        %3876 = vmatpush1.bf16.msra.mxu0 %v3776
        %3877 = vmatprep.subr.bf16.mxu0 0
        %3878 = vmatpush1.bf16.msra.mxu0 %v3777
        %3879 = vmatprep.subr.bf16.mxu0 0
        %3880 = vmatpush1.bf16.msra.mxu0 %v3778
        %3881 = vmatprep.subr.bf16.mxu0 0
        %3882 = vmatpush1.bf16.msra.mxu0 %v3779
        %3883 = vmatprep.subr.bf16.mxu0 0
        %3884 = vmatpush1.bf16.msra.mxu0 %v3780
        %3885 = vmatprep.mubr.bf16.mxu0 %v3555
        %3886 = vmatmul.mubr.bf16.gmra.mrb[0].mxu0 %v3551
        %v3887 = vpop.f32.mrb[0].mxu0
        %v3888 = vadd.f32 %v3848, %v3887
        %v3889 = vpop.f32.mrb[0].mxu0
        %v3890 = vpop.f32.mrb[0].mxu0
        %v3891 = vpop.f32.mrb[0].mxu0
        %3892 = vdwg.mxu0
        %3893 = vst [vmem:[%s489] sm:$0xff] %v3888
        %s3894 = sand.u32 %s282, 1
        %s3895 = scalar_lea.sflag [#allocation4], %s3894
        %s3896 = sand.u32 %s282, 1
        %s3897 = smul.addr %s3896, 8
        %s3898 = scalar_lea.vmem [#allocation11], %s3897
        // Predicated region
        $region81: #{tpu_custom_call.1} parent=59 // pred_check
          %p3899 = pneg %p292
        $region82: #{tpu_custom_call.1} parent=59 // pred_check_branch
          %3901 = sbr.rel (%p3899) target = $region84
        $region83: #{tpu_custom_call.1} parent=59 // pred_region
          %s3903 = ssub.s32 128, 128
          %3904 = vsyncadd %s3895, %s3903
          %s3905 = sadd.s32 %s36, %s35
          %s3906 = smul.addr %s3905, 128
          %s3907 = scalar_lea.hbm %s10, %s3906
          %s3909 = sshll.u32 %s3898, 4
          %s3910 = int_to_ptr.vmem [resolvable:$true] %s3909
          %3912 = dma.vmem_to_hbm [thread:$0]  %s3910, 128, %s3907, %s3895
        $region84: #{tpu_custom_call.1} parent=59 // pred_fallthru
          _
      $region60: #{tpu_custom_call.1} parent=5 // pred_fallthru
        _
      %p3913 = scmp.le.s32.totalorder 2, %s26
      // Predicated region
      $region85: #{tpu_custom_call.1} parent=5 // pred_check
        %p3914 = pneg %p3913
      $region86: #{tpu_custom_call.1} parent=5 // pred_check_branch
        %3916 = sbr.rel (%p3914) target = $region88
      $region87: #{tpu_custom_call.1} parent=5 // pred_region
        %s3917 = ssub.s32 %s26, 2
        // Predicated region
        $region89: #{tpu_custom_call.1} parent=87 // pred_check
          %p3918 = pneg %p298
        $region90: #{tpu_custom_call.1} parent=87 // pred_check_branch
          %3920 = sbr.rel (%p3918) target = $region92
        $region91: #{tpu_custom_call.1} parent=87 // pred_region
          %s3921 = sand.u32 %s283, 1
          %s3922 = scalar_lea.sflag [#allocation4], %s3921
          %s3923 = sand.u32 %s283, 1
          %s3924 = smul.addr %s3923, 8
          %s3925 = scalar_lea.vmem [#allocation11], %s3924
          %3926 = dma.done %s3922, 128
        $region92: #{tpu_custom_call.1} parent=87 // pred_fallthru
          _
      $region88: #{tpu_custom_call.1} parent=5 // pred_fallthru
        _
    $region6: #{tpu_custom_call.1} parent=1 // loop_footer
      %s30 = sadd.s32 1, %s26
    $region7: #{tpu_custom_call.1} parent=1 // loop_footer_branch
      %25 = sbr.rel target = $region3
    $region8: #{tpu_custom_call.1} parent=1 // loop_exit
      _
    %3927 = vsyncpa [#allocation3], 1
    %s3928 = scalar_lea.sflag [#allocation3], 1
    %3929 = vsyncpa %s3928, 1
    %3930 = vsyncpa [#allocation6], 1
    %s3931 = scalar_lea.sflag [#allocation6], 1
    %3932 = vsyncpa %s3931, 1
    %3933 = vsyncpa [#allocation9], 1
    %3934 = vsyncpa [#allocation4], 1
    %s3935 = scalar_lea.sflag [#allocation4], 1
    %3936 = vsyncpa %s3935, 1

</llo_original>
